<compile_context>
chip_gen: v7x
topology: tpu7x:2x2x1
jax: 0.10.0
libtpu: 0.0.40
codegen_flags: <defaults>
</compile_context>

<pallas_src>
import functools

import jax
import jax.numpy as jnp
from jax.experimental import pallas as pl
from jax.experimental.pallas import tpu as pltpu

EPS = 1e-12
VMEM_LIMIT_BYTES = 48 * 1024 * 1024  # explicit scoped-VMEM budget (safe on v5e/v6e/v7x)


# ----------------------------- math helpers (in-kernel) -----------------------------

def _layernorm(x, gamma, beta):
    mu = jnp.mean(x, axis=-1, keepdims=True)
    xc = x - mu
    var = jnp.mean(xc * xc, axis=-1, keepdims=True)
    return xc * jax.lax.rsqrt(var + EPS) * gamma + beta


def _erf(x):
    # Abramowitz & Stegun 7.1.26 (max abs err ~1.5e-7): effectively exact in f32.
    ax = jnp.where(x < 0.0, -x, x)
    t = 1.0 / (1.0 + 0.3275911 * ax)
    poly = ((((1.061405429 * t - 1.453152027) * t + 1.421413741) * t
             - 0.284496736) * t + 0.254829592) * t
    y = 1.0 - poly * jnp.exp(-ax * ax)
    return jnp.where(x < 0.0, -y, y)


def _gelu_exact(x):
    return 0.5 * x * (1.0 + _erf(x * 0.7071067811865476))


# ----------------------------- fused layer kernel -----------------------------

def transformer_layer_kernel(num_heads, seq_len, with_embed, with_cls, *refs):
    # --- unpack refs (order matches in_specs / out_specs / scratch_shapes) ---
    idx = 0
    x_ref = refs[idx]; idx += 1
    if with_embed:
        pe_ref, egb_ref = refs[idx], refs[idx + 1]
        idx += 2
    (wqkv_ref, bqkv_ref, wo_ref, vec_ref, w1_ref, b1_ref, w2_ref) = refs[idx:idx + 7]
    idx += 7
    if with_cls:
        clsw_ref, clsb_ref = refs[idx], refs[idx + 1]
        idx += 2
    out_ref = refs[idx]; idx += 1
    if with_cls:
        scores_ref = refs[idx]; idx += 1
    ctx_ref = refs[idx]

    x = x_ref[...]                                   # (tm, H) f32
    tm, H = x.shape
    hd = H // num_heads
    bpb = tm // seq_len
    scale = 1.0 / (hd ** 0.5)

    if with_embed:
        # Fused embedding add + LayerNorm (dropout -> identity at inference).
        gb = egb_ref[...]                            # (2, H) = [gamma; beta]
        xe = x.reshape(bpb, seq_len, H) + pe_ref[...]
        x = _layernorm(xe, gb[0:1], gb[1:2]).reshape(tm, H)

    vecs = vec_ref[...]                              # (8, H) packed LN/bias vectors
    b_o, g_attn, b_attn = vecs[0:1], vecs[1:2], vecs[2:3]
    b_ffn2, g_ffn, b_ffn = vecs[3:4], vecs[4:5], vecs[5:6]

    # Fused QKV projection: bf16 inputs on the MXU, f32 accumulation.
    xb = x.astype(jnp.bfloat16)
    qkv = jnp.dot(xb, wqkv_ref[...],
                  preferred_element_type=jnp.float32) + bqkv_ref[...]   # (tm, 3H)
    q = qkv[:, :H].reshape(bpb, seq_len, H).astype(jnp.bfloat16)
    k = qkv[:, H:2 * H].reshape(bpb, seq_len, H).astype(jnp.bfloat16)
    v = qkv[:, 2 * H:].reshape(bpb, seq_len, H).astype(jnp.bfloat16)

    # Per-head attention batched over the batch elements of this tile; each
    # head's context is written straight into the (tm, H) VMEM scratch.
    for h in range(num_heads):                       # static, unrolled
        sl = slice(h * hd, (h + 1) * hd)
        qh, kh, vh = q[:, :, sl], k[:, :, sl], v[:, :, sl]   # (bpb, S, hd)
        s = jnp.einsum('bqd,bkd->bqk', qh, kh,
                       preferred_element_type=jnp.float32) * scale       # (bpb, S, S)
        s = s - jnp.max(s, axis=-1, keepdims=True)
        p = jnp.exp(s)
        p = p * pl.reciprocal(jnp.sum(p, axis=-1, keepdims=True), approx=True)
        ctx_h = jnp.einsum('bqk,bkd->bqd', p.astype(jnp.bfloat16), vh,
                           preferred_element_type=jnp.float32)           # (bpb, S, hd)
        ctx_ref[:, sl] = ctx_h.reshape(tm, hd)

    attn_out = jnp.dot(ctx_ref[...].astype(jnp.bfloat16), wo_ref[...],
                       preferred_element_type=jnp.float32) + b_o
    x1 = _layernorm(x + attn_out, g_attn, b_attn)

    h1 = jnp.dot(x1.astype(jnp.bfloat16), w1_ref[...],
                 preferred_element_type=jnp.float32) + b1_ref[...]
    h1 = _gelu_exact(h1)
    ffn_out = jnp.dot(h1.astype(jnp.bfloat16), w2_ref[...],
                      preferred_element_type=jnp.float32) + b_ffn2
    out = _layernorm(x1 + ffn_out, g_ffn, b_ffn)
    out_ref[...] = out

    if with_cls:
        # Fused reranking classifier (tiny (H, 1) matmul) on the final hidden state.
        scores_ref[...] = (jnp.dot(out, clsw_ref[...],
                                   preferred_element_type=jnp.float32)
                           + clsb_ref[...])


# ----------------------------- pallas wrappers -----------------------------

def _compiler_params():
    return pltpu.CompilerParams(
        dimension_semantics=("parallel",),
        vmem_limit_bytes=VMEM_LIMIT_BYTES)


def _choose_rows_per_tile(M, S, target=512):
    # Each M-tile must hold whole batch elements (multiples of S rows).
    assert M % S == 0
    n_seq = M // S
    bpb = max(1, min(n_seq, max(1, target // S)))
    while n_seq % bpb:
        bpb -= 1
    tm = bpb * S
    if tm % 8 and tm != M:   # (8, 128) tiling rule on the second-minor block dim
        tm = M
    return tm


def transformer_layer(x, lp, num_heads, seq_len, rows_per_tile,
                      pos_emb=None, emb_gb=None, cls_w=None, cls_b=None):
    M, H = x.shape
    I = lp["w1"].shape[1]
    with_embed = pos_emb is not None
    with_cls = cls_w is not None
    kernel = functools.partial(transformer_layer_kernel,
                               num_heads, seq_len, with_embed, with_cls)

    const = lambda i: (0, 0)
    in_specs = [pl.BlockSpec((rows_per_tile, H), lambda i: (i, 0))]       # x / word-emb tile
    args = [x]
    if with_embed:
        in_specs += [pl.BlockSpec((seq_len, H), const),                   # position embeddings
                     pl.BlockSpec((2, H), const)]                         # emb LN gamma/beta
        args += [pos_emb, emb_gb]
    in_specs += [
        pl.BlockSpec((H, 3 * H), const),                                  # w_qkv  (bf16)
        pl.BlockSpec((1, 3 * H), const),                                  # b_qkv
        pl.BlockSpec((H, H), const),                                      # w_o    (bf16)
        pl.BlockSpec((8, H), const),                                      # packed biases + LN params
        pl.BlockSpec((H, I), const),                                      # w1     (bf16)
        pl.BlockSpec((1, I), const),                                      # b1
        pl.BlockSpec((I, H), const),                                      # w2     (bf16)
    ]
    args += [lp["w_qkv"], lp["b_qkv"], lp["w_o"], lp["vecs"],
             lp["w1"], lp["b1"], lp["w2"]]

    out_shape = jax.ShapeDtypeStruct((M, H), jnp.float32)
    out_specs = pl.BlockSpec((rows_per_tile, H), lambda i: (i, 0))

    if with_cls:
        in_specs += [pl.BlockSpec((H, 1), const), pl.BlockSpec((1, 1), const)]
        args += [cls_w, cls_b]
        out_shape = (out_shape, jax.ShapeDtypeStruct((M, 1), jnp.float32))
        out_specs = (out_specs, pl.BlockSpec((rows_per_tile, 1), lambda i: (i, 0)))

    return pl.pallas_call(
        kernel,
        out_shape=out_shape,
        grid=(M // rows_per_tile,),
        in_specs=in_specs,
        out_specs=out_specs,
        scratch_shapes=[pltpu.VMEM((rows_per_tile, H), jnp.float32)],
        compiler_params=_compiler_params(),
    )(*args)


# ----------------------------- model -----------------------------

def init_params(key, vocab_size, hidden_size, num_layers, intermediate_size,
                max_position_embeddings):
    std = 0.02
    H, I = hidden_size, intermediate_size
    keys = jax.random.split(key, 3 + num_layers)

    def normal(k, shape, dtype=jnp.float32):
        return (std * jax.random.normal(k, shape, jnp.float32)).astype(dtype)

    # Packed per-layer (1, H) vectors: [b_o, g_attn, b_attn, b_ffn2, g_ffn, b_ffn, 0, 0]
    ln_vecs = jnp.zeros((8, H), jnp.float32).at[1].set(1.0).at[4].set(1.0)

    params = {
        "word_emb": normal(keys[0], (vocab_size, H)),
        "pos_emb": normal(keys[1], (max_position_embeddings, H)),
        "emb_gb": jnp.concatenate([jnp.ones((1, H), jnp.float32),
                                   jnp.zeros((1, H), jnp.float32)], axis=0),
        "cls_w": normal(keys[2], (H, 1)),
        "cls_b": jnp.zeros((1, 1), jnp.float32),
        "layers": [],
    }
    for li in range(num_layers):
        lk = jax.random.split(keys[3 + li], 4)
        params["layers"].append({
            "w_qkv": normal(lk[0], (H, 3 * H), jnp.bfloat16),
            "b_qkv": jnp.zeros((1, 3 * H), jnp.float32),
            "w_o": normal(lk[1], (H, H), jnp.bfloat16),
            "w1": normal(lk[2], (H, I), jnp.bfloat16),
            "b1": jnp.zeros((1, I), jnp.float32),
            "w2": normal(lk[3], (I, H), jnp.bfloat16),
            "vecs": ln_vecs,
        })
    return params


@functools.partial(jax.jit, static_argnames=("num_heads",))
def distilbert_for_reranking_forward(params, input_ids, num_heads):
    B, S = input_ids.shape
    M = B * S
    rows_per_tile = _choose_rows_per_tile(M, S)

    # Embedding gather is glue (plain JAX); add + LayerNorm is fused into layer 0.
    word_embs = jnp.take(params["word_emb"], input_ids.reshape(-1), axis=0)  # (M, H)
    pos_emb = params["pos_emb"][:S]                                          # (S, H)

    hidden = word_embs
    scores_all = None
    n_layers = len(params["layers"])
    for li, lp in enumerate(params["layers"]):
        kwargs = {}
        if li == 0:
            kwargs.update(pos_emb=pos_emb, emb_gb=params["emb_gb"])
        if li == n_layers - 1:
            kwargs.update(cls_w=params["cls_w"], cls_b=params["cls_b"])
            hidden, scores_all = transformer_layer(
                hidden, lp, num_heads, S, rows_per_tile, **kwargs)
        else:
            hidden = transformer_layer(
                hidden, lp, num_heads, S, rows_per_tile, **kwargs)

    # Faithful to the PyTorch reranker: outputs[0] -> (S, H) (2-D), so the
    # classifier applies to every sequence position of batch element 0.
    last_hidden_state = hidden[:S]           # rows of batch element 0
    scores = scores_all[:S]
    return last_hidden_state, scores


if __name__ == "__main__":
    # Small config consistent with the module structure.
    VOCAB = 256
    HIDDEN = 128
    LAYERS = 2
    HEADS = 4
    INTERMEDIATE = 256
    MAX_POS = 64
    B, S = 2, 8

    key = jax.random.PRNGKey(0)
    pkey, ikey = jax.random.split(key)
    params = init_params(pkey, VOCAB, HIDDEN, LAYERS, INTERMEDIATE, MAX_POS)
    input_ids = jax.random.randint(ikey, (B, S), 0, VOCAB, dtype=jnp.int32)

    last_hidden_state, scores = distilbert_for_reranking_forward(
        params, input_ids, num_heads=HEADS)
    jax.block_until_ready((last_hidden_state, scores))

    assert last_hidden_state.shape == (S, HIDDEN), last_hidden_state.shape
    assert scores.shape == (S, 1), scores.shape
    assert bool(jnp.all(jnp.isfinite(last_hidden_state)))
    assert bool(jnp.all(jnp.isfinite(scores)))
    print("KERNEL_OK")
</pallas_src>

<mosaic_0001>
module attributes {stable_mosaic.version = 11 : i64} {
  func.func @transformer_layer_kernel(%arg0: i32, %arg1: memref<16x128xf32, #tpu.memory_space<vmem>>, %arg2: memref<8x128xf32, #tpu.memory_space<vmem>>, %arg3: memref<2x128xf32, #tpu.memory_space<vmem>>, %arg4: memref<128x384xbf16, #tpu.memory_space<vmem>>, %arg5: memref<1x384xf32, #tpu.memory_space<vmem>>, %arg6: memref<128x128xbf16, #tpu.memory_space<vmem>>, %arg7: memref<8x128xf32, #tpu.memory_space<vmem>>, %arg8: memref<128x256xbf16, #tpu.memory_space<vmem>>, %arg9: memref<1x256xf32, #tpu.memory_space<vmem>>, %arg10: memref<256x128xbf16, #tpu.memory_space<vmem>>, %arg11: memref<16x128xf32, #tpu.memory_space<vmem>>, %arg12: memref<16x128xf32, #tpu.memory_space<vmem>>) attributes {dimension_semantics = [#tpu.dimension_semantics<parallel>], iteration_bounds = array<i64: 1>, scalar_prefetch = 0 : i64, scratch_operands = 1 : i64, tpu.core_type = #tpu.core_type<tc>, window_params = [{transform_indices = @transform_0, window_bounds = array<i64: 16, 128>}, {pipeline_mode = #tpu.pipeline_mode<synchronous>, transform_indices = @transform_1, window_bounds = array<i64: 8, 128>}, {pipeline_mode = #tpu.pipeline_mode<synchronous>, transform_indices = @transform_2, window_bounds = array<i64: 2, 128>}, {pipeline_mode = #tpu.pipeline_mode<synchronous>, transform_indices = @transform_3, window_bounds = array<i64: 128, 384>}, {pipeline_mode = #tpu.pipeline_mode<synchronous>, transform_indices = @transform_4, window_bounds = array<i64: 1, 384>}, {pipeline_mode = #tpu.pipeline_mode<synchronous>, transform_indices = @transform_5, window_bounds = array<i64: 128, 128>}, {pipeline_mode = #tpu.pipeline_mode<synchronous>, transform_indices = @transform_6, window_bounds = array<i64: 8, 128>}, {pipeline_mode = #tpu.pipeline_mode<synchronous>, transform_indices = @transform_7, window_bounds = array<i64: 128, 256>}, {pipeline_mode = #tpu.pipeline_mode<synchronous>, transform_indices = @transform_8, window_bounds = array<i64: 1, 256>}, {pipeline_mode = #tpu.pipeline_mode<synchronous>, transform_indices = @transform_9, window_bounds = array<i64: 256, 128>}, {transform_indices = @transform_10, window_bounds = array<i64: 16, 128>}]} {
    %c0 = arith.constant 0 : index
    %c0_0 = arith.constant 0 : index
    %0 = vector.load %arg1[%c0, %c0_0] : memref<16x128xf32, #tpu.memory_space<vmem>>, vector<16x128xf32>
    %c0_1 = arith.constant 0 : index
    %c0_2 = arith.constant 0 : index
    %1 = vector.load %arg3[%c0_1, %c0_2] : memref<2x128xf32, #tpu.memory_space<vmem>>, vector<2x128xf32>
    %2 = vector.shape_cast %0 : vector<16x128xf32> to vector<2x8x128xf32>
    %c0_3 = arith.constant 0 : index
    %c0_4 = arith.constant 0 : index
    %3 = vector.load %arg2[%c0_3, %c0_4] : memref<8x128xf32, #tpu.memory_space<vmem>>, vector<8x128xf32>
    %4 = vector.shape_cast %3 : vector<8x128xf32> to vector<1x8x128xf32>
    %5 = vector.broadcast %4 : vector<1x8x128xf32> to vector<2x8x128xf32>
    %6 = arith.addf %2, %5 : vector<2x8x128xf32>
    %7 = vector.extract_strided_slice %1 {offsets = [0, 0], sizes = [1, 128], strides = [1, 1]} : vector<2x128xf32> to vector<1x128xf32>
    %8 = vector.extract_strided_slice %1 {offsets = [1, 0], sizes = [1, 128], strides = [1, 1]} : vector<2x128xf32> to vector<1x128xf32>
    %cst = arith.constant dense<0.000000e+00> : vector<2x8xf32>
    %9 = vector.multi_reduction <add>, %6, %cst [2] : vector<2x8x128xf32> to vector<2x8xf32>
    %10 = vector.shape_cast %9 : vector<2x8xf32> to vector<2x8x1xf32>
    %cst_5 = arith.constant 1.280000e+02 : f32
    %11 = vector.broadcast %cst_5 : f32 to vector<2x8x1xf32>
    %12 = arith.divf %10, %11 : vector<2x8x1xf32>
    %13 = vector.broadcast %12 : vector<2x8x1xf32> to vector<2x8x128xf32>
    %14 = arith.subf %6, %13 : vector<2x8x128xf32>
    %15 = arith.mulf %14, %14 : vector<2x8x128xf32>
    %cst_6 = arith.constant dense<0.000000e+00> : vector<2x8xf32>
    %16 = vector.multi_reduction <add>, %15, %cst_6 [2] : vector<2x8x128xf32> to vector<2x8xf32>
    %17 = vector.shape_cast %16 : vector<2x8xf32> to vector<2x8x1xf32>
    %cst_7 = arith.constant 1.280000e+02 : f32
    %18 = vector.broadcast %cst_7 : f32 to vector<2x8x1xf32>
    %19 = arith.divf %17, %18 : vector<2x8x1xf32>
    %cst_8 = arith.constant 9.99999996E-13 : f32
    %20 = vector.broadcast %cst_8 : f32 to vector<2x8x1xf32>
    %21 = arith.addf %19, %20 : vector<2x8x1xf32>
    %22 = math.rsqrt %21 : vector<2x8x1xf32>
    %23 = vector.broadcast %22 : vector<2x8x1xf32> to vector<2x8x128xf32>
    %24 = arith.mulf %14, %23 : vector<2x8x128xf32>
    %25 = vector.shape_cast %7 : vector<1x128xf32> to vector<1x1x128xf32>
    %26 = vector.broadcast %25 : vector<1x1x128xf32> to vector<2x8x128xf32>
    %27 = arith.mulf %24, %26 : vector<2x8x128xf32>
    %28 = vector.shape_cast %8 : vector<1x128xf32> to vector<1x1x128xf32>
    %29 = vector.broadcast %28 : vector<1x1x128xf32> to vector<2x8x128xf32>
    %30 = arith.addf %27, %29 : vector<2x8x128xf32>
    %31 = vector.shape_cast %30 : vector<2x8x128xf32> to vector<16x128xf32>
    %c0_9 = arith.constant 0 : index
    %c0_10 = arith.constant 0 : index
    %32 = vector.load %arg7[%c0_9, %c0_10] : memref<8x128xf32, #tpu.memory_space<vmem>>, vector<8x128xf32>
    %33 = vector.extract_strided_slice %32 {offsets = [0, 0], sizes = [1, 128], strides = [1, 1]} : vector<8x128xf32> to vector<1x128xf32>
    %34 = vector.extract_strided_slice %32 {offsets = [1, 0], sizes = [1, 128], strides = [1, 1]} : vector<8x128xf32> to vector<1x128xf32>
    %35 = vector.extract_strided_slice %32 {offsets = [2, 0], sizes = [1, 128], strides = [1, 1]} : vector<8x128xf32> to vector<1x128xf32>
    %36 = vector.extract_strided_slice %32 {offsets = [3, 0], sizes = [1, 128], strides = [1, 1]} : vector<8x128xf32> to vector<1x128xf32>
    %37 = vector.extract_strided_slice %32 {offsets = [4, 0], sizes = [1, 128], strides = [1, 1]} : vector<8x128xf32> to vector<1x128xf32>
    %38 = vector.extract_strided_slice %32 {offsets = [5, 0], sizes = [1, 128], strides = [1, 1]} : vector<8x128xf32> to vector<1x128xf32>
    %39 = arith.truncf %31 : vector<16x128xf32> to vector<16x128xbf16>
    %c0_11 = arith.constant 0 : index
    %c0_12 = arith.constant 0 : index
    %40 = vector.load %arg4[%c0_11, %c0_12] : memref<128x384xbf16, #tpu.memory_space<vmem>>, vector<128x384xbf16>
    %cst_13 = arith.constant dense<0.000000e+00> : vector<16x384xf32>
    %41 = tpu.matmul %39, %40, %cst_13 {dimension_numbers = #tpu.dot_dimension_numbers<[1], [0], [0], [1], [0, 0, 1, 1], [], []>} : vector<16x128xbf16>, vector<128x384xbf16>, vector<16x384xf32> -> vector<16x384xf32>
    %c0_14 = arith.constant 0 : index
    %c0_15 = arith.constant 0 : index
    %42 = vector.load %arg5[%c0_14, %c0_15] : memref<1x384xf32, #tpu.memory_space<vmem>>, vector<1x384xf32>
    %43 = vector.broadcast %42 : vector<1x384xf32> to vector<16x384xf32>
    %44 = arith.addf %41, %43 : vector<16x384xf32>
    %45 = vector.extract_strided_slice %44 {offsets = [0, 0], sizes = [16, 128], strides = [1, 1]} : vector<16x384xf32> to vector<16x128xf32>
    %46 = vector.shape_cast %45 : vector<16x128xf32> to vector<2x8x128xf32>
    %47 = arith.truncf %46 : vector<2x8x128xf32> to vector<2x8x128xbf16>
    %48 = vector.extract_strided_slice %44 {offsets = [0, 128], sizes = [16, 128], strides = [1, 1]} : vector<16x384xf32> to vector<16x128xf32>
    %49 = vector.shape_cast %48 : vector<16x128xf32> to vector<2x8x128xf32>
    %50 = arith.truncf %49 : vector<2x8x128xf32> to vector<2x8x128xbf16>
    %51 = vector.extract_strided_slice %44 {offsets = [0, 256], sizes = [16, 128], strides = [1, 1]} : vector<16x384xf32> to vector<16x128xf32>
    %52 = vector.shape_cast %51 : vector<16x128xf32> to vector<2x8x128xf32>
    %53 = arith.truncf %52 : vector<2x8x128xf32> to vector<2x8x128xbf16>
    %54 = vector.extract_strided_slice %47 {offsets = [0, 0, 0], sizes = [2, 8, 32], strides = [1, 1, 1]} : vector<2x8x128xbf16> to vector<2x8x32xbf16>
    %55 = vector.extract_strided_slice %50 {offsets = [0, 0, 0], sizes = [2, 8, 32], strides = [1, 1, 1]} : vector<2x8x128xbf16> to vector<2x8x32xbf16>
    %56 = vector.extract_strided_slice %53 {offsets = [0, 0, 0], sizes = [2, 8, 32], strides = [1, 1, 1]} : vector<2x8x128xbf16> to vector<2x8x32xbf16>
    "tpu.trace_start"() <{level = 10 : i32, message = "bqd,bkd->bqk"}> : () -> ()
    %cst_16 = arith.constant dense<0.000000e+00> : vector<2x8x8xf32>
    %57 = tpu.matmul %54, %55, %cst_16 {dimension_numbers = #tpu.dot_dimension_numbers<[2], [2], [1], [1], [0, 0, 0, 1, 1, 1], [0], [0]>} : vector<2x8x32xbf16>, vector<2x8x32xbf16>, vector<2x8x8xf32> -> vector<2x8x8xf32>
    "tpu.trace_stop"() : () -> ()
    %cst_17 = arith.constant 0.176776692 : f32
    %58 = vector.broadcast %cst_17 : f32 to vector<2x8x8xf32>
    %59 = arith.mulf %57, %58 : vector<2x8x8xf32>
    %cst_18 = arith.constant dense<0xFF800000> : vector<2x8xf32>
    %60 = vector.multi_reduction <maximumf>, %59, %cst_18 [2] : vector<2x8x8xf32> to vector<2x8xf32>
    %61 = vector.shape_cast %60 : vector<2x8xf32> to vector<2x8x1xf32>
    %62 = vector.broadcast %61 : vector<2x8x1xf32> to vector<2x8x8xf32>
    %63 = arith.subf %59, %62 : vector<2x8x8xf32>
    %64 = math.exp %63 : vector<2x8x8xf32>
    %cst_19 = arith.constant dense<0.000000e+00> : vector<2x8xf32>
    %65 = vector.multi_reduction <add>, %64, %cst_19 [2] : vector<2x8x8xf32> to vector<2x8xf32>
    %66 = vector.shape_cast %65 : vector<2x8xf32> to vector<2x8x1xf32>
    %67 = tpu.reciprocal %66 {approx = true} : vector<2x8x1xf32> -> vector<2x8x1xf32>
    %68 = vector.broadcast %67 : vector<2x8x1xf32> to vector<2x8x8xf32>
    %69 = arith.mulf %64, %68 : vector<2x8x8xf32>
    %70 = arith.truncf %69 : vector<2x8x8xf32> to vector<2x8x8xbf16>
    "tpu.trace_start"() <{level = 10 : i32, message = "bqk,bkd->bqd"}> : () -> ()
    %cst_20 = arith.constant dense<0.000000e+00> : vector<2x8x32xf32>
    %71 = tpu.matmul %70, %56, %cst_20 {dimension_numbers = #tpu.dot_dimension_numbers<[2], [1], [1], [2], [0, 0, 0, 1, 1, 2], [0], [0]>} : vector<2x8x8xbf16>, vector<2x8x32xbf16>, vector<2x8x32xf32> -> vector<2x8x32xf32>
    "tpu.trace_stop"() : () -> ()
    %72 = vector.shape_cast %71 : vector<2x8x32xf32> to vector<16x32xf32>
    %c0_21 = arith.constant 0 : index
    %c0_22 = arith.constant 0 : index
    %73 = vector.load %arg12[%c0_21, %c0_22] : memref<16x128xf32, #tpu.memory_space<vmem>>, vector<16x32xf32>
    tpu.vector_store %arg12[%c0_21, %c0_22], %72 {strides = array<i32>} : memref<16x128xf32, #tpu.memory_space<vmem>>, vector<16x32xf32>,
    %74 = vector.extract_strided_slice %47 {offsets = [0, 0, 32], sizes = [2, 8, 32], strides = [1, 1, 1]} : vector<2x8x128xbf16> to vector<2x8x32xbf16>
    %75 = vector.extract_strided_slice %50 {offsets = [0, 0, 32], sizes = [2, 8, 32], strides = [1, 1, 1]} : vector<2x8x128xbf16> to vector<2x8x32xbf16>
    %76 = vector.extract_strided_slice %53 {offsets = [0, 0, 32], sizes = [2, 8, 32], strides = [1, 1, 1]} : vector<2x8x128xbf16> to vector<2x8x32xbf16>
    "tpu.trace_start"() <{level = 10 : i32, message = "bqd,bkd->bqk"}> : () -> ()
    %cst_23 = arith.constant dense<0.000000e+00> : vector<2x8x8xf32>
    %77 = tpu.matmul %74, %75, %cst_23 {dimension_numbers = #tpu.dot_dimension_numbers<[2], [2], [1], [1], [0, 0, 0, 1, 1, 1], [0], [0]>} : vector<2x8x32xbf16>, vector<2x8x32xbf16>, vector<2x8x8xf32> -> vector<2x8x8xf32>
    "tpu.trace_stop"() : () -> ()
    %cst_24 = arith.constant 0.176776692 : f32
    %78 = vector.broadcast %cst_24 : f32 to vector<2x8x8xf32>
    %79 = arith.mulf %77, %78 : vector<2x8x8xf32>
    %cst_25 = arith.constant dense<0xFF800000> : vector<2x8xf32>
    %80 = vector.multi_reduction <maximumf>, %79, %cst_25 [2] : vector<2x8x8xf32> to vector<2x8xf32>
    %81 = vector.shape_cast %80 : vector<2x8xf32> to vector<2x8x1xf32>
    %82 = vector.broadcast %81 : vector<2x8x1xf32> to vector<2x8x8xf32>
    %83 = arith.subf %79, %82 : vector<2x8x8xf32>
    %84 = math.exp %83 : vector<2x8x8xf32>
    %cst_26 = arith.constant dense<0.000000e+00> : vector<2x8xf32>
    %85 = vector.multi_reduction <add>, %84, %cst_26 [2] : vector<2x8x8xf32> to vector<2x8xf32>
    %86 = vector.shape_cast %85 : vector<2x8xf32> to vector<2x8x1xf32>
    %87 = tpu.reciprocal %86 {approx = true} : vector<2x8x1xf32> -> vector<2x8x1xf32>
    %88 = vector.broadcast %87 : vector<2x8x1xf32> to vector<2x8x8xf32>
    %89 = arith.mulf %84, %88 : vector<2x8x8xf32>
    %90 = arith.truncf %89 : vector<2x8x8xf32> to vector<2x8x8xbf16>
    "tpu.trace_start"() <{level = 10 : i32, message = "bqk,bkd->bqd"}> : () -> ()
    %cst_27 = arith.constant dense<0.000000e+00> : vector<2x8x32xf32>
    %91 = tpu.matmul %90, %76, %cst_27 {dimension_numbers = #tpu.dot_dimension_numbers<[2], [1], [1], [2], [0, 0, 0, 1, 1, 2], [0], [0]>} : vector<2x8x8xbf16>, vector<2x8x32xbf16>, vector<2x8x32xf32> -> vector<2x8x32xf32>
    "tpu.trace_stop"() : () -> ()
    %92 = vector.shape_cast %91 : vector<2x8x32xf32> to vector<16x32xf32>
    %c0_28 = arith.constant 0 : index
    %c32 = arith.constant 32 : index
    %93 = vector.load %arg12[%c0_28, %c32] : memref<16x128xf32, #tpu.memory_space<vmem>>, vector<16x32xf32>
    tpu.vector_store %arg12[%c0_28, %c32], %92 {strides = array<i32>} : memref<16x128xf32, #tpu.memory_space<vmem>>, vector<16x32xf32>,
    %94 = vector.extract_strided_slice %47 {offsets = [0, 0, 64], sizes = [2, 8, 32], strides = [1, 1, 1]} : vector<2x8x128xbf16> to vector<2x8x32xbf16>
    %95 = vector.extract_strided_slice %50 {offsets = [0, 0, 64], sizes = [2, 8, 32], strides = [1, 1, 1]} : vector<2x8x128xbf16> to vector<2x8x32xbf16>
    %96 = vector.extract_strided_slice %53 {offsets = [0, 0, 64], sizes = [2, 8, 32], strides = [1, 1, 1]} : vector<2x8x128xbf16> to vector<2x8x32xbf16>
    "tpu.trace_start"() <{level = 10 : i32, message = "bqd,bkd->bqk"}> : () -> ()
    %cst_29 = arith.constant dense<0.000000e+00> : vector<2x8x8xf32>
    %97 = tpu.matmul %94, %95, %cst_29 {dimension_numbers = #tpu.dot_dimension_numbers<[2], [2], [1], [1], [0, 0, 0, 1, 1, 1], [0], [0]>} : vector<2x8x32xbf16>, vector<2x8x32xbf16>, vector<2x8x8xf32> -> vector<2x8x8xf32>
    "tpu.trace_stop"() : () -> ()
    %cst_30 = arith.constant 0.176776692 : f32
    %98 = vector.broadcast %cst_30 : f32 to vector<2x8x8xf32>
    %99 = arith.mulf %97, %98 : vector<2x8x8xf32>
    %cst_31 = arith.constant dense<0xFF800000> : vector<2x8xf32>
    %100 = vector.multi_reduction <maximumf>, %99, %cst_31 [2] : vector<2x8x8xf32> to vector<2x8xf32>
    %101 = vector.shape_cast %100 : vector<2x8xf32> to vector<2x8x1xf32>
    %102 = vector.broadcast %101 : vector<2x8x1xf32> to vector<2x8x8xf32>
    %103 = arith.subf %99, %102 : vector<2x8x8xf32>
    %104 = math.exp %103 : vector<2x8x8xf32>
    %cst_32 = arith.constant dense<0.000000e+00> : vector<2x8xf32>
    %105 = vector.multi_reduction <add>, %104, %cst_32 [2] : vector<2x8x8xf32> to vector<2x8xf32>
    %106 = vector.shape_cast %105 : vector<2x8xf32> to vector<2x8x1xf32>
    %107 = tpu.reciprocal %106 {approx = true} : vector<2x8x1xf32> -> vector<2x8x1xf32>
    %108 = vector.broadcast %107 : vector<2x8x1xf32> to vector<2x8x8xf32>
    %109 = arith.mulf %104, %108 : vector<2x8x8xf32>
    %110 = arith.truncf %109 : vector<2x8x8xf32> to vector<2x8x8xbf16>
    "tpu.trace_start"() <{level = 10 : i32, message = "bqk,bkd->bqd"}> : () -> ()
    %cst_33 = arith.constant dense<0.000000e+00> : vector<2x8x32xf32>
    %111 = tpu.matmul %110, %96, %cst_33 {dimension_numbers = #tpu.dot_dimension_numbers<[2], [1], [1], [2], [0, 0, 0, 1, 1, 2], [0], [0]>} : vector<2x8x8xbf16>, vector<2x8x32xbf16>, vector<2x8x32xf32> -> vector<2x8x32xf32>
    "tpu.trace_stop"() : () -> ()
    %112 = vector.shape_cast %111 : vector<2x8x32xf32> to vector<16x32xf32>
    %c0_34 = arith.constant 0 : index
    %c64 = arith.constant 64 : index
    %113 = vector.load %arg12[%c0_34, %c64] : memref<16x128xf32, #tpu.memory_space<vmem>>, vector<16x32xf32>
    tpu.vector_store %arg12[%c0_34, %c64], %112 {strides = array<i32>} : memref<16x128xf32, #tpu.memory_space<vmem>>, vector<16x32xf32>,
    %114 = vector.extract_strided_slice %47 {offsets = [0, 0, 96], sizes = [2, 8, 32], strides = [1, 1, 1]} : vector<2x8x128xbf16> to vector<2x8x32xbf16>
    %115 = vector.extract_strided_slice %50 {offsets = [0, 0, 96], sizes = [2, 8, 32], strides = [1, 1, 1]} : vector<2x8x128xbf16> to vector<2x8x32xbf16>
    %116 = vector.extract_strided_slice %53 {offsets = [0, 0, 96], sizes = [2, 8, 32], strides = [1, 1, 1]} : vector<2x8x128xbf16> to vector<2x8x32xbf16>
    "tpu.trace_start"() <{level = 10 : i32, message = "bqd,bkd->bqk"}> : () -> ()
    %cst_35 = arith.constant dense<0.000000e+00> : vector<2x8x8xf32>
    %117 = tpu.matmul %114, %115, %cst_35 {dimension_numbers = #tpu.dot_dimension_numbers<[2], [2], [1], [1], [0, 0, 0, 1, 1, 1], [0], [0]>} : vector<2x8x32xbf16>, vector<2x8x32xbf16>, vector<2x8x8xf32> -> vector<2x8x8xf32>
    "tpu.trace_stop"() : () -> ()
    %cst_36 = arith.constant 0.176776692 : f32
    %118 = vector.broadcast %cst_36 : f32 to vector<2x8x8xf32>
    %119 = arith.mulf %117, %118 : vector<2x8x8xf32>
    %cst_37 = arith.constant dense<0xFF800000> : vector<2x8xf32>
    %120 = vector.multi_reduction <maximumf>, %119, %cst_37 [2] : vector<2x8x8xf32> to vector<2x8xf32>
    %121 = vector.shape_cast %120 : vector<2x8xf32> to vector<2x8x1xf32>
    %122 = vector.broadcast %121 : vector<2x8x1xf32> to vector<2x8x8xf32>
    %123 = arith.subf %119, %122 : vector<2x8x8xf32>
    %124 = math.exp %123 : vector<2x8x8xf32>
    %cst_38 = arith.constant dense<0.000000e+00> : vector<2x8xf32>
    %125 = vector.multi_reduction <add>, %124, %cst_38 [2] : vector<2x8x8xf32> to vector<2x8xf32>
    %126 = vector.shape_cast %125 : vector<2x8xf32> to vector<2x8x1xf32>
    %127 = tpu.reciprocal %126 {approx = true} : vector<2x8x1xf32> -> vector<2x8x1xf32>
    %128 = vector.broadcast %127 : vector<2x8x1xf32> to vector<2x8x8xf32>
    %129 = arith.mulf %124, %128 : vector<2x8x8xf32>
    %130 = arith.truncf %129 : vector<2x8x8xf32> to vector<2x8x8xbf16>
    "tpu.trace_start"() <{level = 10 : i32, message = "bqk,bkd->bqd"}> : () -> ()
    %cst_39 = arith.constant dense<0.000000e+00> : vector<2x8x32xf32>
    %131 = tpu.matmul %130, %116, %cst_39 {dimension_numbers = #tpu.dot_dimension_numbers<[2], [1], [1], [2], [0, 0, 0, 1, 1, 2], [0], [0]>} : vector<2x8x8xbf16>, vector<2x8x32xbf16>, vector<2x8x32xf32> -> vector<2x8x32xf32>
    "tpu.trace_stop"() : () -> ()
    %132 = vector.shape_cast %131 : vector<2x8x32xf32> to vector<16x32xf32>
    %c0_40 = arith.constant 0 : index
    %c96 = arith.constant 96 : index
    %133 = vector.load %arg12[%c0_40, %c96] : memref<16x128xf32, #tpu.memory_space<vmem>>, vector<16x32xf32>
    tpu.vector_store %arg12[%c0_40, %c96], %132 {strides = array<i32>} : memref<16x128xf32, #tpu.memory_space<vmem>>, vector<16x32xf32>,
    %c0_41 = arith.constant 0 : index
    %c0_42 = arith.constant 0 : index
    %134 = vector.load %arg12[%c0_41, %c0_42] : memref<16x128xf32, #tpu.memory_space<vmem>>, vector<16x128xf32>
    %135 = arith.truncf %134 : vector<16x128xf32> to vector<16x128xbf16>
    %c0_43 = arith.constant 0 : index
    %c0_44 = arith.constant 0 : index
    %136 = vector.load %arg6[%c0_43, %c0_44] : memref<128x128xbf16, #tpu.memory_space<vmem>>, vector<128x128xbf16>
    %cst_45 = arith.constant dense<0.000000e+00> : vector<16x128xf32>
    %137 = tpu.matmul %135, %136, %cst_45 {dimension_numbers = #tpu.dot_dimension_numbers<[1], [0], [0], [1], [0, 0, 1, 1], [], []>} : vector<16x128xbf16>, vector<128x128xbf16>, vector<16x128xf32> -> vector<16x128xf32>
    %138 = vector.broadcast %33 : vector<1x128xf32> to vector<16x128xf32>
    %139 = arith.addf %137, %138 : vector<16x128xf32>
    %140 = arith.addf %31, %139 : vector<16x128xf32>
    %cst_46 = arith.constant dense<0.000000e+00> : vector<16xf32>
    %141 = vector.multi_reduction <add>, %140, %cst_46 [1] : vector<16x128xf32> to vector<16xf32>
    %142 = vector.shape_cast %141 : vector<16xf32> to vector<16x1xf32>
    %cst_47 = arith.constant 1.280000e+02 : f32
    %143 = vector.broadcast %cst_47 : f32 to vector<16x1xf32>
    %144 = arith.divf %142, %143 : vector<16x1xf32>
    %145 = vector.broadcast %144 : vector<16x1xf32> to vector<16x128xf32>
    %146 = arith.subf %140, %145 : vector<16x128xf32>
    %147 = arith.mulf %146, %146 : vector<16x128xf32>
    %cst_48 = arith.constant dense<0.000000e+00> : vector<16xf32>
    %148 = vector.multi_reduction <add>, %147, %cst_48 [1] : vector<16x128xf32> to vector<16xf32>
    %149 = vector.shape_cast %148 : vector<16xf32> to vector<16x1xf32>
    %cst_49 = arith.constant 1.280000e+02 : f32
    %150 = vector.broadcast %cst_49 : f32 to vector<16x1xf32>
    %151 = arith.divf %149, %150 : vector<16x1xf32>
    %cst_50 = arith.constant 9.99999996E-13 : f32
    %152 = vector.broadcast %cst_50 : f32 to vector<16x1xf32>
    %153 = arith.addf %151, %152 : vector<16x1xf32>
    %154 = math.rsqrt %153 : vector<16x1xf32>
    %155 = vector.broadcast %154 : vector<16x1xf32> to vector<16x128xf32>
    %156 = arith.mulf %146, %155 : vector<16x128xf32>
    %157 = vector.broadcast %34 : vector<1x128xf32> to vector<16x128xf32>
    %158 = arith.mulf %156, %157 : vector<16x128xf32>
    %159 = vector.broadcast %35 : vector<1x128xf32> to vector<16x128xf32>
    %160 = arith.addf %158, %159 : vector<16x128xf32>
    %161 = arith.truncf %160 : vector<16x128xf32> to vector<16x128xbf16>
    %c0_51 = arith.constant 0 : index
    %c0_52 = arith.constant 0 : index
    %162 = vector.load %arg8[%c0_51, %c0_52] : memref<128x256xbf16, #tpu.memory_space<vmem>>, vector<128x256xbf16>
    %cst_53 = arith.constant dense<0.000000e+00> : vector<16x256xf32>
    %163 = tpu.matmul %161, %162, %cst_53 {dimension_numbers = #tpu.dot_dimension_numbers<[1], [0], [0], [1], [0, 0, 1, 1], [], []>} : vector<16x128xbf16>, vector<128x256xbf16>, vector<16x256xf32> -> vector<16x256xf32>
    %c0_54 = arith.constant 0 : index
    %c0_55 = arith.constant 0 : index
    %164 = vector.load %arg9[%c0_54, %c0_55] : memref<1x256xf32, #tpu.memory_space<vmem>>, vector<1x256xf32>
    %165 = vector.broadcast %164 : vector<1x256xf32> to vector<16x256xf32>
    %166 = arith.addf %163, %165 : vector<16x256xf32>
    %cst_56 = arith.constant 5.000000e-01 : f32
    %167 = vector.broadcast %cst_56 : f32 to vector<16x256xf32>
    %168 = arith.mulf %167, %166 : vector<16x256xf32>
    %cst_57 = arith.constant 0.707106769 : f32
    %169 = vector.broadcast %cst_57 : f32 to vector<16x256xf32>
    %170 = arith.mulf %166, %169 : vector<16x256xf32>
    %cst_58 = arith.constant 0.000000e+00 : f32
    %171 = vector.broadcast %cst_58 : f32 to vector<16x256xf32>
    %172 = arith.cmpf olt, %170, %171 : vector<16x256xf32>
    %cst_59 = arith.constant 0.000000e+00 : f32
    %173 = vector.broadcast %cst_59 : f32 to vector<16x256xf32>
    %174 = arith.subf %173, %170 : vector<16x256xf32>
    %175 = arith.select %172, %174, %170 : vector<16x256xi1>, vector<16x256xf32>
    %cst_60 = arith.constant 0.327591091 : f32
    %176 = vector.broadcast %cst_60 : f32 to vector<16x256xf32>
    %177 = arith.mulf %176, %175 : vector<16x256xf32>
    %cst_61 = arith.constant 1.000000e+00 : f32
    %178 = vector.broadcast %cst_61 : f32 to vector<16x256xf32>
    %179 = arith.addf %178, %177 : vector<16x256xf32>
    %cst_62 = arith.constant 1.000000e+00 : f32
    %180 = vector.broadcast %cst_62 : f32 to vector<16x256xf32>
    %181 = arith.divf %180, %179 : vector<16x256xf32>
    %cst_63 = arith.constant 1.06140542 : f32
    %182 = vector.broadcast %cst_63 : f32 to vector<16x256xf32>
    %183 = arith.mulf %182, %181 : vector<16x256xf32>
    %cst_64 = arith.constant 1.45315206 : f32
    %184 = vector.broadcast %cst_64 : f32 to vector<16x256xf32>
    %185 = arith.subf %183, %184 : vector<16x256xf32>
    %186 = arith.mulf %185, %181 : vector<16x256xf32>
    %cst_65 = arith.constant 1.42141378 : f32
    %187 = vector.broadcast %cst_65 : f32 to vector<16x256xf32>
    %188 = arith.addf %186, %187 : vector<16x256xf32>
    %189 = arith.mulf %188, %181 : vector<16x256xf32>
    %cst_66 = arith.constant 0.284496725 : f32
    %190 = vector.broadcast %cst_66 : f32 to vector<16x256xf32>
    %191 = arith.subf %189, %190 : vector<16x256xf32>
    %192 = arith.mulf %191, %181 : vector<16x256xf32>
    %cst_67 = arith.constant 0.254829586 : f32
    %193 = vector.broadcast %cst_67 : f32 to vector<16x256xf32>
    %194 = arith.addf %192, %193 : vector<16x256xf32>
    %195 = arith.mulf %194, %181 : vector<16x256xf32>
    %cst_68 = arith.constant 0.000000e+00 : f32
    %196 = vector.broadcast %cst_68 : f32 to vector<16x256xf32>
    %197 = arith.subf %196, %175 : vector<16x256xf32>
    %198 = arith.mulf %197, %175 : vector<16x256xf32>
    %199 = math.exp %198 : vector<16x256xf32>
    %200 = arith.mulf %195, %199 : vector<16x256xf32>
    %cst_69 = arith.constant 1.000000e+00 : f32
    %201 = vector.broadcast %cst_69 : f32 to vector<16x256xf32>
    %202 = arith.subf %201, %200 : vector<16x256xf32>
    %cst_70 = arith.constant 0.000000e+00 : f32
    %203 = vector.broadcast %cst_70 : f32 to vector<16x256xf32>
    %204 = arith.cmpf olt, %170, %203 : vector<16x256xf32>
    %cst_71 = arith.constant 0.000000e+00 : f32
    %205 = vector.broadcast %cst_71 : f32 to vector<16x256xf32>
    %206 = arith.subf %205, %202 : vector<16x256xf32>
    %207 = arith.select %204, %206, %202 : vector<16x256xi1>, vector<16x256xf32>
    %cst_72 = arith.constant 1.000000e+00 : f32
    %208 = vector.broadcast %cst_72 : f32 to vector<16x256xf32>
    %209 = arith.addf %208, %207 : vector<16x256xf32>
    %210 = arith.mulf %168, %209 : vector<16x256xf32>
    %211 = arith.truncf %210 : vector<16x256xf32> to vector<16x256xbf16>
    %c0_73 = arith.constant 0 : index
    %c0_74 = arith.constant 0 : index
    %212 = vector.load %arg10[%c0_73, %c0_74] : memref<256x128xbf16, #tpu.memory_space<vmem>>, vector<256x128xbf16>
    %cst_75 = arith.constant dense<0.000000e+00> : vector<16x128xf32>
    %213 = tpu.matmul %211, %212, %cst_75 {dimension_numbers = #tpu.dot_dimension_numbers<[1], [0], [0], [1], [0, 0, 1, 1], [], []>} : vector<16x256xbf16>, vector<256x128xbf16>, vector<16x128xf32> -> vector<16x128xf32>
    %214 = vector.broadcast %36 : vector<1x128xf32> to vector<16x128xf32>
    %215 = arith.addf %213, %214 : vector<16x128xf32>
    %216 = arith.addf %160, %215 : vector<16x128xf32>
    %cst_76 = arith.constant dense<0.000000e+00> : vector<16xf32>
    %217 = vector.multi_reduction <add>, %216, %cst_76 [1] : vector<16x128xf32> to vector<16xf32>
    %218 = vector.shape_cast %217 : vector<16xf32> to vector<16x1xf32>
    %cst_77 = arith.constant 1.280000e+02 : f32
    %219 = vector.broadcast %cst_77 : f32 to vector<16x1xf32>
    %220 = arith.divf %218, %219 : vector<16x1xf32>
    %221 = vector.broadcast %220 : vector<16x1xf32> to vector<16x128xf32>
    %222 = arith.subf %216, %221 : vector<16x128xf32>
    %223 = arith.mulf %222, %222 : vector<16x128xf32>
    %cst_78 = arith.constant dense<0.000000e+00> : vector<16xf32>
    %224 = vector.multi_reduction <add>, %223, %cst_78 [1] : vector<16x128xf32> to vector<16xf32>
    %225 = vector.shape_cast %224 : vector<16xf32> to vector<16x1xf32>
    %cst_79 = arith.constant 1.280000e+02 : f32
    %226 = vector.broadcast %cst_79 : f32 to vector<16x1xf32>
    %227 = arith.divf %225, %226 : vector<16x1xf32>
    %cst_80 = arith.constant 9.99999996E-13 : f32
    %228 = vector.broadcast %cst_80 : f32 to vector<16x1xf32>
    %229 = arith.addf %227, %228 : vector<16x1xf32>
    %230 = math.rsqrt %229 : vector<16x1xf32>
    %231 = vector.broadcast %230 : vector<16x1xf32> to vector<16x128xf32>
    %232 = arith.mulf %222, %231 : vector<16x128xf32>
    %233 = vector.broadcast %37 : vector<1x128xf32> to vector<16x128xf32>
    %234 = arith.mulf %232, %233 : vector<16x128xf32>
    %235 = vector.broadcast %38 : vector<1x128xf32> to vector<16x128xf32>
    %236 = arith.addf %234, %235 : vector<16x128xf32>
    %c0_81 = arith.constant 0 : index
    %c0_82 = arith.constant 0 : index
    %237 = vector.load %arg11[%c0_81, %c0_82] : memref<16x128xf32, #tpu.memory_space<vmem>>, vector<16x128xf32>
    tpu.vector_store %arg11[%c0_81, %c0_82], %236 {strides = array<i32>} : memref<16x128xf32, #tpu.memory_space<vmem>>, vector<16x128xf32>,
    return
  }
  func.func @transform_0(%arg0: i32) -> (i32, i32) {
    %c0_i32 = arith.constant 0 : i32
    %c0_i32_0 = arith.constant 0 : i32
    return %arg0, %c0_i32 : i32, i32
  }
  func.func @transform_1(%arg0: i32) -> (i32, i32) {
    %c0_i32 = arith.constant 0 : i32
    %c0_i32_0 = arith.constant 0 : i32
    %c0_i32_1 = arith.constant 0 : i32
    return %c0_i32, %c0_i32_0 : i32, i32
  }
  func.func @transform_2(%arg0: i32) -> (i32, i32) {
    %c0_i32 = arith.constant 0 : i32
    %c0_i32_0 = arith.constant 0 : i32
    %c0_i32_1 = arith.constant 0 : i32
    return %c0_i32, %c0_i32_0 : i32, i32
  }
  func.func @transform_3(%arg0: i32) -> (i32, i32) {
    %c0_i32 = arith.constant 0 : i32
    %c0_i32_0 = arith.constant 0 : i32
    %c0_i32_1 = arith.constant 0 : i32
    return %c0_i32, %c0_i32_0 : i32, i32
  }
  func.func @transform_4(%arg0: i32) -> (i32, i32) {
    %c0_i32 = arith.constant 0 : i32
    %c0_i32_0 = arith.constant 0 : i32
    %c0_i32_1 = arith.constant 0 : i32
    return %c0_i32, %c0_i32_0 : i32, i32
  }
  func.func @transform_5(%arg0: i32) -> (i32, i32) {
    %c0_i32 = arith.constant 0 : i32
    %c0_i32_0 = arith.constant 0 : i32
    %c0_i32_1 = arith.constant 0 : i32
    return %c0_i32, %c0_i32_0 : i32, i32
  }
  func.func @transform_6(%arg0: i32) -> (i32, i32) {
    %c0_i32 = arith.constant 0 : i32
    %c0_i32_0 = arith.constant 0 : i32
    %c0_i32_1 = arith.constant 0 : i32
    return %c0_i32, %c0_i32_0 : i32, i32
  }
  func.func @transform_7(%arg0: i32) -> (i32, i32) {
    %c0_i32 = arith.constant 0 : i32
    %c0_i32_0 = arith.constant 0 : i32
    %c0_i32_1 = arith.constant 0 : i32
    return %c0_i32, %c0_i32_0 : i32, i32
  }
  func.func @transform_8(%arg0: i32) -> (i32, i32) {
    %c0_i32 = arith.constant 0 : i32
    %c0_i32_0 = arith.constant 0 : i32
    %c0_i32_1 = arith.constant 0 : i32
    return %c0_i32, %c0_i32_0 : i32, i32
  }
  func.func @transform_9(%arg0: i32) -> (i32, i32) {
    %c0_i32 = arith.constant 0 : i32
    %c0_i32_0 = arith.constant 0 : i32
    %c0_i32_1 = arith.constant 0 : i32
    return %c0_i32, %c0_i32_0 : i32, i32
  }
  func.func @transform_10(%arg0: i32) -> (i32, i32) {
    %c0_i32 = arith.constant 0 : i32
    %c0_i32_0 = arith.constant 0 : i32
    return %arg0, %c0_i32 : i32, i32
  }
}

module attributes {stable_mosaic.version = 11 : i64} {
  func.func @transformer_layer_kernel(%arg0: i32, %arg1: memref<16x128xf32, #tpu.memory_space<vmem>>, %arg2: memref<128x384xbf16, #tpu.memory_space<vmem>>, %arg3: memref<1x384xf32, #tpu.memory_space<vmem>>, %arg4: memref<128x128xbf16, #tpu.memory_space<vmem>>, %arg5: memref<8x128xf32, #tpu.memory_space<vmem>>, %arg6: memref<128x256xbf16, #tpu.memory_space<vmem>>, %arg7: memref<1x256xf32, #tpu.memory_space<vmem>>, %arg8: memref<256x128xbf16, #tpu.memory_space<vmem>>, %arg9: memref<128x1xf32, #tpu.memory_space<vmem>>, %arg10: memref<1x1xf32, #tpu.memory_space<vmem>>, %arg11: memref<16x128xf32, #tpu.memory_space<vmem>>, %arg12: memref<16x1xf32, #tpu.memory_space<vmem>>, %arg13: memref<16x128xf32, #tpu.memory_space<vmem>>) attributes {dimension_semantics = [#tpu.dimension_semantics<parallel>], iteration_bounds = array<i64: 1>, scalar_prefetch = 0 : i64, scratch_operands = 1 : i64, tpu.core_type = #tpu.core_type<tc>, window_params = [{transform_indices = @transform_0, window_bounds = array<i64: 16, 128>}, {pipeline_mode = #tpu.pipeline_mode<synchronous>, transform_indices = @transform_1, window_bounds = array<i64: 128, 384>}, {pipeline_mode = #tpu.pipeline_mode<synchronous>, transform_indices = @transform_2, window_bounds = array<i64: 1, 384>}, {pipeline_mode = #tpu.pipeline_mode<synchronous>, transform_indices = @transform_3, window_bounds = array<i64: 128, 128>}, {pipeline_mode = #tpu.pipeline_mode<synchronous>, transform_indices = @transform_4, window_bounds = array<i64: 8, 128>}, {pipeline_mode = #tpu.pipeline_mode<synchronous>, transform_indices = @transform_5, window_bounds = array<i64: 128, 256>}, {pipeline_mode = #tpu.pipeline_mode<synchronous>, transform_indices = @transform_6, window_bounds = array<i64: 1, 256>}, {pipeline_mode = #tpu.pipeline_mode<synchronous>, transform_indices = @transform_7, window_bounds = array<i64: 256, 128>}, {pipeline_mode = #tpu.pipeline_mode<synchronous>, transform_indices = @transform_8, window_bounds = array<i64: 128, 1>}, {pipeline_mode = #tpu.pipeline_mode<synchronous>, transform_indices = @transform_9, window_bounds = array<i64: 1, 1>}, {transform_indices = @transform_10, window_bounds = array<i64: 16, 128>}, {transform_indices = @transform_11, window_bounds = array<i64: 16, 1>}]} {
    %c0 = arith.constant 0 : index
    %c0_0 = arith.constant 0 : index
    %0 = vector.load %arg1[%c0, %c0_0] : memref<16x128xf32, #tpu.memory_space<vmem>>, vector<16x128xf32>
    %c0_1 = arith.constant 0 : index
    %c0_2 = arith.constant 0 : index
    %1 = vector.load %arg5[%c0_1, %c0_2] : memref<8x128xf32, #tpu.memory_space<vmem>>, vector<8x128xf32>
    %2 = vector.extract_strided_slice %1 {offsets = [0, 0], sizes = [1, 128], strides = [1, 1]} : vector<8x128xf32> to vector<1x128xf32>
    %3 = vector.extract_strided_slice %1 {offsets = [1, 0], sizes = [1, 128], strides = [1, 1]} : vector<8x128xf32> to vector<1x128xf32>
    %4 = vector.extract_strided_slice %1 {offsets = [2, 0], sizes = [1, 128], strides = [1, 1]} : vector<8x128xf32> to vector<1x128xf32>
    %5 = vector.extract_strided_slice %1 {offsets = [3, 0], sizes = [1, 128], strides = [1, 1]} : vector<8x128xf32> to vector<1x128xf32>
    %6 = vector.extract_strided_slice %1 {offsets = [4, 0], sizes = [1, 128], strides = [1, 1]} : vector<8x128xf32> to vector<1x128xf32>
    %7 = vector.extract_strided_slice %1 {offsets = [5, 0], sizes = [1, 128], strides = [1, 1]} : vector<8x128xf32> to vector<1x128xf32>
    %8 = arith.truncf %0 : vector<16x128xf32> to vector<16x128xbf16>
    %c0_3 = arith.constant 0 : index
    %c0_4 = arith.constant 0 : index
    %9 = vector.load %arg2[%c0_3, %c0_4] : memref<128x384xbf16, #tpu.memory_space<vmem>>, vector<128x384xbf16>
    %cst = arith.constant dense<0.000000e+00> : vector<16x384xf32>
    %10 = tpu.matmul %8, %9, %cst {dimension_numbers = #tpu.dot_dimension_numbers<[1], [0], [0], [1], [0, 0, 1, 1], [], []>} : vector<16x128xbf16>, vector<128x384xbf16>, vector<16x384xf32> -> vector<16x384xf32>
    %c0_5 = arith.constant 0 : index
    %c0_6 = arith.constant 0 : index
    %11 = vector.load %arg3[%c0_5, %c0_6] : memref<1x384xf32, #tpu.memory_space<vmem>>, vector<1x384xf32>
    %12 = vector.broadcast %11 : vector<1x384xf32> to vector<16x384xf32>
    %13 = arith.addf %10, %12 : vector<16x384xf32>
    %14 = vector.extract_strided_slice %13 {offsets = [0, 0], sizes = [16, 128], strides = [1, 1]} : vector<16x384xf32> to vector<16x128xf32>
    %15 = vector.shape_cast %14 : vector<16x128xf32> to vector<2x8x128xf32>
    %16 = arith.truncf %15 : vector<2x8x128xf32> to vector<2x8x128xbf16>
    %17 = vector.extract_strided_slice %13 {offsets = [0, 128], sizes = [16, 128], strides = [1, 1]} : vector<16x384xf32> to vector<16x128xf32>
    %18 = vector.shape_cast %17 : vector<16x128xf32> to vector<2x8x128xf32>
    %19 = arith.truncf %18 : vector<2x8x128xf32> to vector<2x8x128xbf16>
    %20 = vector.extract_strided_slice %13 {offsets = [0, 256], sizes = [16, 128], strides = [1, 1]} : vector<16x384xf32> to vector<16x128xf32>
    %21 = vector.shape_cast %20 : vector<16x128xf32> to vector<2x8x128xf32>
    %22 = arith.truncf %21 : vector<2x8x128xf32> to vector<2x8x128xbf16>
    %23 = vector.extract_strided_slice %16 {offsets = [0, 0, 0], sizes = [2, 8, 32], strides = [1, 1, 1]} : vector<2x8x128xbf16> to vector<2x8x32xbf16>
    %24 = vector.extract_strided_slice %19 {offsets = [0, 0, 0], sizes = [2, 8, 32], strides = [1, 1, 1]} : vector<2x8x128xbf16> to vector<2x8x32xbf16>
    %25 = vector.extract_strided_slice %22 {offsets = [0, 0, 0], sizes = [2, 8, 32], strides = [1, 1, 1]} : vector<2x8x128xbf16> to vector<2x8x32xbf16>
    "tpu.trace_start"() <{level = 10 : i32, message = "bqd,bkd->bqk"}> : () -> ()
    %cst_7 = arith.constant dense<0.000000e+00> : vector<2x8x8xf32>
    %26 = tpu.matmul %23, %24, %cst_7 {dimension_numbers = #tpu.dot_dimension_numbers<[2], [2], [1], [1], [0, 0, 0, 1, 1, 1], [0], [0]>} : vector<2x8x32xbf16>, vector<2x8x32xbf16>, vector<2x8x8xf32> -> vector<2x8x8xf32>
    "tpu.trace_stop"() : () -> ()
    %cst_8 = arith.constant 0.176776692 : f32
    %27 = vector.broadcast %cst_8 : f32 to vector<2x8x8xf32>
    %28 = arith.mulf %26, %27 : vector<2x8x8xf32>
    %cst_9 = arith.constant dense<0xFF800000> : vector<2x8xf32>
    %29 = vector.multi_reduction <maximumf>, %28, %cst_9 [2] : vector<2x8x8xf32> to vector<2x8xf32>
    %30 = vector.shape_cast %29 : vector<2x8xf32> to vector<2x8x1xf32>
    %31 = vector.broadcast %30 : vector<2x8x1xf32> to vector<2x8x8xf32>
    %32 = arith.subf %28, %31 : vector<2x8x8xf32>
    %33 = math.exp %32 : vector<2x8x8xf32>
    %cst_10 = arith.constant dense<0.000000e+00> : vector<2x8xf32>
    %34 = vector.multi_reduction <add>, %33, %cst_10 [2] : vector<2x8x8xf32> to vector<2x8xf32>
    %35 = vector.shape_cast %34 : vector<2x8xf32> to vector<2x8x1xf32>
    %36 = tpu.reciprocal %35 {approx = true} : vector<2x8x1xf32> -> vector<2x8x1xf32>
    %37 = vector.broadcast %36 : vector<2x8x1xf32> to vector<2x8x8xf32>
    %38 = arith.mulf %33, %37 : vector<2x8x8xf32>
    %39 = arith.truncf %38 : vector<2x8x8xf32> to vector<2x8x8xbf16>
    "tpu.trace_start"() <{level = 10 : i32, message = "bqk,bkd->bqd"}> : () -> ()
    %cst_11 = arith.constant dense<0.000000e+00> : vector<2x8x32xf32>
    %40 = tpu.matmul %39, %25, %cst_11 {dimension_numbers = #tpu.dot_dimension_numbers<[2], [1], [1], [2], [0, 0, 0, 1, 1, 2], [0], [0]>} : vector<2x8x8xbf16>, vector<2x8x32xbf16>, vector<2x8x32xf32> -> vector<2x8x32xf32>
    "tpu.trace_stop"() : () -> ()
    %41 = vector.shape_cast %40 : vector<2x8x32xf32> to vector<16x32xf32>
    %c0_12 = arith.constant 0 : index
    %c0_13 = arith.constant 0 : index
    %42 = vector.load %arg13[%c0_12, %c0_13] : memref<16x128xf32, #tpu.memory_space<vmem>>, vector<16x32xf32>
    tpu.vector_store %arg13[%c0_12, %c0_13], %41 {strides = array<i32>} : memref<16x128xf32, #tpu.memory_space<vmem>>, vector<16x32xf32>,
    %43 = vector.extract_strided_slice %16 {offsets = [0, 0, 32], sizes = [2, 8, 32], strides = [1, 1, 1]} : vector<2x8x128xbf16> to vector<2x8x32xbf16>
    %44 = vector.extract_strided_slice %19 {offsets = [0, 0, 32], sizes = [2, 8, 32], strides = [1, 1, 1]} : vector<2x8x128xbf16> to vector<2x8x32xbf16>
    %45 = vector.extract_strided_slice %22 {offsets = [0, 0, 32], sizes = [2, 8, 32], strides = [1, 1, 1]} : vector<2x8x128xbf16> to vector<2x8x32xbf16>
    "tpu.trace_start"() <{level = 10 : i32, message = "bqd,bkd->bqk"}> : () -> ()
    %cst_14 = arith.constant dense<0.000000e+00> : vector<2x8x8xf32>
    %46 = tpu.matmul %43, %44, %cst_14 {dimension_numbers = #tpu.dot_dimension_numbers<[2], [2], [1], [1], [0, 0, 0, 1, 1, 1], [0], [0]>} : vector<2x8x32xbf16>, vector<2x8x32xbf16>, vector<2x8x8xf32> -> vector<2x8x8xf32>
    "tpu.trace_stop"() : () -> ()
    %cst_15 = arith.constant 0.176776692 : f32
    %47 = vector.broadcast %cst_15 : f32 to vector<2x8x8xf32>
    %48 = arith.mulf %46, %47 : vector<2x8x8xf32>
    %cst_16 = arith.constant dense<0xFF800000> : vector<2x8xf32>
    %49 = vector.multi_reduction <maximumf>, %48, %cst_16 [2] : vector<2x8x8xf32> to vector<2x8xf32>
    %50 = vector.shape_cast %49 : vector<2x8xf32> to vector<2x8x1xf32>
    %51 = vector.broadcast %50 : vector<2x8x1xf32> to vector<2x8x8xf32>
    %52 = arith.subf %48, %51 : vector<2x8x8xf32>
    %53 = math.exp %52 : vector<2x8x8xf32>
    %cst_17 = arith.constant dense<0.000000e+00> : vector<2x8xf32>
    %54 = vector.multi_reduction <add>, %53, %cst_17 [2] : vector<2x8x8xf32> to vector<2x8xf32>
    %55 = vector.shape_cast %54 : vector<2x8xf32> to vector<2x8x1xf32>
    %56 = tpu.reciprocal %55 {approx = true} : vector<2x8x1xf32> -> vector<2x8x1xf32>
    %57 = vector.broadcast %56 : vector<2x8x1xf32> to vector<2x8x8xf32>
    %58 = arith.mulf %53, %57 : vector<2x8x8xf32>
    %59 = arith.truncf %58 : vector<2x8x8xf32> to vector<2x8x8xbf16>
    "tpu.trace_start"() <{level = 10 : i32, message = "bqk,bkd->bqd"}> : () -> ()
    %cst_18 = arith.constant dense<0.000000e+00> : vector<2x8x32xf32>
    %60 = tpu.matmul %59, %45, %cst_18 {dimension_numbers = #tpu.dot_dimension_numbers<[2], [1], [1], [2], [0, 0, 0, 1, 1, 2], [0], [0]>} : vector<2x8x8xbf16>, vector<2x8x32xbf16>, vector<2x8x32xf32> -> vector<2x8x32xf32>
    "tpu.trace_stop"() : () -> ()
    %61 = vector.shape_cast %60 : vector<2x8x32xf32> to vector<16x32xf32>
    %c0_19 = arith.constant 0 : index
    %c32 = arith.constant 32 : index
    %62 = vector.load %arg13[%c0_19, %c32] : memref<16x128xf32, #tpu.memory_space<vmem>>, vector<16x32xf32>
    tpu.vector_store %arg13[%c0_19, %c32], %61 {strides = array<i32>} : memref<16x128xf32, #tpu.memory_space<vmem>>, vector<16x32xf32>,
    %63 = vector.extract_strided_slice %16 {offsets = [0, 0, 64], sizes = [2, 8, 32], strides = [1, 1, 1]} : vector<2x8x128xbf16> to vector<2x8x32xbf16>
    %64 = vector.extract_strided_slice %19 {offsets = [0, 0, 64], sizes = [2, 8, 32], strides = [1, 1, 1]} : vector<2x8x128xbf16> to vector<2x8x32xbf16>
    %65 = vector.extract_strided_slice %22 {offsets = [0, 0, 64], sizes = [2, 8, 32], strides = [1, 1, 1]} : vector<2x8x128xbf16> to vector<2x8x32xbf16>
    "tpu.trace_start"() <{level = 10 : i32, message = "bqd,bkd->bqk"}> : () -> ()
    %cst_20 = arith.constant dense<0.000000e+00> : vector<2x8x8xf32>
    %66 = tpu.matmul %63, %64, %cst_20 {dimension_numbers = #tpu.dot_dimension_numbers<[2], [2], [1], [1], [0, 0, 0, 1, 1, 1], [0], [0]>} : vector<2x8x32xbf16>, vector<2x8x32xbf16>, vector<2x8x8xf32> -> vector<2x8x8xf32>
    "tpu.trace_stop"() : () -> ()
    %cst_21 = arith.constant 0.176776692 : f32
    %67 = vector.broadcast %cst_21 : f32 to vector<2x8x8xf32>
    %68 = arith.mulf %66, %67 : vector<2x8x8xf32>
    %cst_22 = arith.constant dense<0xFF800000> : vector<2x8xf32>
    %69 = vector.multi_reduction <maximumf>, %68, %cst_22 [2] : vector<2x8x8xf32> to vector<2x8xf32>
    %70 = vector.shape_cast %69 : vector<2x8xf32> to vector<2x8x1xf32>
    %71 = vector.broadcast %70 : vector<2x8x1xf32> to vector<2x8x8xf32>
    %72 = arith.subf %68, %71 : vector<2x8x8xf32>
    %73 = math.exp %72 : vector<2x8x8xf32>
    %cst_23 = arith.constant dense<0.000000e+00> : vector<2x8xf32>
    %74 = vector.multi_reduction <add>, %73, %cst_23 [2] : vector<2x8x8xf32> to vector<2x8xf32>
    %75 = vector.shape_cast %74 : vector<2x8xf32> to vector<2x8x1xf32>
    %76 = tpu.reciprocal %75 {approx = true} : vector<2x8x1xf32> -> vector<2x8x1xf32>
    %77 = vector.broadcast %76 : vector<2x8x1xf32> to vector<2x8x8xf32>
    %78 = arith.mulf %73, %77 : vector<2x8x8xf32>
    %79 = arith.truncf %78 : vector<2x8x8xf32> to vector<2x8x8xbf16>
    "tpu.trace_start"() <{level = 10 : i32, message = "bqk,bkd->bqd"}> : () -> ()
    %cst_24 = arith.constant dense<0.000000e+00> : vector<2x8x32xf32>
    %80 = tpu.matmul %79, %65, %cst_24 {dimension_numbers = #tpu.dot_dimension_numbers<[2], [1], [1], [2], [0, 0, 0, 1, 1, 2], [0], [0]>} : vector<2x8x8xbf16>, vector<2x8x32xbf16>, vector<2x8x32xf32> -> vector<2x8x32xf32>
    "tpu.trace_stop"() : () -> ()
    %81 = vector.shape_cast %80 : vector<2x8x32xf32> to vector<16x32xf32>
    %c0_25 = arith.constant 0 : index
    %c64 = arith.constant 64 : index
    %82 = vector.load %arg13[%c0_25, %c64] : memref<16x128xf32, #tpu.memory_space<vmem>>, vector<16x32xf32>
    tpu.vector_store %arg13[%c0_25, %c64], %81 {strides = array<i32>} : memref<16x128xf32, #tpu.memory_space<vmem>>, vector<16x32xf32>,
    %83 = vector.extract_strided_slice %16 {offsets = [0, 0, 96], sizes = [2, 8, 32], strides = [1, 1, 1]} : vector<2x8x128xbf16> to vector<2x8x32xbf16>
    %84 = vector.extract_strided_slice %19 {offsets = [0, 0, 96], sizes = [2, 8, 32], strides = [1, 1, 1]} : vector<2x8x128xbf16> to vector<2x8x32xbf16>
    %85 = vector.extract_strided_slice %22 {offsets = [0, 0, 96], sizes = [2, 8, 32], strides = [1, 1, 1]} : vector<2x8x128xbf16> to vector<2x8x32xbf16>
    "tpu.trace_start"() <{level = 10 : i32, message = "bqd,bkd->bqk"}> : () -> ()
    %cst_26 = arith.constant dense<0.000000e+00> : vector<2x8x8xf32>
    %86 = tpu.matmul %83, %84, %cst_26 {dimension_numbers = #tpu.dot_dimension_numbers<[2], [2], [1], [1], [0, 0, 0, 1, 1, 1], [0], [0]>} : vector<2x8x32xbf16>, vector<2x8x32xbf16>, vector<2x8x8xf32> -> vector<2x8x8xf32>
    "tpu.trace_stop"() : () -> ()
    %cst_27 = arith.constant 0.176776692 : f32
    %87 = vector.broadcast %cst_27 : f32 to vector<2x8x8xf32>
    %88 = arith.mulf %86, %87 : vector<2x8x8xf32>
    %cst_28 = arith.constant dense<0xFF800000> : vector<2x8xf32>
    %89 = vector.multi_reduction <maximumf>, %88, %cst_28 [2] : vector<2x8x8xf32> to vector<2x8xf32>
    %90 = vector.shape_cast %89 : vector<2x8xf32> to vector<2x8x1xf32>
    %91 = vector.broadcast %90 : vector<2x8x1xf32> to vector<2x8x8xf32>
    %92 = arith.subf %88, %91 : vector<2x8x8xf32>
    %93 = math.exp %92 : vector<2x8x8xf32>
    %cst_29 = arith.constant dense<0.000000e+00> : vector<2x8xf32>
    %94 = vector.multi_reduction <add>, %93, %cst_29 [2] : vector<2x8x8xf32> to vector<2x8xf32>
    %95 = vector.shape_cast %94 : vector<2x8xf32> to vector<2x8x1xf32>
    %96 = tpu.reciprocal %95 {approx = true} : vector<2x8x1xf32> -> vector<2x8x1xf32>
    %97 = vector.broadcast %96 : vector<2x8x1xf32> to vector<2x8x8xf32>
    %98 = arith.mulf %93, %97 : vector<2x8x8xf32>
    %99 = arith.truncf %98 : vector<2x8x8xf32> to vector<2x8x8xbf16>
    "tpu.trace_start"() <{level = 10 : i32, message = "bqk,bkd->bqd"}> : () -> ()
    %cst_30 = arith.constant dense<0.000000e+00> : vector<2x8x32xf32>
    %100 = tpu.matmul %99, %85, %cst_30 {dimension_numbers = #tpu.dot_dimension_numbers<[2], [1], [1], [2], [0, 0, 0, 1, 1, 2], [0], [0]>} : vector<2x8x8xbf16>, vector<2x8x32xbf16>, vector<2x8x32xf32> -> vector<2x8x32xf32>
    "tpu.trace_stop"() : () -> ()
    %101 = vector.shape_cast %100 : vector<2x8x32xf32> to vector<16x32xf32>
    %c0_31 = arith.constant 0 : index
    %c96 = arith.constant 96 : index
    %102 = vector.load %arg13[%c0_31, %c96] : memref<16x128xf32, #tpu.memory_space<vmem>>, vector<16x32xf32>
    tpu.vector_store %arg13[%c0_31, %c96], %101 {strides = array<i32>} : memref<16x128xf32, #tpu.memory_space<vmem>>, vector<16x32xf32>,
    %c0_32 = arith.constant 0 : index
    %c0_33 = arith.constant 0 : index
    %103 = vector.load %arg13[%c0_32, %c0_33] : memref<16x128xf32, #tpu.memory_space<vmem>>, vector<16x128xf32>
    %104 = arith.truncf %103 : vector<16x128xf32> to vector<16x128xbf16>
    %c0_34 = arith.constant 0 : index
    %c0_35 = arith.constant 0 : index
    %105 = vector.load %arg4[%c0_34, %c0_35] : memref<128x128xbf16, #tpu.memory_space<vmem>>, vector<128x128xbf16>
    %cst_36 = arith.constant dense<0.000000e+00> : vector<16x128xf32>
    %106 = tpu.matmul %104, %105, %cst_36 {dimension_numbers = #tpu.dot_dimension_numbers<[1], [0], [0], [1], [0, 0, 1, 1], [], []>} : vector<16x128xbf16>, vector<128x128xbf16>, vector<16x128xf32> -> vector<16x128xf32>
    %107 = vector.broadcast %2 : vector<1x128xf32> to vector<16x128xf32>
    %108 = arith.addf %106, %107 : vector<16x128xf32>
    %109 = arith.addf %0, %108 : vector<16x128xf32>
    %cst_37 = arith.constant dense<0.000000e+00> : vector<16xf32>
    %110 = vector.multi_reduction <add>, %109, %cst_37 [1] : vector<16x128xf32> to vector<16xf32>
    %111 = vector.shape_cast %110 : vector<16xf32> to vector<16x1xf32>
    %cst_38 = arith.constant 1.280000e+02 : f32
    %112 = vector.broadcast %cst_38 : f32 to vector<16x1xf32>
    %113 = arith.divf %111, %112 : vector<16x1xf32>
    %114 = vector.broadcast %113 : vector<16x1xf32> to vector<16x128xf32>
    %115 = arith.subf %109, %114 : vector<16x128xf32>
    %116 = arith.mulf %115, %115 : vector<16x128xf32>
    %cst_39 = arith.constant dense<0.000000e+00> : vector<16xf32>
    %117 = vector.multi_reduction <add>, %116, %cst_39 [1] : vector<16x128xf32> to vector<16xf32>
    %118 = vector.shape_cast %117 : vector<16xf32> to vector<16x1xf32>
    %cst_40 = arith.constant 1.280000e+02 : f32
    %119 = vector.broadcast %cst_40 : f32 to vector<16x1xf32>
    %120 = arith.divf %118, %119 : vector<16x1xf32>
    %cst_41 = arith.constant 9.99999996E-13 : f32
    %121 = vector.broadcast %cst_41 : f32 to vector<16x1xf32>
    %122 = arith.addf %120, %121 : vector<16x1xf32>
    %123 = math.rsqrt %122 : vector<16x1xf32>
    %124 = vector.broadcast %123 : vector<16x1xf32> to vector<16x128xf32>
    %125 = arith.mulf %115, %124 : vector<16x128xf32>
    %126 = vector.broadcast %3 : vector<1x128xf32> to vector<16x128xf32>
    %127 = arith.mulf %125, %126 : vector<16x128xf32>
    %128 = vector.broadcast %4 : vector<1x128xf32> to vector<16x128xf32>
    %129 = arith.addf %127, %128 : vector<16x128xf32>
    %130 = arith.truncf %129 : vector<16x128xf32> to vector<16x128xbf16>
    %c0_42 = arith.constant 0 : index
    %c0_43 = arith.constant 0 : index
    %131 = vector.load %arg6[%c0_42, %c0_43] : memref<128x256xbf16, #tpu.memory_space<vmem>>, vector<128x256xbf16>
    %cst_44 = arith.constant dense<0.000000e+00> : vector<16x256xf32>
    %132 = tpu.matmul %130, %131, %cst_44 {dimension_numbers = #tpu.dot_dimension_numbers<[1], [0], [0], [1], [0, 0, 1, 1], [], []>} : vector<16x128xbf16>, vector<128x256xbf16>, vector<16x256xf32> -> vector<16x256xf32>
    %c0_45 = arith.constant 0 : index
    %c0_46 = arith.constant 0 : index
    %133 = vector.load %arg7[%c0_45, %c0_46] : memref<1x256xf32, #tpu.memory_space<vmem>>, vector<1x256xf32>
    %134 = vector.broadcast %133 : vector<1x256xf32> to vector<16x256xf32>
    %135 = arith.addf %132, %134 : vector<16x256xf32>
    %cst_47 = arith.constant 5.000000e-01 : f32
    %136 = vector.broadcast %cst_47 : f32 to vector<16x256xf32>
    %137 = arith.mulf %136, %135 : vector<16x256xf32>
    %cst_48 = arith.constant 0.707106769 : f32
    %138 = vector.broadcast %cst_48 : f32 to vector<16x256xf32>
    %139 = arith.mulf %135, %138 : vector<16x256xf32>
    %cst_49 = arith.constant 0.000000e+00 : f32
    %140 = vector.broadcast %cst_49 : f32 to vector<16x256xf32>
    %141 = arith.cmpf olt, %139, %140 : vector<16x256xf32>
    %cst_50 = arith.constant 0.000000e+00 : f32
    %142 = vector.broadcast %cst_50 : f32 to vector<16x256xf32>
    %143 = arith.subf %142, %139 : vector<16x256xf32>
    %144 = arith.select %141, %143, %139 : vector<16x256xi1>, vector<16x256xf32>
    %cst_51 = arith.constant 0.327591091 : f32
    %145 = vector.broadcast %cst_51 : f32 to vector<16x256xf32>
    %146 = arith.mulf %145, %144 : vector<16x256xf32>
    %cst_52 = arith.constant 1.000000e+00 : f32
    %147 = vector.broadcast %cst_52 : f32 to vector<16x256xf32>
    %148 = arith.addf %147, %146 : vector<16x256xf32>
    %cst_53 = arith.constant 1.000000e+00 : f32
    %149 = vector.broadcast %cst_53 : f32 to vector<16x256xf32>
    %150 = arith.divf %149, %148 : vector<16x256xf32>
    %cst_54 = arith.constant 1.06140542 : f32
    %151 = vector.broadcast %cst_54 : f32 to vector<16x256xf32>
    %152 = arith.mulf %151, %150 : vector<16x256xf32>
    %cst_55 = arith.constant 1.45315206 : f32
    %153 = vector.broadcast %cst_55 : f32 to vector<16x256xf32>
    %154 = arith.subf %152, %153 : vector<16x256xf32>
    %155 = arith.mulf %154, %150 : vector<16x256xf32>
    %cst_56 = arith.constant 1.42141378 : f32
    %156 = vector.broadcast %cst_56 : f32 to vector<16x256xf32>
    %157 = arith.addf %155, %156 : vector<16x256xf32>
    %158 = arith.mulf %157, %150 : vector<16x256xf32>
    %cst_57 = arith.constant 0.284496725 : f32
    %159 = vector.broadcast %cst_57 : f32 to vector<16x256xf32>
    %160 = arith.subf %158, %159 : vector<16x256xf32>
    %161 = arith.mulf %160, %150 : vector<16x256xf32>
    %cst_58 = arith.constant 0.254829586 : f32
    %162 = vector.broadcast %cst_58 : f32 to vector<16x256xf32>
    %163 = arith.addf %161, %162 : vector<16x256xf32>
    %164 = arith.mulf %163, %150 : vector<16x256xf32>
    %cst_59 = arith.constant 0.000000e+00 : f32
    %165 = vector.broadcast %cst_59 : f32 to vector<16x256xf32>
    %166 = arith.subf %165, %144 : vector<16x256xf32>
    %167 = arith.mulf %166, %144 : vector<16x256xf32>
    %168 = math.exp %167 : vector<16x256xf32>
    %169 = arith.mulf %164, %168 : vector<16x256xf32>
    %cst_60 = arith.constant 1.000000e+00 : f32
    %170 = vector.broadcast %cst_60 : f32 to vector<16x256xf32>
    %171 = arith.subf %170, %169 : vector<16x256xf32>
    %cst_61 = arith.constant 0.000000e+00 : f32
    %172 = vector.broadcast %cst_61 : f32 to vector<16x256xf32>
    %173 = arith.cmpf olt, %139, %172 : vector<16x256xf32>
    %cst_62 = arith.constant 0.000000e+00 : f32
    %174 = vector.broadcast %cst_62 : f32 to vector<16x256xf32>
    %175 = arith.subf %174, %171 : vector<16x256xf32>
    %176 = arith.select %173, %175, %171 : vector<16x256xi1>, vector<16x256xf32>
    %cst_63 = arith.constant 1.000000e+00 : f32
    %177 = vector.broadcast %cst_63 : f32 to vector<16x256xf32>
    %178 = arith.addf %177, %176 : vector<16x256xf32>
    %179 = arith.mulf %137, %178 : vector<16x256xf32>
    %180 = arith.truncf %179 : vector<16x256xf32> to vector<16x256xbf16>
    %c0_64 = arith.constant 0 : index
    %c0_65 = arith.constant 0 : index
    %181 = vector.load %arg8[%c0_64, %c0_65] : memref<256x128xbf16, #tpu.memory_space<vmem>>, vector<256x128xbf16>
    %cst_66 = arith.constant dense<0.000000e+00> : vector<16x128xf32>
    %182 = tpu.matmul %180, %181, %cst_66 {dimension_numbers = #tpu.dot_dimension_numbers<[1], [0], [0], [1], [0, 0, 1, 1], [], []>} : vector<16x256xbf16>, vector<256x128xbf16>, vector<16x128xf32> -> vector<16x128xf32>
    %183 = vector.broadcast %5 : vector<1x128xf32> to vector<16x128xf32>
    %184 = arith.addf %182, %183 : vector<16x128xf32>
    %185 = arith.addf %129, %184 : vector<16x128xf32>
    %cst_67 = arith.constant dense<0.000000e+00> : vector<16xf32>
    %186 = vector.multi_reduction <add>, %185, %cst_67 [1] : vector<16x128xf32> to vector<16xf32>
    %187 = vector.shape_cast %186 : vector<16xf32> to vector<16x1xf32>
    %cst_68 = arith.constant 1.280000e+02 : f32
    %188 = vector.broadcast %cst_68 : f32 to vector<16x1xf32>
    %189 = arith.divf %187, %188 : vector<16x1xf32>
    %190 = vector.broadcast %189 : vector<16x1xf32> to vector<16x128xf32>
    %191 = arith.subf %185, %190 : vector<16x128xf32>
    %192 = arith.mulf %191, %191 : vector<16x128xf32>
    %cst_69 = arith.constant dense<0.000000e+00> : vector<16xf32>
    %193 = vector.multi_reduction <add>, %192, %cst_69 [1] : vector<16x128xf32> to vector<16xf32>
    %194 = vector.shape_cast %193 : vector<16xf32> to vector<16x1xf32>
    %cst_70 = arith.constant 1.280000e+02 : f32
    %195 = vector.broadcast %cst_70 : f32 to vector<16x1xf32>
    %196 = arith.divf %194, %195 : vector<16x1xf32>
    %cst_71 = arith.constant 9.99999996E-13 : f32
    %197 = vector.broadcast %cst_71 : f32 to vector<16x1xf32>
    %198 = arith.addf %196, %197 : vector<16x1xf32>
    %199 = math.rsqrt %198 : vector<16x1xf32>
    %200 = vector.broadcast %199 : vector<16x1xf32> to vector<16x128xf32>
    %201 = arith.mulf %191, %200 : vector<16x128xf32>
    %202 = vector.broadcast %6 : vector<1x128xf32> to vector<16x128xf32>
    %203 = arith.mulf %201, %202 : vector<16x128xf32>
    %204 = vector.broadcast %7 : vector<1x128xf32> to vector<16x128xf32>
    %205 = arith.addf %203, %204 : vector<16x128xf32>
    %c0_72 = arith.constant 0 : index
    %c0_73 = arith.constant 0 : index
    %206 = vector.load %arg11[%c0_72, %c0_73] : memref<16x128xf32, #tpu.memory_space<vmem>>, vector<16x128xf32>
    tpu.vector_store %arg11[%c0_72, %c0_73], %205 {strides = array<i32>} : memref<16x128xf32, #tpu.memory_space<vmem>>, vector<16x128xf32>,
    %c0_74 = arith.constant 0 : index
    %c0_75 = arith.constant 0 : index
    %207 = vector.load %arg9[%c0_74, %c0_75] : memref<128x1xf32, #tpu.memory_space<vmem>>, vector<128x1xf32>
    %cst_76 = arith.constant dense<0.000000e+00> : vector<16x1xf32>
    %208 = tpu.matmul %205, %207, %cst_76 {dimension_numbers = #tpu.dot_dimension_numbers<[1], [0], [0], [1], [0, 0, 1, 1], [], []>} : vector<16x128xf32>, vector<128x1xf32>, vector<16x1xf32> -> vector<16x1xf32>
    %c0_77 = arith.constant 0 : index
    %c0_78 = arith.constant 0 : index
    %209 = vector.load %arg10[%c0_77, %c0_78] : memref<1x1xf32, #tpu.memory_space<vmem>>, vector<1x1xf32>
    %210 = vector.broadcast %209 : vector<1x1xf32> to vector<16x1xf32>
    %211 = arith.addf %208, %210 : vector<16x1xf32>
    %c0_79 = arith.constant 0 : index
    %c0_80 = arith.constant 0 : index
    %212 = vector.load %arg12[%c0_79, %c0_80] : memref<16x1xf32, #tpu.memory_space<vmem>>, vector<16x1xf32>
    tpu.vector_store %arg12[%c0_79, %c0_80], %211 {strides = array<i32>} : memref<16x1xf32, #tpu.memory_space<vmem>>, vector<16x1xf32>,
    return
  }
  func.func @transform_0(%arg0: i32) -> (i32, i32) {
    %c0_i32 = arith.constant 0 : i32
    %c0_i32_0 = arith.constant 0 : i32
    return %arg0, %c0_i32 : i32, i32
  }
  func.func @transform_1(%arg0: i32) -> (i32, i32) {
    %c0_i32 = arith.constant 0 : i32
    %c0_i32_0 = arith.constant 0 : i32
    %c0_i32_1 = arith.constant 0 : i32
    return %c0_i32, %c0_i32_0 : i32, i32
  }
  func.func @transform_2(%arg0: i32) -> (i32, i32) {
    %c0_i32 = arith.constant 0 : i32
    %c0_i32_0 = arith.constant 0 : i32
    %c0_i32_1 = arith.constant 0 : i32
    return %c0_i32, %c0_i32_0 : i32, i32
  }
  func.func @transform_3(%arg0: i32) -> (i32, i32) {
    %c0_i32 = arith.constant 0 : i32
    %c0_i32_0 = arith.constant 0 : i32
    %c0_i32_1 = arith.constant 0 : i32
    return %c0_i32, %c0_i32_0 : i32, i32
  }
  func.func @transform_4(%arg0: i32) -> (i32, i32) {
    %c0_i32 = arith.constant 0 : i32
    %c0_i32_0 = arith.constant 0 : i32
    %c0_i32_1 = arith.constant 0 : i32
    return %c0_i32, %c0_i32_0 : i32, i32
  }
  func.func @transform_5(%arg0: i32) -> (i32, i32) {
    %c0_i32 = arith.constant 0 : i32
    %c0_i32_0 = arith.constant 0 : i32
    %c0_i32_1 = arith.constant 0 : i32
    return %c0_i32, %c0_i32_0 : i32, i32
  }
  func.func @transform_6(%arg0: i32) -> (i32, i32) {
    %c0_i32 = arith.constant 0 : i32
    %c0_i32_0 = arith.constant 0 : i32
    %c0_i32_1 = arith.constant 0 : i32
    return %c0_i32, %c0_i32_0 : i32, i32
  }
  func.func @transform_7(%arg0: i32) -> (i32, i32) {
    %c0_i32 = arith.constant 0 : i32
    %c0_i32_0 = arith.constant 0 : i32
    %c0_i32_1 = arith.constant 0 : i32
    return %c0_i32, %c0_i32_0 : i32, i32
  }
  func.func @transform_8(%arg0: i32) -> (i32, i32) {
    %c0_i32 = arith.constant 0 : i32
    %c0_i32_0 = arith.constant 0 : i32
    %c0_i32_1 = arith.constant 0 : i32
    return %c0_i32, %c0_i32_0 : i32, i32
  }
  func.func @transform_9(%arg0: i32) -> (i32, i32) {
    %c0_i32 = arith.constant 0 : i32
    %c0_i32_0 = arith.constant 0 : i32
    %c0_i32_1 = arith.constant 0 : i32
    return %c0_i32, %c0_i32_0 : i32, i32
  }
  func.func @transform_10(%arg0: i32) -> (i32, i32) {
    %c0_i32 = arith.constant 0 : i32
    %c0_i32_0 = arith.constant 0 : i32
    return %arg0, %c0_i32 : i32, i32
  }
  func.func @transform_11(%arg0: i32) -> (i32, i32) {
    %c0_i32 = arith.constant 0 : i32
    %c0_i32_0 = arith.constant 0 : i32
    return %arg0, %c0_i32 : i32, i32
  }
}

</mosaic_0001>

<llo_original>
// kernel: distilbert_for_reranking_forward.2
$region0: #{distilbert_for_reranking_forward.2}
  #allocation0 [shape = 'u32[]', space=smem, size = 0x4, offset = 0x4, fixed_abs, tag = 'smem constant byte address 0x4 - core index']
  #allocation1 [shape = 'u32[144,128]{1,0:T(1,128)}', space=vmem, size = 0x12000, scoped, tag = 'internal scratch']
  #allocation2 [shape = 'f32[16,128]{1,0:T(8,128)}', space=vmem, size = 0x2000, scoped, tag = 'scratch operand']
  %s0 = inlined_call_operand.vmem [shape: f32[16,128], index: 0, kind: input, shape index: {}]
  %s1 = inlined_call_operand.vmem [shape: f32[8,128], index: 1, kind: input, shape index: {}]
  %s2 = inlined_call_operand.vmem [shape: f32[2,128], index: 2, kind: input, shape index: {}]
  %s3 = inlined_call_operand.vmem [shape: bf16[128,384], index: 3, kind: input, shape index: {}]
  %s4 = inlined_call_operand.vmem [shape: f32[1,384], index: 4, kind: input, shape index: {}]
  %s5 = inlined_call_operand.hbm [shape: bf16[128,128], index: 5, kind: input, shape index: {}]
  %s6 = inlined_call_operand.vmem [shape: f32[8,128], index: 6, kind: input, shape index: {}]
  %s7 = inlined_call_operand.hbm [shape: bf16[128,256], index: 7, kind: input, shape index: {}]
  %s8 = inlined_call_operand.vmem [shape: f32[1,256], index: 8, kind: input, shape index: {}]
  %s9 = inlined_call_operand.hbm [shape: bf16[256,128], index: 9, kind: input, shape index: {}]
  %s10 = inlined_call_operand.vmem [shape: f32[16,128], index: 10, kind: output, shape index: {}]
  %s11 = sld [smem:[#allocation0]]
  $region62: #{distilbert_for_reranking_forward.2} parent=0
    _
  %s13 = ssub.s32 1, %s11
  %s14 = scalar_select 0, %s13, %s11
  $region1: #{distilbert_for_reranking_forward.2} parent=0
    #allocation3 [shape = 'u8[32768]{0}', space=vmem, size = 0x8000, scoped, tag = 'input window, operand 5, single buffered']
    #allocation4 [shape = 's32[1]{0}', space=sflag, size = 0x4, scoped, tag = 'scoped memory for distilbert_for_reranking_forward.2']
    #allocation5 [shape = 'u8[65536]{0}', space=vmem, size = 0x10000, scoped, tag = 'input window, operand 7, single buffered']
    #allocation6 [shape = 's32[1]{0}', space=sflag, size = 0x4, scoped, tag = 'scoped memory for distilbert_for_reranking_forward.2']
    #allocation7 [shape = 'u8[65536]{0}', space=vmem, size = 0x10000, scoped, tag = 'input window, operand 9, single buffered']
    %15 = vsyncpa [#allocation4], 0
    %16 = vsyncpa [#allocation6], 0
    // Predicated region
    $region2: #{distilbert_for_reranking_forward.2} parent=1 // pred_check
      _
    $region3: #{distilbert_for_reranking_forward.2} parent=1 // pred_check_branch
      %18 = sbr.rel (0) target = $region5
    $region4: #{distilbert_for_reranking_forward.2} parent=1 // pred_region
      _
    $region5: #{distilbert_for_reranking_forward.2} parent=1 // pred_fallthru
      _
    // Predicated region
    $region6: #{distilbert_for_reranking_forward.2} parent=1 // pred_check
      _
    $region7: #{distilbert_for_reranking_forward.2} parent=1 // pred_check_branch
      %20 = sbr.rel (0) target = $region9
    $region8: #{distilbert_for_reranking_forward.2} parent=1 // pred_region
      _
    $region9: #{distilbert_for_reranking_forward.2} parent=1 // pred_fallthru
      _
    // Predicated region
    $region10: #{distilbert_for_reranking_forward.2} parent=1 // pred_check
      _
    $region11: #{distilbert_for_reranking_forward.2} parent=1 // pred_check_branch
      %22 = sbr.rel (0) target = $region13
    $region12: #{distilbert_for_reranking_forward.2} parent=1 // pred_region
      _
    $region13: #{distilbert_for_reranking_forward.2} parent=1 // pred_fallthru
      _
    // Predicated region
    $region14: #{distilbert_for_reranking_forward.2} parent=1 // pred_check
      _
    $region15: #{distilbert_for_reranking_forward.2} parent=1 // pred_check_branch
      %24 = sbr.rel (0) target = $region17
    $region16: #{distilbert_for_reranking_forward.2} parent=1 // pred_region
      _
    $region17: #{distilbert_for_reranking_forward.2} parent=1 // pred_fallthru
      _
    // Predicated region
    $region18: #{distilbert_for_reranking_forward.2} parent=1 // pred_check
      _
    $region19: #{distilbert_for_reranking_forward.2} parent=1 // pred_check_branch
      %26 = sbr.rel (0) target = $region21
    $region20: #{distilbert_for_reranking_forward.2} parent=1 // pred_region
      _
    $region21: #{distilbert_for_reranking_forward.2} parent=1 // pred_fallthru
      _
    // Predicated region
    $region22: #{distilbert_for_reranking_forward.2} parent=1 // pred_check
      _
    $region23: #{distilbert_for_reranking_forward.2} parent=1 // pred_check_branch
      %28 = sbr.rel (0) target = $region25
    $region24: #{distilbert_for_reranking_forward.2} parent=1 // pred_region
      %s30 = ssub.s32 1024, 1024
      %31 = vsyncadd [#allocation4], %s30
      %s32 = sshll.u32 [#allocation3], 4
      %s33 = int_to_ptr.vmem [resolvable:$true] %s32
      %38 = dma.hbm_to_vmem [thread:$0]  %s5, 1024, %s33, [#allocation4], 64, 64, 4
    $region25: #{distilbert_for_reranking_forward.2} parent=1 // pred_fallthru
      _
    // Predicated region
    $region26: #{distilbert_for_reranking_forward.2} parent=1 // pred_check
      _
    $region27: #{distilbert_for_reranking_forward.2} parent=1 // pred_check_branch
      %40 = sbr.rel (0) target = $region29
    $region28: #{distilbert_for_reranking_forward.2} parent=1 // pred_region
      _
    $region29: #{distilbert_for_reranking_forward.2} parent=1 // pred_fallthru
      _
    // Predicated region
    $region30: #{distilbert_for_reranking_forward.2} parent=1 // pred_check
      _
    $region31: #{distilbert_for_reranking_forward.2} parent=1 // pred_check_branch
      %42 = sbr.rel (0) target = $region33
    $region32: #{distilbert_for_reranking_forward.2} parent=1 // pred_region
      %s44 = ssub.s32 2048, 2048
      %45 = vsyncadd [#allocation6], %s44
      %s46 = sshll.u32 [#allocation5], 4
      %s47 = int_to_ptr.vmem [resolvable:$true] %s46
      %52 = dma.hbm_to_vmem [thread:$0]  %s7, 2048, %s47, [#allocation6], 128, 128, 8
    $region33: #{distilbert_for_reranking_forward.2} parent=1 // pred_fallthru
      _
    // Predicated region
    $region34: #{distilbert_for_reranking_forward.2} parent=1 // pred_check
      _
    $region35: #{distilbert_for_reranking_forward.2} parent=1 // pred_check_branch
      %54 = sbr.rel (0) target = $region37
    $region36: #{distilbert_for_reranking_forward.2} parent=1 // pred_region
      _
    $region37: #{distilbert_for_reranking_forward.2} parent=1 // pred_fallthru
      _
    // Predicated region
    $region38: #{distilbert_for_reranking_forward.2} parent=1 // pred_check
      _
    $region39: #{distilbert_for_reranking_forward.2} parent=1 // pred_check_branch
      %56 = sbr.rel (0) target = $region41
    $region40: #{distilbert_for_reranking_forward.2} parent=1 // pred_region
      %s58 = ssub.s32 2048, 2048
      %59 = vsyncadd [#allocation6], %s58
      %s60 = sshll.u32 [#allocation7], 4
      %s61 = int_to_ptr.vmem [resolvable:$true] %s60
      %66 = dma.hbm_to_vmem [thread:$0]  %s9, 2048, %s61, [#allocation6], 64, 64, 4
    $region41: #{distilbert_for_reranking_forward.2} parent=1 // pred_fallthru
      _
    // Predicated region
    $region42: #{distilbert_for_reranking_forward.2} parent=1 // pred_check
      _
    $region43: #{distilbert_for_reranking_forward.2} parent=1 // pred_check_branch
      %68 = sbr.rel (0) target = $region45
    $region44: #{distilbert_for_reranking_forward.2} parent=1 // pred_region
      %69 = dma.done [#allocation4], 1024
    $region45: #{distilbert_for_reranking_forward.2} parent=1 // pred_fallthru
      _
    // Predicated region
    $region46: #{distilbert_for_reranking_forward.2} parent=1 // pred_check
      _
    $region47: #{distilbert_for_reranking_forward.2} parent=1 // pred_check_branch
      %71 = sbr.rel (0) target = $region49
    $region48: #{distilbert_for_reranking_forward.2} parent=1 // pred_region
      %72 = dma.done [#allocation6], 2048
    $region49: #{distilbert_for_reranking_forward.2} parent=1 // pred_fallthru
      _
    // Predicated region
    $region50: #{distilbert_for_reranking_forward.2} parent=1 // pred_check
      _
    $region51: #{distilbert_for_reranking_forward.2} parent=1 // pred_check_branch
      %74 = sbr.rel (0) target = $region53
    $region52: #{distilbert_for_reranking_forward.2} parent=1 // pred_region
      %75 = dma.done [#allocation6], 2048
    $region53: #{distilbert_for_reranking_forward.2} parent=1 // pred_fallthru
      _
    %v77 = vld [vmem:[%s0] sm:$0xff]
    %v78 = vld [vmem:[%s0 + $0x8] sm:$0xff]
    %v79 = vld [vmem:[%s2] sm:$0x3]
    %v80 = vld [vmem:[%s1] sm:$0xff]
    %v81 = vadd.f32 %v77, %v80
    %v82 = vadd.f32 %v78, %v80
    %83 = vadd.xlane.f32.xlu0 %v81
    %v84 = vpop.xlane.xlu0 %83
    %85 = vadd.xlane.f32.xlu0 %v82
    %v86 = vpop.xlane.xlu0 %85
    %v87 = vrcp.pop 128.0
    %v88 = vmul.f32 %v84, %v87
    %v89 = vmul.f32 %v86, %v87
    %v90 = vsub.f32 %v81, %v88
    %v91 = vsub.f32 %v82, %v89
    %v92 = vmul.f32 %v90, %v90
    %v93 = vmul.f32 %v91, %v91
    %94 = vadd.xlane.f32.xlu0 %v92
    %v95 = vpop.xlane.xlu0 %94
    %96 = vadd.xlane.f32.xlu0 %v93
    %v97 = vpop.xlane.xlu0 %96
    %v98 = vmul.f32 %v95, %v87
    %v99 = vmul.f32 %v97, %v87
    %v100 = vadd.f32 %v98, 1e-12
    %v101 = vadd.f32 %v99, 1e-12
    %v102 = vrsqrt.pop %v100
    %v103 = vrsqrt.pop %v101
    %v104 = vmul.f32 %v90, %v102
    %v105 = vmul.f32 %v91, %v103
    %v106 = vlaneseq
    %v107 = vshrl.u32 %v106, 7
    %v108 = vsub.s32 0, %v107
    %v109 = vrot.slane %v79, %v108
    %v110 = vmul.f32 %v104, %v109
    %v111 = vmul.f32 %v105, %v109
    %v112 = vlaneseq
    %v113 = vshrl.u32 %v112, 7
    %v114 = vsub.s32 1, %v113
    %v115 = vrot.slane %v79, %v114
    %v116 = vadd.f32 %v110, %v115
    %v117 = vadd.f32 %v111, %v115
    %v118 = vld [vmem:[%s6] sm:$0xff]
    %v119 = vpack.c.bf16 %v117, %v116
    %v120 = vld [vmem:[%s3] sm:$0xff]
    %v121 = vld [vmem:[%s3 + $0x8] sm:$0xf]
    %v122 = vld [vmem:[%s3 + $0xc] sm:$0xff]
    %v123 = vld [vmem:[%s3 + $0x14] sm:$0xf]
    %v124 = vld [vmem:[%s3 + $0x18] sm:$0xff]
    %v125 = vld [vmem:[%s3 + $0x20] sm:$0xf]
    %v126 = vld [vmem:[%s3 + $0x24] sm:$0xff]
    %v127 = vld [vmem:[%s3 + $0x2c] sm:$0xf]
    %v128 = vld [vmem:[%s3 + $0x30] sm:$0xff]
    %v129 = vld [vmem:[%s3 + $0x38] sm:$0xf]
    %v130 = vld [vmem:[%s3 + $0x3c] sm:$0xff]
    %v131 = vld [vmem:[%s3 + $0x44] sm:$0xf]
    %v132 = vld [vmem:[%s3 + $0x48] sm:$0xff]
    %v133 = vld [vmem:[%s3 + $0x50] sm:$0xf]
    %v134 = vld [vmem:[%s3 + $0x54] sm:$0xff]
    %v135 = vld [vmem:[%s3 + $0x5c] sm:$0xf]
    %v136 = vld [vmem:[%s3 + $0x60] sm:$0xff]
    %v137 = vld [vmem:[%s3 + $0x68] sm:$0xf]
    %v138 = vld [vmem:[%s3 + $0x6c] sm:$0xff]
    %v139 = vld [vmem:[%s3 + $0x74] sm:$0xf]
    %v140 = vld [vmem:[%s3 + $0x78] sm:$0xff]
    %v141 = vld [vmem:[%s3 + $0x80] sm:$0xf]
    %v142 = vld [vmem:[%s3 + $0x84] sm:$0xff]
    %v143 = vld [vmem:[%s3 + $0x8c] sm:$0xf]
    %v144 = vld [vmem:[%s3 + $0x90] sm:$0xff]
    %v145 = vld [vmem:[%s3 + $0x98] sm:$0xf]
    %v146 = vld [vmem:[%s3 + $0x9c] sm:$0xff]
    %v147 = vld [vmem:[%s3 + $0xa4] sm:$0xf]
    %v148 = vld [vmem:[%s3 + $0xa8] sm:$0xff]
    %v149 = vld [vmem:[%s3 + $0xb0] sm:$0xf]
    %v150 = vld [vmem:[%s3 + $0xb4] sm:$0xff]
    %v151 = vld [vmem:[%s3 + $0xbc] sm:$0xf]
    %v152 = vld [vmem:[%s4] sm:$0x7]
    %v154 = vlaneseq
    %v155 = vshrl.u32 %v154, 7
    %v156 = vsub.s32 0, %v155
    %v157 = vrot.slane %v152, %v156
    %v158 = vlaneseq
    %v159 = vshrl.u32 %v158, 7
    %v160 = vsub.s32 1, %v159
    %v161 = vrot.slane %v152, %v160
    %v162 = vlaneseq
    %v163 = vshrl.u32 %v162, 7
    %v164 = vsub.s32 2, %v163
    %v165 = vrot.slane %v152, %v164
    %v201 = vunpack.c.l.b16 %v120
    %v202 = vunpack.c.h.b16 %v120
    %v203 = vunpack.c.l.b16 %v121
    %v204 = vunpack.c.l.b16 %v122
    %v205 = vunpack.c.h.b16 %v122
    %v206 = vunpack.c.l.b16 %v123
    %v207 = vunpack.c.l.b16 %v124
    %v208 = vunpack.c.h.b16 %v124
    %v209 = vunpack.c.l.b16 %v125
    %v210 = vunpack.c.l.b16 %v126
    %v211 = vunpack.c.h.b16 %v126
    %v212 = vunpack.c.l.b16 %v127
    %v213 = vunpack.c.l.b16 %v128
    %v214 = vunpack.c.h.b16 %v128
    %v215 = vunpack.c.l.b16 %v129
    %v216 = vunpack.c.l.b16 %v130
    %v217 = vunpack.c.h.b16 %v130
    %v218 = vunpack.c.l.b16 %v131
    %v219 = vunpack.c.l.b16 %v132
    %v220 = vunpack.c.h.b16 %v132
    %v221 = vunpack.c.l.b16 %v133
    %v222 = vunpack.c.l.b16 %v134
    %v223 = vunpack.c.h.b16 %v134
    %v224 = vunpack.c.l.b16 %v135
    %v225 = vunpack.c.l.b16 %v136
    %v226 = vunpack.c.h.b16 %v136
    %v227 = vunpack.c.l.b16 %v137
    %v228 = vunpack.c.l.b16 %v138
    %v229 = vunpack.c.h.b16 %v138
    %v230 = vunpack.c.l.b16 %v139
    %v231 = vunpack.c.l.b16 %v140
    %v232 = vunpack.c.h.b16 %v140
    %v233 = vunpack.c.l.b16 %v141
    %v234 = vunpack.c.l.b16 %v142
    %v235 = vunpack.c.h.b16 %v142
    %v236 = vunpack.c.l.b16 %v143
    %v237 = vunpack.c.l.b16 %v144
    %v238 = vunpack.c.h.b16 %v144
    %v239 = vunpack.c.l.b16 %v145
    %v240 = vunpack.c.l.b16 %v146
    %v241 = vunpack.c.h.b16 %v146
    %v242 = vunpack.c.l.b16 %v147
    %v243 = vunpack.c.l.b16 %v148
    %v244 = vunpack.c.h.b16 %v148
    %v245 = vunpack.c.l.b16 %v149
    %v246 = vunpack.c.l.b16 %v150
    %v247 = vunpack.c.h.b16 %v150
    %v248 = vunpack.c.l.b16 %v151
    %v249 = vpack.c.b16 %v204, %v201
    %v250 = vpack.c.b16 %v205, %v202
    %v251 = vpack.c.b16 %v206, %v203
    %v252 = vpack.c.b16 %v210, %v207
    %v253 = vpack.c.b16 %v211, %v208
    %v254 = vpack.c.b16 %v212, %v209
    %v255 = vpack.c.b16 %v216, %v213
    %v256 = vpack.c.b16 %v217, %v214
    %v257 = vpack.c.b16 %v218, %v215
    %v258 = vpack.c.b16 %v222, %v219
    %v259 = vpack.c.b16 %v223, %v220
    %v260 = vpack.c.b16 %v224, %v221
    %v261 = vpack.c.b16 %v228, %v225
    %v262 = vpack.c.b16 %v229, %v226
    %v263 = vpack.c.b16 %v230, %v227
    %v264 = vpack.c.b16 %v234, %v231
    %v265 = vpack.c.b16 %v235, %v232
    %v266 = vpack.c.b16 %v236, %v233
    %v267 = vpack.c.b16 %v240, %v237
    %v268 = vpack.c.b16 %v241, %v238
    %v269 = vpack.c.b16 %v242, %v239
    %v270 = vpack.c.b16 %v246, %v243
    %v271 = vpack.c.b16 %v247, %v244
    %v272 = vpack.c.b16 %v248, %v245
    %297 = vmatprep.subr.bf16.mxu0 %v250
    %298 = vmatpush1.bf16.msra.mxu0 %v249
    %299 = vmatprep.subr.bf16.mxu0 %v253
    %300 = vmatpush1.bf16.msra.mxu0 %v252
    %301 = vmatprep.subr.bf16.mxu0 %v256
    %302 = vmatpush1.bf16.msra.mxu0 %v255
    %303 = vmatprep.subr.bf16.mxu0 %v259
    %304 = vmatpush1.bf16.msra.mxu0 %v258
    %305 = vmatprep.subr.bf16.mxu0 %v262
    %306 = vmatpush1.bf16.msra.mxu0 %v261
    %307 = vmatprep.subr.bf16.mxu0 %v265
    %308 = vmatpush1.bf16.msra.mxu0 %v264
    %309 = vmatprep.subr.bf16.mxu0 %v268
    %310 = vmatpush1.bf16.msra.mxu0 %v267
    %311 = vmatprep.subr.bf16.mxu0 %v271
    %312 = vmatpush1.bf16.msra.mxu0 %v270
    %313 = vmatprep.subr.bf16.mxu0 0
    %314 = vmatpush1.bf16.msra.mxu0 0
    %315 = vmatprep.subr.bf16.mxu0 0
    %316 = vmatpush1.bf16.msra.mxu0 0
    %317 = vmatprep.subr.bf16.mxu0 0
    %318 = vmatpush1.bf16.msra.mxu0 0
    %319 = vmatprep.subr.bf16.mxu0 0
    %320 = vmatpush1.bf16.msra.mxu0 0
    %321 = vmatprep.subr.bf16.mxu0 0
    %322 = vmatpush1.bf16.msra.mxu0 0
    %323 = vmatprep.subr.bf16.mxu0 0
    %324 = vmatpush1.bf16.msra.mxu0 0
    %325 = vmatprep.subr.bf16.mxu0 0
    %326 = vmatpush1.bf16.msra.mxu0 0
    %327 = vmatprep.subr.bf16.mxu0 0
    %328 = vmatpush1.bf16.msra.mxu0 0
    %329 = vmatprep.mubr.bf16.mxu0 0
    %330 = vmatmul.mubr.bf16.gmra.mrb[0].mxu0 %v119
    %v331 = vpop.f32.mrb[0].mxu0
    %v332 = vadd.f32 %v157, %v331
    %v333 = vpop.f32.mrb[0].mxu0
    %v334 = vadd.f32 %v161, %v333
    %v335 = vpop.f32.mrb[0].mxu0
    %v336 = vadd.f32 %v157, %v335
    %v337 = vpop.f32.mrb[0].mxu0
    %v338 = vadd.f32 %v161, %v337
    %339 = vdwg.mxu0
    %340 = vmatprep.subr.bf16.mxu0 0
    %341 = vmatpush1.bf16.msra.mxu0 %v251
    %342 = vmatprep.subr.bf16.mxu0 0
    %343 = vmatpush1.bf16.msra.mxu0 %v254
    %344 = vmatprep.subr.bf16.mxu0 0
    %345 = vmatpush1.bf16.msra.mxu0 %v257
    %346 = vmatprep.subr.bf16.mxu0 0
    %347 = vmatpush1.bf16.msra.mxu0 %v260
    %348 = vmatprep.subr.bf16.mxu0 0
    %349 = vmatpush1.bf16.msra.mxu0 %v263
    %350 = vmatprep.subr.bf16.mxu0 0
    %351 = vmatpush1.bf16.msra.mxu0 %v266
    %352 = vmatprep.subr.bf16.mxu0 0
    %353 = vmatpush1.bf16.msra.mxu0 %v269
    %354 = vmatprep.subr.bf16.mxu0 0
    %355 = vmatpush1.bf16.msra.mxu0 %v272
    %356 = vmatprep.subr.bf16.mxu0 0
    %357 = vmatpush1.bf16.msra.mxu0 0
    %358 = vmatprep.subr.bf16.mxu0 0
    %359 = vmatpush1.bf16.msra.mxu0 0
    %360 = vmatprep.subr.bf16.mxu0 0
    %361 = vmatpush1.bf16.msra.mxu0 0
    %362 = vmatprep.subr.bf16.mxu0 0
    %363 = vmatpush1.bf16.msra.mxu0 0
    %364 = vmatprep.subr.bf16.mxu0 0
    %365 = vmatpush1.bf16.msra.mxu0 0
    %366 = vmatprep.subr.bf16.mxu0 0
    %367 = vmatpush1.bf16.msra.mxu0 0
    %368 = vmatprep.subr.bf16.mxu0 0
    %369 = vmatpush1.bf16.msra.mxu0 0
    %370 = vmatprep.subr.bf16.mxu0 0
    %371 = vmatpush1.bf16.msra.mxu0 0
    %372 = vmatprep.mubr.bf16.mxu0 0
    %373 = vmatmul.mubr.bf16.gmra.mrb[0].mxu0 %v119
    %v374 = vpop.f32.mrb[0].mxu0
    %v375 = vadd.f32 %v165, %v374
    %v376 = vpop.f32.mrb[0].mxu0
    %v377 = vpop.f32.mrb[0].mxu0
    %v378 = vadd.f32 %v165, %v377
    %v379 = vpop.f32.mrb[0].mxu0
    %380 = vdwg.mxu0
    %v381 = vpack.c.bf16 %v332, %v332
    %v382 = vpack.c.bf16 %v336, %v336
    %v383 = vpack.c.bf16 %v334, %v334
    %v384 = vpack.c.bf16 %v338, %v338
    %v385 = vpack.c.bf16 %v375, %v375
    %v386 = vpack.c.bf16 %v378, %v378
    %vm387 = vcmask 261120
    %v389 = vsel %vm387, %v381, 0
    %v392 = vsel %vm387, %v383, 0
    %394 = vmatprep.subr.bf16.mxu0 0
    %395 = vmatpush1.bf16.xpose.msra.mxu0 %v392
    %396 = vmatprep.subr.bf16.mxu0 0
    %397 = vmatpush1.bf16.xpose.msra.mxu0 0
    %398 = vmatprep.subr.bf16.mxu0 0
    %399 = vmatpush1.bf16.xpose.msra.mxu0 0
    %400 = vmatprep.subr.bf16.mxu0 0
    %401 = vmatpush1.bf16.xpose.msra.mxu0 0
    %402 = vmatprep.subr.bf16.mxu0 0
    %403 = vmatpush1.bf16.xpose.msra.mxu0 0
    %404 = vmatprep.subr.bf16.mxu0 0
    %405 = vmatpush1.bf16.xpose.msra.mxu0 0
    %406 = vmatprep.subr.bf16.mxu0 0
    %407 = vmatpush1.bf16.xpose.msra.mxu0 0
    %408 = vmatprep.subr.bf16.mxu0 0
    %409 = vmatpush1.bf16.xpose.msra.mxu0 0
    %410 = vmatprep.subr.bf16.mxu0 0
    %411 = vmatpush1.bf16.xpose.msra.mxu0 0
    %412 = vmatprep.subr.bf16.mxu0 0
    %413 = vmatpush1.bf16.xpose.msra.mxu0 0
    %414 = vmatprep.subr.bf16.mxu0 0
    %415 = vmatpush1.bf16.xpose.msra.mxu0 0
    %416 = vmatprep.subr.bf16.mxu0 0
    %417 = vmatpush1.bf16.xpose.msra.mxu0 0
    %418 = vmatprep.subr.bf16.mxu0 0
    %419 = vmatpush1.bf16.xpose.msra.mxu0 0
    %420 = vmatprep.subr.bf16.mxu0 0
    %421 = vmatpush1.bf16.xpose.msra.mxu0 0
    %422 = vmatprep.subr.bf16.mxu0 0
    %423 = vmatpush1.bf16.xpose.msra.mxu0 0
    %424 = vmatprep.subr.bf16.mxu0 0
    %425 = vmatpush1.bf16.xpose.msra.mxu0 0
    %426 = vmatprep.mubr.bf16.mxu0 0
    %427 = vmatmul.mubr.bf16.gmra.mrb[0].mxu0 %v389
    %v428 = vpop.f32.mrb[0].mxu0
    %v429 = vadd.f32 0.0, %v428
    %v430 = vpop.f32.mrb[0].mxu0
    %v431 = vpop.f32.mrb[0].mxu0
    %v432 = vpop.f32.mrb[0].mxu0
    %433 = vdwg.mxu0
    %v435 = vsel %vm387, %v382, 0
    %v438 = vsel %vm387, %v384, 0
    %440 = vmatprep.subr.bf16.mxu0 0
    %441 = vmatpush1.bf16.xpose.msra.mxu0 %v438
    %442 = vmatprep.subr.bf16.mxu0 0
    %443 = vmatpush1.bf16.xpose.msra.mxu0 0
    %444 = vmatprep.subr.bf16.mxu0 0
    %445 = vmatpush1.bf16.xpose.msra.mxu0 0
    %446 = vmatprep.subr.bf16.mxu0 0
    %447 = vmatpush1.bf16.xpose.msra.mxu0 0
    %448 = vmatprep.subr.bf16.mxu0 0
    %449 = vmatpush1.bf16.xpose.msra.mxu0 0
    %450 = vmatprep.subr.bf16.mxu0 0
    %451 = vmatpush1.bf16.xpose.msra.mxu0 0
    %452 = vmatprep.subr.bf16.mxu0 0
    %453 = vmatpush1.bf16.xpose.msra.mxu0 0
    %454 = vmatprep.subr.bf16.mxu0 0
    %455 = vmatpush1.bf16.xpose.msra.mxu0 0
    %456 = vmatprep.subr.bf16.mxu0 0
    %457 = vmatpush1.bf16.xpose.msra.mxu0 0
    %458 = vmatprep.subr.bf16.mxu0 0
    %459 = vmatpush1.bf16.xpose.msra.mxu0 0
    %460 = vmatprep.subr.bf16.mxu0 0
    %461 = vmatpush1.bf16.xpose.msra.mxu0 0
    %462 = vmatprep.subr.bf16.mxu0 0
    %463 = vmatpush1.bf16.xpose.msra.mxu0 0
    %464 = vmatprep.subr.bf16.mxu0 0
    %465 = vmatpush1.bf16.xpose.msra.mxu0 0
    %466 = vmatprep.subr.bf16.mxu0 0
    %467 = vmatpush1.bf16.xpose.msra.mxu0 0
    %468 = vmatprep.subr.bf16.mxu0 0
    %469 = vmatpush1.bf16.xpose.msra.mxu0 0
    %470 = vmatprep.subr.bf16.mxu0 0
    %471 = vmatpush1.bf16.xpose.msra.mxu0 0
    %472 = vmatprep.mubr.bf16.mxu0 0
    %473 = vmatmul.mubr.bf16.gmra.mrb[0].mxu0 %v435
    %v474 = vpop.f32.mrb[0].mxu0
    %v475 = vadd.f32 0.0, %v474
    %v476 = vpop.f32.mrb[0].mxu0
    %v477 = vpop.f32.mrb[0].mxu0
    %v478 = vpop.f32.mrb[0].mxu0
    %479 = vdwg.mxu0
    %v480 = vmul.f32 %v429, 0.17677669
    %v481 = vmul.f32 %v475, 0.17677669
    %vm482 = vcmask 64512
    %v483 = vsel %vm482, %v480, -inf
    %484 = vmax.xlane.f32.xlu0 %v483
    %v485 = vpop.xlane.xlu0 %484
    %v486 = vsel %vm482, %v481, -inf
    %487 = vmax.xlane.f32.xlu0 %v486
    %v488 = vpop.xlane.xlu0 %487
    %v489 = vsub.f32 %v480, %v485
    %v490 = vsub.f32 %v481, %v488
    %v491 = vmul.f32 %v489, 1.442695
    %v492 = vpow.pop %v491
    %v493 = vmul.f32 %v490, 1.442695
    %v494 = vpow.pop %v493
    %v495 = vsel %vm482, %v492, 0.0
    %496 = vadd.xlane.f32.xlu0 %v495
    %v497 = vpop.xlane.xlu0 %496
    %v498 = vsel %vm482, %v494, 0.0
    %499 = vadd.xlane.f32.xlu0 %v498
    %v500 = vpop.xlane.xlu0 %499
    %v501 = vrcp.pop %v497
    %v502 = vrcp.pop %v500
    %v503 = vmul.f32 %v492, %v501
    %v504 = vmul.f32 %v494, %v502
    %v505 = vpack.c.bf16 %v503, %v503
    %v506 = vpack.c.bf16 %v504, %v504
    %v508 = vsel %vm482, %v505, 0
    %vm510 = vcmask 1043456
    %v512 = vsel %vm510, %v385, 0
    %514 = vmatprep.subr.bf16.mxu0 0
    %515 = vmatpush1.bf16.msra.mxu0 %v512
    %516 = vmatprep.subr.bf16.mxu0 0
    %517 = vmatpush1.bf16.msra.mxu0 0
    %518 = vmatprep.subr.bf16.mxu0 0
    %519 = vmatpush1.bf16.msra.mxu0 0
    %520 = vmatprep.subr.bf16.mxu0 0
    %521 = vmatpush1.bf16.msra.mxu0 0
    %522 = vmatprep.subr.bf16.mxu0 0
    %523 = vmatpush1.bf16.msra.mxu0 0
    %524 = vmatprep.subr.bf16.mxu0 0
    %525 = vmatpush1.bf16.msra.mxu0 0
    %526 = vmatprep.subr.bf16.mxu0 0
    %527 = vmatpush1.bf16.msra.mxu0 0
    %528 = vmatprep.subr.bf16.mxu0 0
    %529 = vmatpush1.bf16.msra.mxu0 0
    %530 = vmatprep.subr.bf16.mxu0 0
    %531 = vmatpush1.bf16.msra.mxu0 0
    %532 = vmatprep.subr.bf16.mxu0 0
    %533 = vmatpush1.bf16.msra.mxu0 0
    %534 = vmatprep.subr.bf16.mxu0 0
    %535 = vmatpush1.bf16.msra.mxu0 0
    %536 = vmatprep.subr.bf16.mxu0 0
    %537 = vmatpush1.bf16.msra.mxu0 0
    %538 = vmatprep.subr.bf16.mxu0 0
    %539 = vmatpush1.bf16.msra.mxu0 0
    %540 = vmatprep.subr.bf16.mxu0 0
    %541 = vmatpush1.bf16.msra.mxu0 0
    %542 = vmatprep.subr.bf16.mxu0 0
    %543 = vmatpush1.bf16.msra.mxu0 0
    %544 = vmatprep.subr.bf16.mxu0 0
    %545 = vmatpush1.bf16.msra.mxu0 0
    %546 = vmatprep.mubr.bf16.mxu0 0
    %547 = vmatmul.mubr.bf16.gmra.mrb[0].mxu0 %v508
    %v548 = vpop.f32.mrb[0].mxu0
    %v549 = vadd.f32 0.0, %v548
    %v550 = vpop.f32.mrb[0].mxu0
    %v551 = vpop.f32.mrb[0].mxu0
    %v552 = vpop.f32.mrb[0].mxu0
    %553 = vdwg.mxu0
    %v555 = vsel %vm482, %v506, 0
    %v558 = vsel %vm510, %v386, 0
    %560 = vmatprep.subr.bf16.mxu0 0
    %561 = vmatpush1.bf16.msra.mxu0 %v558
    %562 = vmatprep.subr.bf16.mxu0 0
    %563 = vmatpush1.bf16.msra.mxu0 0
    %564 = vmatprep.subr.bf16.mxu0 0
    %565 = vmatpush1.bf16.msra.mxu0 0
    %566 = vmatprep.subr.bf16.mxu0 0
    %567 = vmatpush1.bf16.msra.mxu0 0
    %568 = vmatprep.subr.bf16.mxu0 0
    %569 = vmatpush1.bf16.msra.mxu0 0
    %570 = vmatprep.subr.bf16.mxu0 0
    %571 = vmatpush1.bf16.msra.mxu0 0
    %572 = vmatprep.subr.bf16.mxu0 0
    %573 = vmatpush1.bf16.msra.mxu0 0
    %574 = vmatprep.subr.bf16.mxu0 0
    %575 = vmatpush1.bf16.msra.mxu0 0
    %576 = vmatprep.subr.bf16.mxu0 0
    %577 = vmatpush1.bf16.msra.mxu0 0
    %578 = vmatprep.subr.bf16.mxu0 0
    %579 = vmatpush1.bf16.msra.mxu0 0
    %580 = vmatprep.subr.bf16.mxu0 0
    %581 = vmatpush1.bf16.msra.mxu0 0
    %582 = vmatprep.subr.bf16.mxu0 0
    %583 = vmatpush1.bf16.msra.mxu0 0
    %584 = vmatprep.subr.bf16.mxu0 0
    %585 = vmatpush1.bf16.msra.mxu0 0
    %586 = vmatprep.subr.bf16.mxu0 0
    %587 = vmatpush1.bf16.msra.mxu0 0
    %588 = vmatprep.subr.bf16.mxu0 0
    %589 = vmatpush1.bf16.msra.mxu0 0
    %590 = vmatprep.subr.bf16.mxu0 0
    %591 = vmatpush1.bf16.msra.mxu0 0
    %592 = vmatprep.mubr.bf16.mxu0 0
    %593 = vmatmul.mubr.bf16.gmra.mrb[0].mxu0 %v555
    %v594 = vpop.f32.mrb[0].mxu0
    %v595 = vadd.f32 0.0, %v594
    %v596 = vpop.f32.mrb[0].mxu0
    %v597 = vpop.f32.mrb[0].mxu0
    %v598 = vpop.f32.mrb[0].mxu0
    %599 = vdwg.mxu0
    %600 = vst.msk [vmem:[#allocation2] sm:$0xff] %vm387, %v549
    %601 = vst.msk [vmem:[#allocation2 + $0x8] sm:$0xff] %vm387, %v595
    %603 = vrot.lane.b32.xlu0 %v381, 96
    %v604 = vpop.permute.xlu0 %603
    %606 = vrot.lane.b32.xlu0 %v383, 96
    %v607 = vpop.permute.xlu0 %606
    %v609 = vsel %vm387, %v604, 0
    %v612 = vsel %vm387, %v607, 0
    %614 = vmatprep.subr.bf16.mxu0 0
    %615 = vmatpush1.bf16.xpose.msra.mxu0 %v612
    %616 = vmatprep.subr.bf16.mxu0 0
    %617 = vmatpush1.bf16.xpose.msra.mxu0 0
    %618 = vmatprep.subr.bf16.mxu0 0
    %619 = vmatpush1.bf16.xpose.msra.mxu0 0
    %620 = vmatprep.subr.bf16.mxu0 0
    %621 = vmatpush1.bf16.xpose.msra.mxu0 0
    %622 = vmatprep.subr.bf16.mxu0 0
    %623 = vmatpush1.bf16.xpose.msra.mxu0 0
    %624 = vmatprep.subr.bf16.mxu0 0
    %625 = vmatpush1.bf16.xpose.msra.mxu0 0
    %626 = vmatprep.subr.bf16.mxu0 0
    %627 = vmatpush1.bf16.xpose.msra.mxu0 0
    %628 = vmatprep.subr.bf16.mxu0 0
    %629 = vmatpush1.bf16.xpose.msra.mxu0 0
    %630 = vmatprep.subr.bf16.mxu0 0
    %631 = vmatpush1.bf16.xpose.msra.mxu0 0
    %632 = vmatprep.subr.bf16.mxu0 0
    %633 = vmatpush1.bf16.xpose.msra.mxu0 0
    %634 = vmatprep.subr.bf16.mxu0 0
    %635 = vmatpush1.bf16.xpose.msra.mxu0 0
    %636 = vmatprep.subr.bf16.mxu0 0
    %637 = vmatpush1.bf16.xpose.msra.mxu0 0
    %638 = vmatprep.subr.bf16.mxu0 0
    %639 = vmatpush1.bf16.xpose.msra.mxu0 0
    %640 = vmatprep.subr.bf16.mxu0 0
    %641 = vmatpush1.bf16.xpose.msra.mxu0 0
    %642 = vmatprep.subr.bf16.mxu0 0
    %643 = vmatpush1.bf16.xpose.msra.mxu0 0
    %644 = vmatprep.subr.bf16.mxu0 0
    %645 = vmatpush1.bf16.xpose.msra.mxu0 0
    %646 = vmatprep.mubr.bf16.mxu0 0
    %647 = vmatmul.mubr.bf16.gmra.mrb[0].mxu0 %v609
    %v648 = vpop.f32.mrb[0].mxu0
    %v649 = vadd.f32 0.0, %v648
    %v650 = vpop.f32.mrb[0].mxu0
    %v651 = vpop.f32.mrb[0].mxu0
    %v652 = vpop.f32.mrb[0].mxu0
    %653 = vdwg.mxu0
    %655 = vrot.lane.b32.xlu0 %v382, 96
    %v656 = vpop.permute.xlu0 %655
    %658 = vrot.lane.b32.xlu0 %v384, 96
    %v659 = vpop.permute.xlu0 %658
    %v661 = vsel %vm387, %v656, 0
    %v664 = vsel %vm387, %v659, 0
    %666 = vmatprep.subr.bf16.mxu0 0
    %667 = vmatpush1.bf16.xpose.msra.mxu0 %v664
    %668 = vmatprep.subr.bf16.mxu0 0
    %669 = vmatpush1.bf16.xpose.msra.mxu0 0
    %670 = vmatprep.subr.bf16.mxu0 0
    %671 = vmatpush1.bf16.xpose.msra.mxu0 0
    %672 = vmatprep.subr.bf16.mxu0 0
    %673 = vmatpush1.bf16.xpose.msra.mxu0 0
    %674 = vmatprep.subr.bf16.mxu0 0
    %675 = vmatpush1.bf16.xpose.msra.mxu0 0
    %676 = vmatprep.subr.bf16.mxu0 0
    %677 = vmatpush1.bf16.xpose.msra.mxu0 0
    %678 = vmatprep.subr.bf16.mxu0 0
    %679 = vmatpush1.bf16.xpose.msra.mxu0 0
    %680 = vmatprep.subr.bf16.mxu0 0
    %681 = vmatpush1.bf16.xpose.msra.mxu0 0
    %682 = vmatprep.subr.bf16.mxu0 0
    %683 = vmatpush1.bf16.xpose.msra.mxu0 0
    %684 = vmatprep.subr.bf16.mxu0 0
    %685 = vmatpush1.bf16.xpose.msra.mxu0 0
    %686 = vmatprep.subr.bf16.mxu0 0
    %687 = vmatpush1.bf16.xpose.msra.mxu0 0
    %688 = vmatprep.subr.bf16.mxu0 0
    %689 = vmatpush1.bf16.xpose.msra.mxu0 0
    %690 = vmatprep.subr.bf16.mxu0 0
    %691 = vmatpush1.bf16.xpose.msra.mxu0 0
    %692 = vmatprep.subr.bf16.mxu0 0
    %693 = vmatpush1.bf16.xpose.msra.mxu0 0
    %694 = vmatprep.subr.bf16.mxu0 0
    %695 = vmatpush1.bf16.xpose.msra.mxu0 0
    %696 = vmatprep.subr.bf16.mxu0 0
    %697 = vmatpush1.bf16.xpose.msra.mxu0 0
    %698 = vmatprep.mubr.bf16.mxu0 0
    %699 = vmatmul.mubr.bf16.gmra.mrb[0].mxu0 %v661
    %v700 = vpop.f32.mrb[0].mxu0
    %v701 = vadd.f32 0.0, %v700
    %v702 = vpop.f32.mrb[0].mxu0
    %v703 = vpop.f32.mrb[0].mxu0
    %v704 = vpop.f32.mrb[0].mxu0
    %705 = vdwg.mxu0
    %v706 = vmul.f32 %v649, 0.17677669
    %v707 = vmul.f32 %v701, 0.17677669
    %v708 = vsel %vm482, %v706, -inf
    %709 = vmax.xlane.f32.xlu0 %v708
    %v710 = vpop.xlane.xlu0 %709
    %v711 = vsel %vm482, %v707, -inf
    %712 = vmax.xlane.f32.xlu0 %v711
    %v713 = vpop.xlane.xlu0 %712
    %v714 = vsub.f32 %v706, %v710
    %v715 = vsub.f32 %v707, %v713
    %v716 = vmul.f32 %v714, 1.442695
    %v717 = vpow.pop %v716
    %v718 = vmul.f32 %v715, 1.442695
    %v719 = vpow.pop %v718
    %v720 = vsel %vm482, %v717, 0.0
    %721 = vadd.xlane.f32.xlu0 %v720
    %v722 = vpop.xlane.xlu0 %721
    %v723 = vsel %vm482, %v719, 0.0
    %724 = vadd.xlane.f32.xlu0 %v723
    %v725 = vpop.xlane.xlu0 %724
    %v726 = vrcp.pop %v722
    %v727 = vrcp.pop %v725
    %v728 = vmul.f32 %v717, %v726
    %v729 = vmul.f32 %v719, %v727
    %v730 = vpack.c.bf16 %v728, %v728
    %v731 = vpack.c.bf16 %v729, %v729
    %733 = vrot.lane.b32.xlu0 %v385, 96
    %v734 = vpop.permute.xlu0 %733
    %v736 = vsel %vm482, %v730, 0
    %v739 = vsel %vm510, %v734, 0
    %741 = vmatprep.subr.bf16.mxu0 0
    %742 = vmatpush1.bf16.msra.mxu0 %v739
    %743 = vmatprep.subr.bf16.mxu0 0
    %744 = vmatpush1.bf16.msra.mxu0 0
    %745 = vmatprep.subr.bf16.mxu0 0
    %746 = vmatpush1.bf16.msra.mxu0 0
    %747 = vmatprep.subr.bf16.mxu0 0
    %748 = vmatpush1.bf16.msra.mxu0 0
    %749 = vmatprep.subr.bf16.mxu0 0
    %750 = vmatpush1.bf16.msra.mxu0 0
    %751 = vmatprep.subr.bf16.mxu0 0
    %752 = vmatpush1.bf16.msra.mxu0 0
    %753 = vmatprep.subr.bf16.mxu0 0
    %754 = vmatpush1.bf16.msra.mxu0 0
    %755 = vmatprep.subr.bf16.mxu0 0
    %756 = vmatpush1.bf16.msra.mxu0 0
    %757 = vmatprep.subr.bf16.mxu0 0
    %758 = vmatpush1.bf16.msra.mxu0 0
    %759 = vmatprep.subr.bf16.mxu0 0
    %760 = vmatpush1.bf16.msra.mxu0 0
    %761 = vmatprep.subr.bf16.mxu0 0
    %762 = vmatpush1.bf16.msra.mxu0 0
    %763 = vmatprep.subr.bf16.mxu0 0
    %764 = vmatpush1.bf16.msra.mxu0 0
    %765 = vmatprep.subr.bf16.mxu0 0
    %766 = vmatpush1.bf16.msra.mxu0 0
    %767 = vmatprep.subr.bf16.mxu0 0
    %768 = vmatpush1.bf16.msra.mxu0 0
    %769 = vmatprep.subr.bf16.mxu0 0
    %770 = vmatpush1.bf16.msra.mxu0 0
    %771 = vmatprep.subr.bf16.mxu0 0
    %772 = vmatpush1.bf16.msra.mxu0 0
    %773 = vmatprep.mubr.bf16.mxu0 0
    %774 = vmatmul.mubr.bf16.gmra.mrb[0].mxu0 %v736
    %v775 = vpop.f32.mrb[0].mxu0
    %v776 = vadd.f32 0.0, %v775
    %v777 = vpop.f32.mrb[0].mxu0
    %v778 = vpop.f32.mrb[0].mxu0
    %v779 = vpop.f32.mrb[0].mxu0
    %780 = vdwg.mxu0
    %782 = vrot.lane.b32.xlu0 %v386, 96
    %v783 = vpop.permute.xlu0 %782
    %v785 = vsel %vm482, %v731, 0
    %v788 = vsel %vm510, %v783, 0
    %790 = vmatprep.subr.bf16.mxu0 0
    %791 = vmatpush1.bf16.msra.mxu0 %v788
    %792 = vmatprep.subr.bf16.mxu0 0
    %793 = vmatpush1.bf16.msra.mxu0 0
    %794 = vmatprep.subr.bf16.mxu0 0
    %795 = vmatpush1.bf16.msra.mxu0 0
    %796 = vmatprep.subr.bf16.mxu0 0
    %797 = vmatpush1.bf16.msra.mxu0 0
    %798 = vmatprep.subr.bf16.mxu0 0
    %799 = vmatpush1.bf16.msra.mxu0 0
    %800 = vmatprep.subr.bf16.mxu0 0
    %801 = vmatpush1.bf16.msra.mxu0 0
    %802 = vmatprep.subr.bf16.mxu0 0
    %803 = vmatpush1.bf16.msra.mxu0 0
    %804 = vmatprep.subr.bf16.mxu0 0
    %805 = vmatpush1.bf16.msra.mxu0 0
    %806 = vmatprep.subr.bf16.mxu0 0
    %807 = vmatpush1.bf16.msra.mxu0 0
    %808 = vmatprep.subr.bf16.mxu0 0
    %809 = vmatpush1.bf16.msra.mxu0 0
    %810 = vmatprep.subr.bf16.mxu0 0
    %811 = vmatpush1.bf16.msra.mxu0 0
    %812 = vmatprep.subr.bf16.mxu0 0
    %813 = vmatpush1.bf16.msra.mxu0 0
    %814 = vmatprep.subr.bf16.mxu0 0
    %815 = vmatpush1.bf16.msra.mxu0 0
    %816 = vmatprep.subr.bf16.mxu0 0
    %817 = vmatpush1.bf16.msra.mxu0 0
    %818 = vmatprep.subr.bf16.mxu0 0
    %819 = vmatpush1.bf16.msra.mxu0 0
    %820 = vmatprep.subr.bf16.mxu0 0
    %821 = vmatpush1.bf16.msra.mxu0 0
    %822 = vmatprep.mubr.bf16.mxu0 0
    %823 = vmatmul.mubr.bf16.gmra.mrb[0].mxu0 %v785
    %v824 = vpop.f32.mrb[0].mxu0
    %v825 = vadd.f32 0.0, %v824
    %v826 = vpop.f32.mrb[0].mxu0
    %v827 = vpop.f32.mrb[0].mxu0
    %v828 = vpop.f32.mrb[0].mxu0
    %829 = vdwg.mxu0
    %832 = vrot.lane.b32.xlu0 %v776, 32
    %v833 = vpop.permute.xlu0 %832
    %834 = vrot.lane.b32.xlu0 %v825, 32
    %v835 = vpop.permute.xlu0 %834
    %vm838 = vcmask 523520
    %839 = vst.msk [vmem:[#allocation2] sm:$0xff] %vm838, %v833
    %840 = vst.msk [vmem:[#allocation2 + $0x8] sm:$0xff] %vm838, %v835
    %841 = vrot.lane.b32.xlu0 %v381, 64
    %v842 = vpop.permute.xlu0 %841
    %843 = vrot.lane.b32.xlu0 %v383, 64
    %v844 = vpop.permute.xlu0 %843
    %v846 = vsel %vm387, %v842, 0
    %v849 = vsel %vm387, %v844, 0
    %851 = vmatprep.subr.bf16.mxu0 0
    %852 = vmatpush1.bf16.xpose.msra.mxu0 %v849
    %853 = vmatprep.subr.bf16.mxu0 0
    %854 = vmatpush1.bf16.xpose.msra.mxu0 0
    %855 = vmatprep.subr.bf16.mxu0 0
    %856 = vmatpush1.bf16.xpose.msra.mxu0 0
    %857 = vmatprep.subr.bf16.mxu0 0
    %858 = vmatpush1.bf16.xpose.msra.mxu0 0
    %859 = vmatprep.subr.bf16.mxu0 0
    %860 = vmatpush1.bf16.xpose.msra.mxu0 0
    %861 = vmatprep.subr.bf16.mxu0 0
    %862 = vmatpush1.bf16.xpose.msra.mxu0 0
    %863 = vmatprep.subr.bf16.mxu0 0
    %864 = vmatpush1.bf16.xpose.msra.mxu0 0
    %865 = vmatprep.subr.bf16.mxu0 0
    %866 = vmatpush1.bf16.xpose.msra.mxu0 0
    %867 = vmatprep.subr.bf16.mxu0 0
    %868 = vmatpush1.bf16.xpose.msra.mxu0 0
    %869 = vmatprep.subr.bf16.mxu0 0
    %870 = vmatpush1.bf16.xpose.msra.mxu0 0
    %871 = vmatprep.subr.bf16.mxu0 0
    %872 = vmatpush1.bf16.xpose.msra.mxu0 0
    %873 = vmatprep.subr.bf16.mxu0 0
    %874 = vmatpush1.bf16.xpose.msra.mxu0 0
    %875 = vmatprep.subr.bf16.mxu0 0
    %876 = vmatpush1.bf16.xpose.msra.mxu0 0
    %877 = vmatprep.subr.bf16.mxu0 0
    %878 = vmatpush1.bf16.xpose.msra.mxu0 0
    %879 = vmatprep.subr.bf16.mxu0 0
    %880 = vmatpush1.bf16.xpose.msra.mxu0 0
    %881 = vmatprep.subr.bf16.mxu0 0
    %882 = vmatpush1.bf16.xpose.msra.mxu0 0
    %883 = vmatprep.mubr.bf16.mxu0 0
    %884 = vmatmul.mubr.bf16.gmra.mrb[0].mxu0 %v846
    %v885 = vpop.f32.mrb[0].mxu0
    %v886 = vadd.f32 0.0, %v885
    %v887 = vpop.f32.mrb[0].mxu0
    %v888 = vpop.f32.mrb[0].mxu0
    %v889 = vpop.f32.mrb[0].mxu0
    %890 = vdwg.mxu0
    %891 = vrot.lane.b32.xlu0 %v382, 64
    %v892 = vpop.permute.xlu0 %891
    %893 = vrot.lane.b32.xlu0 %v384, 64
    %v894 = vpop.permute.xlu0 %893
    %v896 = vsel %vm387, %v892, 0
    %v899 = vsel %vm387, %v894, 0
    %901 = vmatprep.subr.bf16.mxu0 0
    %902 = vmatpush1.bf16.xpose.msra.mxu0 %v899
    %903 = vmatprep.subr.bf16.mxu0 0
    %904 = vmatpush1.bf16.xpose.msra.mxu0 0
    %905 = vmatprep.subr.bf16.mxu0 0
    %906 = vmatpush1.bf16.xpose.msra.mxu0 0
    %907 = vmatprep.subr.bf16.mxu0 0
    %908 = vmatpush1.bf16.xpose.msra.mxu0 0
    %909 = vmatprep.subr.bf16.mxu0 0
    %910 = vmatpush1.bf16.xpose.msra.mxu0 0
    %911 = vmatprep.subr.bf16.mxu0 0
    %912 = vmatpush1.bf16.xpose.msra.mxu0 0
    %913 = vmatprep.subr.bf16.mxu0 0
    %914 = vmatpush1.bf16.xpose.msra.mxu0 0
    %915 = vmatprep.subr.bf16.mxu0 0
    %916 = vmatpush1.bf16.xpose.msra.mxu0 0
    %917 = vmatprep.subr.bf16.mxu0 0
    %918 = vmatpush1.bf16.xpose.msra.mxu0 0
    %919 = vmatprep.subr.bf16.mxu0 0
    %920 = vmatpush1.bf16.xpose.msra.mxu0 0
    %921 = vmatprep.subr.bf16.mxu0 0
    %922 = vmatpush1.bf16.xpose.msra.mxu0 0
    %923 = vmatprep.subr.bf16.mxu0 0
    %924 = vmatpush1.bf16.xpose.msra.mxu0 0
    %925 = vmatprep.subr.bf16.mxu0 0
    %926 = vmatpush1.bf16.xpose.msra.mxu0 0
    %927 = vmatprep.subr.bf16.mxu0 0
    %928 = vmatpush1.bf16.xpose.msra.mxu0 0
    %929 = vmatprep.subr.bf16.mxu0 0
    %930 = vmatpush1.bf16.xpose.msra.mxu0 0
    %931 = vmatprep.subr.bf16.mxu0 0
    %932 = vmatpush1.bf16.xpose.msra.mxu0 0
    %933 = vmatprep.mubr.bf16.mxu0 0
    %934 = vmatmul.mubr.bf16.gmra.mrb[0].mxu0 %v896
    %v935 = vpop.f32.mrb[0].mxu0
    %v936 = vadd.f32 0.0, %v935
    %v937 = vpop.f32.mrb[0].mxu0
    %v938 = vpop.f32.mrb[0].mxu0
    %v939 = vpop.f32.mrb[0].mxu0
    %940 = vdwg.mxu0
    %v941 = vmul.f32 %v886, 0.17677669
    %v942 = vmul.f32 %v936, 0.17677669
    %v943 = vsel %vm482, %v941, -inf
    %944 = vmax.xlane.f32.xlu0 %v943
    %v945 = vpop.xlane.xlu0 %944
    %v946 = vsel %vm482, %v942, -inf
    %947 = vmax.xlane.f32.xlu0 %v946
    %v948 = vpop.xlane.xlu0 %947
    %v949 = vsub.f32 %v941, %v945
    %v950 = vsub.f32 %v942, %v948
    %v951 = vmul.f32 %v949, 1.442695
    %v952 = vpow.pop %v951
    %v953 = vmul.f32 %v950, 1.442695
    %v954 = vpow.pop %v953
    %v955 = vsel %vm482, %v952, 0.0
    %956 = vadd.xlane.f32.xlu0 %v955
    %v957 = vpop.xlane.xlu0 %956
    %v958 = vsel %vm482, %v954, 0.0
    %959 = vadd.xlane.f32.xlu0 %v958
    %v960 = vpop.xlane.xlu0 %959
    %v961 = vrcp.pop %v957
    %v962 = vrcp.pop %v960
    %v963 = vmul.f32 %v952, %v961
    %v964 = vmul.f32 %v954, %v962
    %v965 = vpack.c.bf16 %v963, %v963
    %v966 = vpack.c.bf16 %v964, %v964
    %967 = vrot.lane.b32.xlu0 %v385, 64
    %v968 = vpop.permute.xlu0 %967
    %v970 = vsel %vm482, %v965, 0
    %v973 = vsel %vm510, %v968, 0
    %975 = vmatprep.subr.bf16.mxu0 0
    %976 = vmatpush1.bf16.msra.mxu0 %v973
    %977 = vmatprep.subr.bf16.mxu0 0
    %978 = vmatpush1.bf16.msra.mxu0 0
    %979 = vmatprep.subr.bf16.mxu0 0
    %980 = vmatpush1.bf16.msra.mxu0 0
    %981 = vmatprep.subr.bf16.mxu0 0
    %982 = vmatpush1.bf16.msra.mxu0 0
    %983 = vmatprep.subr.bf16.mxu0 0
    %984 = vmatpush1.bf16.msra.mxu0 0
    %985 = vmatprep.subr.bf16.mxu0 0
    %986 = vmatpush1.bf16.msra.mxu0 0
    %987 = vmatprep.subr.bf16.mxu0 0
    %988 = vmatpush1.bf16.msra.mxu0 0
    %989 = vmatprep.subr.bf16.mxu0 0
    %990 = vmatpush1.bf16.msra.mxu0 0
    %991 = vmatprep.subr.bf16.mxu0 0
    %992 = vmatpush1.bf16.msra.mxu0 0
    %993 = vmatprep.subr.bf16.mxu0 0
    %994 = vmatpush1.bf16.msra.mxu0 0
    %995 = vmatprep.subr.bf16.mxu0 0
    %996 = vmatpush1.bf16.msra.mxu0 0
    %997 = vmatprep.subr.bf16.mxu0 0
    %998 = vmatpush1.bf16.msra.mxu0 0
    %999 = vmatprep.subr.bf16.mxu0 0
    %1000 = vmatpush1.bf16.msra.mxu0 0
    %1001 = vmatprep.subr.bf16.mxu0 0
    %1002 = vmatpush1.bf16.msra.mxu0 0
    %1003 = vmatprep.subr.bf16.mxu0 0
    %1004 = vmatpush1.bf16.msra.mxu0 0
    %1005 = vmatprep.subr.bf16.mxu0 0
    %1006 = vmatpush1.bf16.msra.mxu0 0
    %1007 = vmatprep.mubr.bf16.mxu0 0
    %1008 = vmatmul.mubr.bf16.gmra.mrb[0].mxu0 %v970
    %v1009 = vpop.f32.mrb[0].mxu0
    %v1010 = vadd.f32 0.0, %v1009
    %v1011 = vpop.f32.mrb[0].mxu0
    %v1012 = vpop.f32.mrb[0].mxu0
    %v1013 = vpop.f32.mrb[0].mxu0
    %1014 = vdwg.mxu0
    %1015 = vrot.lane.b32.xlu0 %v386, 64
    %v1016 = vpop.permute.xlu0 %1015
    %v1018 = vsel %vm482, %v966, 0
    %v1021 = vsel %vm510, %v1016, 0
    %1023 = vmatprep.subr.bf16.mxu0 0
    %1024 = vmatpush1.bf16.msra.mxu0 %v1021
    %1025 = vmatprep.subr.bf16.mxu0 0
    %1026 = vmatpush1.bf16.msra.mxu0 0
    %1027 = vmatprep.subr.bf16.mxu0 0
    %1028 = vmatpush1.bf16.msra.mxu0 0
    %1029 = vmatprep.subr.bf16.mxu0 0
    %1030 = vmatpush1.bf16.msra.mxu0 0
    %1031 = vmatprep.subr.bf16.mxu0 0
    %1032 = vmatpush1.bf16.msra.mxu0 0
    %1033 = vmatprep.subr.bf16.mxu0 0
    %1034 = vmatpush1.bf16.msra.mxu0 0
    %1035 = vmatprep.subr.bf16.mxu0 0
    %1036 = vmatpush1.bf16.msra.mxu0 0
    %1037 = vmatprep.subr.bf16.mxu0 0
    %1038 = vmatpush1.bf16.msra.mxu0 0
    %1039 = vmatprep.subr.bf16.mxu0 0
    %1040 = vmatpush1.bf16.msra.mxu0 0
    %1041 = vmatprep.subr.bf16.mxu0 0
    %1042 = vmatpush1.bf16.msra.mxu0 0
    %1043 = vmatprep.subr.bf16.mxu0 0
    %1044 = vmatpush1.bf16.msra.mxu0 0
    %1045 = vmatprep.subr.bf16.mxu0 0
    %1046 = vmatpush1.bf16.msra.mxu0 0
    %1047 = vmatprep.subr.bf16.mxu0 0
    %1048 = vmatpush1.bf16.msra.mxu0 0
    %1049 = vmatprep.subr.bf16.mxu0 0
    %1050 = vmatpush1.bf16.msra.mxu0 0
    %1051 = vmatprep.subr.bf16.mxu0 0
    %1052 = vmatpush1.bf16.msra.mxu0 0
    %1053 = vmatprep.subr.bf16.mxu0 0
    %1054 = vmatpush1.bf16.msra.mxu0 0
    %1055 = vmatprep.mubr.bf16.mxu0 0
    %1056 = vmatmul.mubr.bf16.gmra.mrb[0].mxu0 %v1018
    %v1057 = vpop.f32.mrb[0].mxu0
    %v1058 = vadd.f32 0.0, %v1057
    %v1059 = vpop.f32.mrb[0].mxu0
    %v1060 = vpop.f32.mrb[0].mxu0
    %v1061 = vpop.f32.mrb[0].mxu0
    %1062 = vdwg.mxu0
    %1065 = vrot.lane.b32.xlu0 %v1010, 64
    %v1066 = vpop.permute.xlu0 %1065
    %1067 = vrot.lane.b32.xlu0 %v1058, 64
    %v1068 = vpop.permute.xlu0 %1067
    %vm1071 = vcmask 785920
    %1072 = vst.msk [vmem:[#allocation2] sm:$0xff] %vm1071, %v1066
    %1073 = vst.msk [vmem:[#allocation2 + $0x8] sm:$0xff] %vm1071, %v1068
    %1074 = vrot.lane.b32.xlu0 %v381, 32
    %v1075 = vpop.permute.xlu0 %1074
    %1076 = vrot.lane.b32.xlu0 %v383, 32
    %v1077 = vpop.permute.xlu0 %1076
    %v1079 = vsel %vm387, %v1075, 0
    %v1082 = vsel %vm387, %v1077, 0
    %1084 = vmatprep.subr.bf16.mxu0 0
    %1085 = vmatpush1.bf16.xpose.msra.mxu0 %v1082
    %1086 = vmatprep.subr.bf16.mxu0 0
    %1087 = vmatpush1.bf16.xpose.msra.mxu0 0
    %1088 = vmatprep.subr.bf16.mxu0 0
    %1089 = vmatpush1.bf16.xpose.msra.mxu0 0
    %1090 = vmatprep.subr.bf16.mxu0 0
    %1091 = vmatpush1.bf16.xpose.msra.mxu0 0
    %1092 = vmatprep.subr.bf16.mxu0 0
    %1093 = vmatpush1.bf16.xpose.msra.mxu0 0
    %1094 = vmatprep.subr.bf16.mxu0 0
    %1095 = vmatpush1.bf16.xpose.msra.mxu0 0
    %1096 = vmatprep.subr.bf16.mxu0 0
    %1097 = vmatpush1.bf16.xpose.msra.mxu0 0
    %1098 = vmatprep.subr.bf16.mxu0 0
    %1099 = vmatpush1.bf16.xpose.msra.mxu0 0
    %1100 = vmatprep.subr.bf16.mxu0 0
    %1101 = vmatpush1.bf16.xpose.msra.mxu0 0
    %1102 = vmatprep.subr.bf16.mxu0 0
    %1103 = vmatpush1.bf16.xpose.msra.mxu0 0
    %1104 = vmatprep.subr.bf16.mxu0 0
    %1105 = vmatpush1.bf16.xpose.msra.mxu0 0
    %1106 = vmatprep.subr.bf16.mxu0 0
    %1107 = vmatpush1.bf16.xpose.msra.mxu0 0
    %1108 = vmatprep.subr.bf16.mxu0 0
    %1109 = vmatpush1.bf16.xpose.msra.mxu0 0
    %1110 = vmatprep.subr.bf16.mxu0 0
    %1111 = vmatpush1.bf16.xpose.msra.mxu0 0
    %1112 = vmatprep.subr.bf16.mxu0 0
    %1113 = vmatpush1.bf16.xpose.msra.mxu0 0
    %1114 = vmatprep.subr.bf16.mxu0 0
    %1115 = vmatpush1.bf16.xpose.msra.mxu0 0
    %1116 = vmatprep.mubr.bf16.mxu0 0
    %1117 = vmatmul.mubr.bf16.gmra.mrb[0].mxu0 %v1079
    %v1118 = vpop.f32.mrb[0].mxu0
    %v1119 = vadd.f32 0.0, %v1118
    %v1120 = vpop.f32.mrb[0].mxu0
    %v1121 = vpop.f32.mrb[0].mxu0
    %v1122 = vpop.f32.mrb[0].mxu0
    %1123 = vdwg.mxu0
    %1124 = vrot.lane.b32.xlu0 %v382, 32
    %v1125 = vpop.permute.xlu0 %1124
    %1126 = vrot.lane.b32.xlu0 %v384, 32
    %v1127 = vpop.permute.xlu0 %1126
    %v1129 = vsel %vm387, %v1125, 0
    %v1132 = vsel %vm387, %v1127, 0
    %1134 = vmatprep.subr.bf16.mxu0 0
    %1135 = vmatpush1.bf16.xpose.msra.mxu0 %v1132
    %1136 = vmatprep.subr.bf16.mxu0 0
    %1137 = vmatpush1.bf16.xpose.msra.mxu0 0
    %1138 = vmatprep.subr.bf16.mxu0 0
    %1139 = vmatpush1.bf16.xpose.msra.mxu0 0
    %1140 = vmatprep.subr.bf16.mxu0 0
    %1141 = vmatpush1.bf16.xpose.msra.mxu0 0
    %1142 = vmatprep.subr.bf16.mxu0 0
    %1143 = vmatpush1.bf16.xpose.msra.mxu0 0
    %1144 = vmatprep.subr.bf16.mxu0 0
    %1145 = vmatpush1.bf16.xpose.msra.mxu0 0
    %1146 = vmatprep.subr.bf16.mxu0 0
    %1147 = vmatpush1.bf16.xpose.msra.mxu0 0
    %1148 = vmatprep.subr.bf16.mxu0 0
    %1149 = vmatpush1.bf16.xpose.msra.mxu0 0
    %1150 = vmatprep.subr.bf16.mxu0 0
    %1151 = vmatpush1.bf16.xpose.msra.mxu0 0
    %1152 = vmatprep.subr.bf16.mxu0 0
    %1153 = vmatpush1.bf16.xpose.msra.mxu0 0
    %1154 = vmatprep.subr.bf16.mxu0 0
    %1155 = vmatpush1.bf16.xpose.msra.mxu0 0
    %1156 = vmatprep.subr.bf16.mxu0 0
    %1157 = vmatpush1.bf16.xpose.msra.mxu0 0
    %1158 = vmatprep.subr.bf16.mxu0 0
    %1159 = vmatpush1.bf16.xpose.msra.mxu0 0
    %1160 = vmatprep.subr.bf16.mxu0 0
    %1161 = vmatpush1.bf16.xpose.msra.mxu0 0
    %1162 = vmatprep.subr.bf16.mxu0 0
    %1163 = vmatpush1.bf16.xpose.msra.mxu0 0
    %1164 = vmatprep.subr.bf16.mxu0 0
    %1165 = vmatpush1.bf16.xpose.msra.mxu0 0
    %1166 = vmatprep.mubr.bf16.mxu0 0
    %1167 = vmatmul.mubr.bf16.gmra.mrb[0].mxu0 %v1129
    %v1168 = vpop.f32.mrb[0].mxu0
    %v1169 = vadd.f32 0.0, %v1168
    %v1170 = vpop.f32.mrb[0].mxu0
    %v1171 = vpop.f32.mrb[0].mxu0
    %v1172 = vpop.f32.mrb[0].mxu0
    %1173 = vdwg.mxu0
    %v1174 = vmul.f32 %v1119, 0.17677669
    %v1175 = vmul.f32 %v1169, 0.17677669
    %v1176 = vsel %vm482, %v1174, -inf
    %1177 = vmax.xlane.f32.xlu0 %v1176
    %v1178 = vpop.xlane.xlu0 %1177
    %v1179 = vsel %vm482, %v1175, -inf
    %1180 = vmax.xlane.f32.xlu0 %v1179
    %v1181 = vpop.xlane.xlu0 %1180
    %v1182 = vsub.f32 %v1174, %v1178
    %v1183 = vsub.f32 %v1175, %v1181
    %v1184 = vmul.f32 %v1182, 1.442695
    %v1185 = vpow.pop %v1184
    %v1186 = vmul.f32 %v1183, 1.442695
    %v1187 = vpow.pop %v1186
    %v1188 = vsel %vm482, %v1185, 0.0
    %1189 = vadd.xlane.f32.xlu0 %v1188
    %v1190 = vpop.xlane.xlu0 %1189
    %v1191 = vsel %vm482, %v1187, 0.0
    %1192 = vadd.xlane.f32.xlu0 %v1191
    %v1193 = vpop.xlane.xlu0 %1192
    %v1194 = vrcp.pop %v1190
    %v1195 = vrcp.pop %v1193
    %v1196 = vmul.f32 %v1185, %v1194
    %v1197 = vmul.f32 %v1187, %v1195
    %v1198 = vpack.c.bf16 %v1196, %v1196
    %v1199 = vpack.c.bf16 %v1197, %v1197
    %1200 = vrot.lane.b32.xlu0 %v385, 32
    %v1201 = vpop.permute.xlu0 %1200
    %v1203 = vsel %vm482, %v1198, 0
    %v1206 = vsel %vm510, %v1201, 0
    %1208 = vmatprep.subr.bf16.mxu0 0
    %1209 = vmatpush1.bf16.msra.mxu0 %v1206
    %1210 = vmatprep.subr.bf16.mxu0 0
    %1211 = vmatpush1.bf16.msra.mxu0 0
    %1212 = vmatprep.subr.bf16.mxu0 0
    %1213 = vmatpush1.bf16.msra.mxu0 0
    %1214 = vmatprep.subr.bf16.mxu0 0
    %1215 = vmatpush1.bf16.msra.mxu0 0
    %1216 = vmatprep.subr.bf16.mxu0 0
    %1217 = vmatpush1.bf16.msra.mxu0 0
    %1218 = vmatprep.subr.bf16.mxu0 0
    %1219 = vmatpush1.bf16.msra.mxu0 0
    %1220 = vmatprep.subr.bf16.mxu0 0
    %1221 = vmatpush1.bf16.msra.mxu0 0
    %1222 = vmatprep.subr.bf16.mxu0 0
    %1223 = vmatpush1.bf16.msra.mxu0 0
    %1224 = vmatprep.subr.bf16.mxu0 0
    %1225 = vmatpush1.bf16.msra.mxu0 0
    %1226 = vmatprep.subr.bf16.mxu0 0
    %1227 = vmatpush1.bf16.msra.mxu0 0
    %1228 = vmatprep.subr.bf16.mxu0 0
    %1229 = vmatpush1.bf16.msra.mxu0 0
    %1230 = vmatprep.subr.bf16.mxu0 0
    %1231 = vmatpush1.bf16.msra.mxu0 0
    %1232 = vmatprep.subr.bf16.mxu0 0
    %1233 = vmatpush1.bf16.msra.mxu0 0
    %1234 = vmatprep.subr.bf16.mxu0 0
    %1235 = vmatpush1.bf16.msra.mxu0 0
    %1236 = vmatprep.subr.bf16.mxu0 0
    %1237 = vmatpush1.bf16.msra.mxu0 0
    %1238 = vmatprep.subr.bf16.mxu0 0
    %1239 = vmatpush1.bf16.msra.mxu0 0
    %1240 = vmatprep.mubr.bf16.mxu0 0
    %1241 = vmatmul.mubr.bf16.gmra.mrb[0].mxu0 %v1203
    %v1242 = vpop.f32.mrb[0].mxu0
    %v1243 = vadd.f32 0.0, %v1242
    %v1244 = vpop.f32.mrb[0].mxu0
    %v1245 = vpop.f32.mrb[0].mxu0
    %v1246 = vpop.f32.mrb[0].mxu0
    %1247 = vdwg.mxu0
    %1248 = vrot.lane.b32.xlu0 %v386, 32
    %v1249 = vpop.permute.xlu0 %1248
    %v1251 = vsel %vm482, %v1199, 0
    %v1254 = vsel %vm510, %v1249, 0
    %1256 = vmatprep.subr.bf16.mxu0 0
    %1257 = vmatpush1.bf16.msra.mxu0 %v1254
    %1258 = vmatprep.subr.bf16.mxu0 0
    %1259 = vmatpush1.bf16.msra.mxu0 0
    %1260 = vmatprep.subr.bf16.mxu0 0
    %1261 = vmatpush1.bf16.msra.mxu0 0
    %1262 = vmatprep.subr.bf16.mxu0 0
    %1263 = vmatpush1.bf16.msra.mxu0 0
    %1264 = vmatprep.subr.bf16.mxu0 0
    %1265 = vmatpush1.bf16.msra.mxu0 0
    %1266 = vmatprep.subr.bf16.mxu0 0
    %1267 = vmatpush1.bf16.msra.mxu0 0
    %1268 = vmatprep.subr.bf16.mxu0 0
    %1269 = vmatpush1.bf16.msra.mxu0 0
    %1270 = vmatprep.subr.bf16.mxu0 0
    %1271 = vmatpush1.bf16.msra.mxu0 0
    %1272 = vmatprep.subr.bf16.mxu0 0
    %1273 = vmatpush1.bf16.msra.mxu0 0
    %1274 = vmatprep.subr.bf16.mxu0 0
    %1275 = vmatpush1.bf16.msra.mxu0 0
    %1276 = vmatprep.subr.bf16.mxu0 0
    %1277 = vmatpush1.bf16.msra.mxu0 0
    %1278 = vmatprep.subr.bf16.mxu0 0
    %1279 = vmatpush1.bf16.msra.mxu0 0
    %1280 = vmatprep.subr.bf16.mxu0 0
    %1281 = vmatpush1.bf16.msra.mxu0 0
    %1282 = vmatprep.subr.bf16.mxu0 0
    %1283 = vmatpush1.bf16.msra.mxu0 0
    %1284 = vmatprep.subr.bf16.mxu0 0
    %1285 = vmatpush1.bf16.msra.mxu0 0
    %1286 = vmatprep.subr.bf16.mxu0 0
    %1287 = vmatpush1.bf16.msra.mxu0 0
    %1288 = vmatprep.mubr.bf16.mxu0 0
    %1289 = vmatmul.mubr.bf16.gmra.mrb[0].mxu0 %v1251
    %v1290 = vpop.f32.mrb[0].mxu0
    %v1291 = vadd.f32 0.0, %v1290
    %v1292 = vpop.f32.mrb[0].mxu0
    %v1293 = vpop.f32.mrb[0].mxu0
    %v1294 = vpop.f32.mrb[0].mxu0
    %1295 = vdwg.mxu0
    %1298 = vrot.lane.b32.xlu0 %v1243, 96
    %v1299 = vpop.permute.xlu0 %1298
    %1300 = vrot.lane.b32.xlu0 %v1291, 96
    %v1301 = vpop.permute.xlu0 %1300
    %vm1304 = vcmask 1048320
    %1305 = vst.msk [vmem:[#allocation2] sm:$0xff] %vm1304, %v1299
    %1306 = vst.msk [vmem:[#allocation2 + $0x8] sm:$0xff] %vm1304, %v1301
    %v1307 = vld [vmem:[#allocation2] sm:$0xff]
    %v1308 = vld [vmem:[#allocation2 + $0x8] sm:$0xff]
    %v1309 = vpack.c.bf16 %v1308, %v1307
    %v1310 = vld [vmem:[#allocation3] sm:$0xf]
    %v1311 = vld [vmem:[#allocation3 + $0x4] sm:$0xf]
    %v1312 = vld [vmem:[#allocation3 + $0x8] sm:$0xf]
    %v1313 = vld [vmem:[#allocation3 + $0xc] sm:$0xf]
    %v1314 = vld [vmem:[#allocation3 + $0x10] sm:$0xf]
    %v1315 = vld [vmem:[#allocation3 + $0x14] sm:$0xf]
    %v1316 = vld [vmem:[#allocation3 + $0x18] sm:$0xf]
    %v1317 = vld [vmem:[#allocation3 + $0x1c] sm:$0xf]
    %v1318 = vld [vmem:[#allocation3 + $0x20] sm:$0xf]
    %v1319 = vld [vmem:[#allocation3 + $0x24] sm:$0xf]
    %v1320 = vld [vmem:[#allocation3 + $0x28] sm:$0xf]
    %v1321 = vld [vmem:[#allocation3 + $0x2c] sm:$0xf]
    %v1322 = vld [vmem:[#allocation3 + $0x30] sm:$0xf]
    %v1323 = vld [vmem:[#allocation3 + $0x34] sm:$0xf]
    %v1324 = vld [vmem:[#allocation3 + $0x38] sm:$0xf]
    %v1325 = vld [vmem:[#allocation3 + $0x3c] sm:$0xf]
    %v1326 = vlaneseq
    %v1327 = vshrl.u32 %v1326, 7
    %v1328 = vsub.s32 0, %v1327
    %v1329 = vrot.slane %v118, %v1328
    %v1346 = vunpack.c.l.b16 %v1310
    %v1347 = vunpack.c.l.b16 %v1311
    %v1348 = vunpack.c.l.b16 %v1312
    %v1349 = vunpack.c.l.b16 %v1313
    %v1350 = vunpack.c.l.b16 %v1314
    %v1351 = vunpack.c.l.b16 %v1315
    %v1352 = vunpack.c.l.b16 %v1316
    %v1353 = vunpack.c.l.b16 %v1317
    %v1354 = vunpack.c.l.b16 %v1318
    %v1355 = vunpack.c.l.b16 %v1319
    %v1356 = vunpack.c.l.b16 %v1320
    %v1357 = vunpack.c.l.b16 %v1321
    %v1358 = vunpack.c.l.b16 %v1322
    %v1359 = vunpack.c.l.b16 %v1323
    %v1360 = vunpack.c.l.b16 %v1324
    %v1361 = vunpack.c.l.b16 %v1325
    %v1362 = vpack.c.b16 %v1347, %v1346
    %v1363 = vpack.c.b16 %v1349, %v1348
    %v1364 = vpack.c.b16 %v1351, %v1350
    %v1365 = vpack.c.b16 %v1353, %v1352
    %v1366 = vpack.c.b16 %v1355, %v1354
    %v1367 = vpack.c.b16 %v1357, %v1356
    %v1368 = vpack.c.b16 %v1359, %v1358
    %v1369 = vpack.c.b16 %v1361, %v1360
    %1378 = vmatprep.subr.bf16.mxu0 0
    %1379 = vmatpush1.bf16.msra.mxu0 %v1362
    %1380 = vmatprep.subr.bf16.mxu0 0
    %1381 = vmatpush1.bf16.msra.mxu0 %v1363
    %1382 = vmatprep.subr.bf16.mxu0 0
    %1383 = vmatpush1.bf16.msra.mxu0 %v1364
    %1384 = vmatprep.subr.bf16.mxu0 0
    %1385 = vmatpush1.bf16.msra.mxu0 %v1365
    %1386 = vmatprep.subr.bf16.mxu0 0
    %1387 = vmatpush1.bf16.msra.mxu0 %v1366
    %1388 = vmatprep.subr.bf16.mxu0 0
    %1389 = vmatpush1.bf16.msra.mxu0 %v1367
    %1390 = vmatprep.subr.bf16.mxu0 0
    %1391 = vmatpush1.bf16.msra.mxu0 %v1368
    %1392 = vmatprep.subr.bf16.mxu0 0
    %1393 = vmatpush1.bf16.msra.mxu0 %v1369
    %1394 = vmatprep.subr.bf16.mxu0 0
    %1395 = vmatpush1.bf16.msra.mxu0 0
    %1396 = vmatprep.subr.bf16.mxu0 0
    %1397 = vmatpush1.bf16.msra.mxu0 0
    %1398 = vmatprep.subr.bf16.mxu0 0
    %1399 = vmatpush1.bf16.msra.mxu0 0
    %1400 = vmatprep.subr.bf16.mxu0 0
    %1401 = vmatpush1.bf16.msra.mxu0 0
    %1402 = vmatprep.subr.bf16.mxu0 0
    %1403 = vmatpush1.bf16.msra.mxu0 0
    %1404 = vmatprep.subr.bf16.mxu0 0
    %1405 = vmatpush1.bf16.msra.mxu0 0
    %1406 = vmatprep.subr.bf16.mxu0 0
    %1407 = vmatpush1.bf16.msra.mxu0 0
    %1408 = vmatprep.subr.bf16.mxu0 0
    %1409 = vmatpush1.bf16.msra.mxu0 0
    %1410 = vmatprep.mubr.bf16.mxu0 0
    %1411 = vmatmul.mubr.bf16.gmra.mrb[0].mxu0 %v1309
    %v1412 = vpop.f32.mrb[0].mxu0
    %v1413 = vadd.f32 %v1329, %v1412
    %v1414 = vpop.f32.mrb[0].mxu0
    %v1415 = vpop.f32.mrb[0].mxu0
    %v1416 = vadd.f32 %v1329, %v1415
    %v1417 = vpop.f32.mrb[0].mxu0
    %1418 = vdwg.mxu0
    %v1419 = vadd.f32 %v116, %v1413
    %v1420 = vadd.f32 %v117, %v1416
    %1421 = vadd.xlane.f32.xlu0 %v1419
    %v1422 = vpop.xlane.xlu0 %1421
    %1423 = vadd.xlane.f32.xlu0 %v1420
    %v1424 = vpop.xlane.xlu0 %1423
    %v1425 = vmul.f32 %v1422, %v87
    %v1426 = vmul.f32 %v1424, %v87
    %v1427 = vsub.f32 %v1419, %v1425
    %v1428 = vsub.f32 %v1420, %v1426
    %v1429 = vmul.f32 %v1427, %v1427
    %v1430 = vmul.f32 %v1428, %v1428
    %1431 = vadd.xlane.f32.xlu0 %v1429
    %v1432 = vpop.xlane.xlu0 %1431
    %1433 = vadd.xlane.f32.xlu0 %v1430
    %v1434 = vpop.xlane.xlu0 %1433
    %v1435 = vmul.f32 %v1432, %v87
    %v1436 = vmul.f32 %v1434, %v87
    %v1437 = vadd.f32 %v1435, 1e-12
    %v1438 = vadd.f32 %v1436, 1e-12
    %v1439 = vrsqrt.pop %v1437
    %v1440 = vrsqrt.pop %v1438
    %v1441 = vmul.f32 %v1427, %v1439
    %v1442 = vmul.f32 %v1428, %v1440
    %v1443 = vlaneseq
    %v1444 = vshrl.u32 %v1443, 7
    %v1445 = vsub.s32 1, %v1444
    %v1446 = vrot.slane %v118, %v1445
    %v1447 = vmul.f32 %v1441, %v1446
    %v1448 = vmul.f32 %v1442, %v1446
    %v1449 = vlaneseq
    %v1450 = vshrl.u32 %v1449, 7
    %v1451 = vsub.s32 2, %v1450
    %v1452 = vrot.slane %v118, %v1451
    %v1453 = vadd.f32 %v1447, %v1452
    %v1454 = vadd.f32 %v1448, %v1452
    %v1455 = vpack.c.bf16 %v1454, %v1453
    %v1456 = vld [vmem:[#allocation5] sm:$0xff]
    %v1457 = vld [vmem:[#allocation5 + $0x8] sm:$0xff]
    %v1458 = vld [vmem:[#allocation5 + $0x10] sm:$0xff]
    %v1459 = vld [vmem:[#allocation5 + $0x18] sm:$0xff]
    %v1460 = vld [vmem:[#allocation5 + $0x20] sm:$0xff]
    %v1461 = vld [vmem:[#allocation5 + $0x28] sm:$0xff]
    %v1462 = vld [vmem:[#allocation5 + $0x30] sm:$0xff]
    %v1463 = vld [vmem:[#allocation5 + $0x38] sm:$0xff]
    %v1464 = vld [vmem:[#allocation5 + $0x40] sm:$0xff]
    %v1465 = vld [vmem:[#allocation5 + $0x48] sm:$0xff]
    %v1466 = vld [vmem:[#allocation5 + $0x50] sm:$0xff]
    %v1467 = vld [vmem:[#allocation5 + $0x58] sm:$0xff]
    %v1468 = vld [vmem:[#allocation5 + $0x60] sm:$0xff]
    %v1469 = vld [vmem:[#allocation5 + $0x68] sm:$0xff]
    %v1470 = vld [vmem:[#allocation5 + $0x70] sm:$0xff]
    %v1471 = vld [vmem:[#allocation5 + $0x78] sm:$0xff]
    %v1472 = vld [vmem:[%s8] sm:$0x3]
    %v1474 = vlaneseq
    %v1475 = vshrl.u32 %v1474, 7
    %v1476 = vsub.s32 0, %v1475
    %v1477 = vrot.slane %v1472, %v1476
    %v1478 = vlaneseq
    %v1479 = vshrl.u32 %v1478, 7
    %v1480 = vsub.s32 1, %v1479
    %v1481 = vrot.slane %v1472, %v1480
    %v1500 = vunpack.c.l.b16 %v1456
    %v1501 = vunpack.c.h.b16 %v1456
    %v1502 = vunpack.c.l.b16 %v1457
    %v1503 = vunpack.c.h.b16 %v1457
    %v1504 = vunpack.c.l.b16 %v1458
    %v1505 = vunpack.c.h.b16 %v1458
    %v1506 = vunpack.c.l.b16 %v1459
    %v1507 = vunpack.c.h.b16 %v1459
    %v1508 = vunpack.c.l.b16 %v1460
    %v1509 = vunpack.c.h.b16 %v1460
    %v1510 = vunpack.c.l.b16 %v1461
    %v1511 = vunpack.c.h.b16 %v1461
    %v1512 = vunpack.c.l.b16 %v1462
    %v1513 = vunpack.c.h.b16 %v1462
    %v1514 = vunpack.c.l.b16 %v1463
    %v1515 = vunpack.c.h.b16 %v1463
    %v1516 = vunpack.c.l.b16 %v1464
    %v1517 = vunpack.c.h.b16 %v1464
    %v1518 = vunpack.c.l.b16 %v1465
    %v1519 = vunpack.c.h.b16 %v1465
    %v1520 = vunpack.c.l.b16 %v1466
    %v1521 = vunpack.c.h.b16 %v1466
    %v1522 = vunpack.c.l.b16 %v1467
    %v1523 = vunpack.c.h.b16 %v1467
    %v1524 = vunpack.c.l.b16 %v1468
    %v1525 = vunpack.c.h.b16 %v1468
    %v1526 = vunpack.c.l.b16 %v1469
    %v1527 = vunpack.c.h.b16 %v1469
    %v1528 = vunpack.c.l.b16 %v1470
    %v1529 = vunpack.c.h.b16 %v1470
    %v1530 = vunpack.c.l.b16 %v1471
    %v1531 = vunpack.c.h.b16 %v1471
    %v1532 = vpack.c.b16 %v1502, %v1500
    %v1533 = vpack.c.b16 %v1503, %v1501
    %v1534 = vpack.c.b16 %v1506, %v1504
    %v1535 = vpack.c.b16 %v1507, %v1505
    %v1536 = vpack.c.b16 %v1510, %v1508
    %v1537 = vpack.c.b16 %v1511, %v1509
    %v1538 = vpack.c.b16 %v1514, %v1512
    %v1539 = vpack.c.b16 %v1515, %v1513
    %v1540 = vpack.c.b16 %v1518, %v1516
    %v1541 = vpack.c.b16 %v1519, %v1517
    %v1542 = vpack.c.b16 %v1522, %v1520
    %v1543 = vpack.c.b16 %v1523, %v1521
    %v1544 = vpack.c.b16 %v1526, %v1524
    %v1545 = vpack.c.b16 %v1527, %v1525
    %v1546 = vpack.c.b16 %v1530, %v1528
    %v1547 = vpack.c.b16 %v1531, %v1529
    %1564 = vmatprep.subr.bf16.mxu0 %v1533
    %1565 = vmatpush1.bf16.msra.mxu0 %v1532
    %1566 = vmatprep.subr.bf16.mxu0 %v1535
    %1567 = vmatpush1.bf16.msra.mxu0 %v1534
    %1568 = vmatprep.subr.bf16.mxu0 %v1537
    %1569 = vmatpush1.bf16.msra.mxu0 %v1536
    %1570 = vmatprep.subr.bf16.mxu0 %v1539
    %1571 = vmatpush1.bf16.msra.mxu0 %v1538
    %1572 = vmatprep.subr.bf16.mxu0 %v1541
    %1573 = vmatpush1.bf16.msra.mxu0 %v1540
    %1574 = vmatprep.subr.bf16.mxu0 %v1543
    %1575 = vmatpush1.bf16.msra.mxu0 %v1542
    %1576 = vmatprep.subr.bf16.mxu0 %v1545
    %1577 = vmatpush1.bf16.msra.mxu0 %v1544
    %1578 = vmatprep.subr.bf16.mxu0 %v1547
    %1579 = vmatpush1.bf16.msra.mxu0 %v1546
    %1580 = vmatprep.subr.bf16.mxu0 0
    %1581 = vmatpush1.bf16.msra.mxu0 0
    %1582 = vmatprep.subr.bf16.mxu0 0
    %1583 = vmatpush1.bf16.msra.mxu0 0
    %1584 = vmatprep.subr.bf16.mxu0 0
    %1585 = vmatpush1.bf16.msra.mxu0 0
    %1586 = vmatprep.subr.bf16.mxu0 0
    %1587 = vmatpush1.bf16.msra.mxu0 0
    %1588 = vmatprep.subr.bf16.mxu0 0
    %1589 = vmatpush1.bf16.msra.mxu0 0
    %1590 = vmatprep.subr.bf16.mxu0 0
    %1591 = vmatpush1.bf16.msra.mxu0 0
    %1592 = vmatprep.subr.bf16.mxu0 0
    %1593 = vmatpush1.bf16.msra.mxu0 0
    %1594 = vmatprep.subr.bf16.mxu0 0
    %1595 = vmatpush1.bf16.msra.mxu0 0
    %1596 = vmatprep.mubr.bf16.mxu0 0
    %1597 = vmatmul.mubr.bf16.gmra.mrb[0].mxu0 %v1455
    %v1598 = vpop.f32.mrb[0].mxu0
    %v1599 = vadd.f32 %v1477, %v1598
    %v1600 = vpop.f32.mrb[0].mxu0
    %v1601 = vadd.f32 %v1481, %v1600
    %v1602 = vpop.f32.mrb[0].mxu0
    %v1603 = vadd.f32 %v1477, %v1602
    %v1604 = vpop.f32.mrb[0].mxu0
    %v1605 = vadd.f32 %v1481, %v1604
    %1606 = vdwg.mxu0
    %v1607 = vmul.f32 %v1599, 0.5
    %v1608 = vmul.f32 %v1601, 0.5
    %v1609 = vmul.f32 %v1603, 0.5
    %v1610 = vmul.f32 %v1605, 0.5
    %v1611 = vmul.f32 %v1599, 0.70710677
    %v1612 = vmul.f32 %v1601, 0.70710677
    %v1613 = vmul.f32 %v1603, 0.70710677
    %v1614 = vmul.f32 %v1605, 0.70710677
    %vm1615 = vcmp.lt.f32.partialorder %v1611, 0.0
    %vm1616 = vcmp.lt.f32.partialorder %v1612, 0.0
    %vm1617 = vcmp.lt.f32.partialorder %v1613, 0.0
    %vm1618 = vcmp.lt.f32.partialorder %v1614, 0.0
    %v1619 = vsub.f32 0.0, %v1611
    %v1620 = vsub.f32 0.0, %v1612
    %v1621 = vsub.f32 0.0, %v1613
    %v1622 = vsub.f32 0.0, %v1614
    %v1623 = vsel %vm1615, %v1619, %v1611
    %v1624 = vsel %vm1616, %v1620, %v1612
    %v1625 = vsel %vm1617, %v1621, %v1613
    %v1626 = vsel %vm1618, %v1622, %v1614
    %v1627 = vmul.f32 %v1623, 0.3275911
    %v1628 = vmul.f32 %v1624, 0.3275911
    %v1629 = vmul.f32 %v1625, 0.3275911
    %v1630 = vmul.f32 %v1626, 0.3275911
    %v1631 = vadd.f32 %v1627, 1.0
    %v1632 = vadd.f32 %v1628, 1.0
    %v1633 = vadd.f32 %v1629, 1.0
    %v1634 = vadd.f32 %v1630, 1.0
    %v1635 = vrcp.pop %v1631
    %v1636 = vmul.f32 1.0, %v1635
    %v1637 = vrcp.pop %v1632
    %v1638 = vmul.f32 1.0, %v1637
    %v1639 = vrcp.pop %v1633
    %v1640 = vmul.f32 1.0, %v1639
    %v1641 = vrcp.pop %v1634
    %v1642 = vmul.f32 1.0, %v1641
    %v1643 = vmul.f32 %v1636, 1.0614054
    %v1644 = vmul.f32 %v1638, 1.0614054
    %v1645 = vmul.f32 %v1640, 1.0614054
    %v1646 = vmul.f32 %v1642, 1.0614054
    %v1647 = vsub.f32 %v1643, 1.4531521
    %v1648 = vsub.f32 %v1644, 1.4531521
    %v1649 = vsub.f32 %v1645, 1.4531521
    %v1650 = vsub.f32 %v1646, 1.4531521
    %v1651 = vmul.f32 %v1647, %v1636
    %v1652 = vmul.f32 %v1648, %v1638
    %v1653 = vmul.f32 %v1649, %v1640
    %v1654 = vmul.f32 %v1650, %v1642
    %v1655 = vadd.f32 %v1651, 1.4214138
    %v1656 = vadd.f32 %v1652, 1.4214138
    %v1657 = vadd.f32 %v1653, 1.4214138
    %v1658 = vadd.f32 %v1654, 1.4214138
    %v1659 = vmul.f32 %v1655, %v1636
    %v1660 = vmul.f32 %v1656, %v1638
    %v1661 = vmul.f32 %v1657, %v1640
    %v1662 = vmul.f32 %v1658, %v1642
    %v1663 = vsub.f32 %v1659, 0.28449672
    %v1664 = vsub.f32 %v1660, 0.28449672
    %v1665 = vsub.f32 %v1661, 0.28449672
    %v1666 = vsub.f32 %v1662, 0.28449672
    %v1667 = vmul.f32 %v1663, %v1636
    %v1668 = vmul.f32 %v1664, %v1638
    %v1669 = vmul.f32 %v1665, %v1640
    %v1670 = vmul.f32 %v1666, %v1642
    %v1671 = vadd.f32 %v1667, 0.2548296
    %v1672 = vadd.f32 %v1668, 0.2548296
    %v1673 = vadd.f32 %v1669, 0.2548296
    %v1674 = vadd.f32 %v1670, 0.2548296
    %v1675 = vmul.f32 %v1671, %v1636
    %v1676 = vmul.f32 %v1672, %v1638
    %v1677 = vmul.f32 %v1673, %v1640
    %v1678 = vmul.f32 %v1674, %v1642
    %v1679 = vsub.f32 0.0, %v1623
    %v1680 = vsub.f32 0.0, %v1624
    %v1681 = vsub.f32 0.0, %v1625
    %v1682 = vsub.f32 0.0, %v1626
    %v1683 = vmul.f32 %v1679, %v1623
    %v1684 = vmul.f32 %v1680, %v1624
    %v1685 = vmul.f32 %v1681, %v1625
    %v1686 = vmul.f32 %v1682, %v1626
    %v1687 = vmul.f32 %v1683, 1.442695
    %v1688 = vpow.pop %v1687
    %v1689 = vmul.f32 %v1684, 1.442695
    %v1690 = vpow.pop %v1689
    %v1691 = vmul.f32 %v1685, 1.442695
    %v1692 = vpow.pop %v1691
    %v1693 = vmul.f32 %v1686, 1.442695
    %v1694 = vpow.pop %v1693
    %v1695 = vmul.f32 %v1675, %v1688
    %v1696 = vmul.f32 %v1676, %v1690
    %v1697 = vmul.f32 %v1677, %v1692
    %v1698 = vmul.f32 %v1678, %v1694
    %v1699 = vsub.f32 1.0, %v1695
    %v1700 = vsub.f32 1.0, %v1696
    %v1701 = vsub.f32 1.0, %v1697
    %v1702 = vsub.f32 1.0, %v1698
    %v1703 = vsub.f32 0.0, %v1699
    %v1704 = vsub.f32 0.0, %v1700
    %v1705 = vsub.f32 0.0, %v1701
    %v1706 = vsub.f32 0.0, %v1702
    %v1707 = vsel %vm1615, %v1703, %v1699
    %v1708 = vsel %vm1616, %v1704, %v1700
    %v1709 = vsel %vm1617, %v1705, %v1701
    %v1710 = vsel %vm1618, %v1706, %v1702
    %v1711 = vadd.f32 %v1707, 1.0
    %v1712 = vadd.f32 %v1708, 1.0
    %v1713 = vadd.f32 %v1709, 1.0
    %v1714 = vadd.f32 %v1710, 1.0
    %v1715 = vmul.f32 %v1607, %v1711
    %v1716 = vmul.f32 %v1608, %v1712
    %v1717 = vmul.f32 %v1609, %v1713
    %v1718 = vmul.f32 %v1610, %v1714
    %v1719 = vpack.c.bf16 %v1717, %v1715
    %v1720 = vpack.c.bf16 %v1718, %v1716
    %v1721 = vld [vmem:[#allocation7] sm:$0xf]
    %v1722 = vld [vmem:[#allocation7 + $0x4] sm:$0xf]
    %v1723 = vld [vmem:[#allocation7 + $0x8] sm:$0xf]
    %v1724 = vld [vmem:[#allocation7 + $0xc] sm:$0xf]
    %v1725 = vld [vmem:[#allocation7 + $0x10] sm:$0xf]
    %v1726 = vld [vmem:[#allocation7 + $0x14] sm:$0xf]
    %v1727 = vld [vmem:[#allocation7 + $0x18] sm:$0xf]
    %v1728 = vld [vmem:[#allocation7 + $0x1c] sm:$0xf]
    %v1729 = vld [vmem:[#allocation7 + $0x20] sm:$0xf]
    %v1730 = vld [vmem:[#allocation7 + $0x24] sm:$0xf]
    %v1731 = vld [vmem:[#allocation7 + $0x28] sm:$0xf]
    %v1732 = vld [vmem:[#allocation7 + $0x2c] sm:$0xf]
    %v1733 = vld [vmem:[#allocation7 + $0x30] sm:$0xf]
    %v1734 = vld [vmem:[#allocation7 + $0x34] sm:$0xf]
    %v1735 = vld [vmem:[#allocation7 + $0x38] sm:$0xf]
    %v1736 = vld [vmem:[#allocation7 + $0x3c] sm:$0xf]
    %v1737 = vld [vmem:[#allocation7 + $0x40] sm:$0xf]
    %v1738 = vld [vmem:[#allocation7 + $0x44] sm:$0xf]
    %v1739 = vld [vmem:[#allocation7 + $0x48] sm:$0xf]
    %v1740 = vld [vmem:[#allocation7 + $0x4c] sm:$0xf]
    %v1741 = vld [vmem:[#allocation7 + $0x50] sm:$0xf]
    %v1742 = vld [vmem:[#allocation7 + $0x54] sm:$0xf]
    %v1743 = vld [vmem:[#allocation7 + $0x58] sm:$0xf]
    %v1744 = vld [vmem:[#allocation7 + $0x5c] sm:$0xf]
    %v1745 = vld [vmem:[#allocation7 + $0x60] sm:$0xf]
    %v1746 = vld [vmem:[#allocation7 + $0x64] sm:$0xf]
    %v1747 = vld [vmem:[#allocation7 + $0x68] sm:$0xf]
    %v1748 = vld [vmem:[#allocation7 + $0x6c] sm:$0xf]
    %v1749 = vld [vmem:[#allocation7 + $0x70] sm:$0xf]
    %v1750 = vld [vmem:[#allocation7 + $0x74] sm:$0xf]
    %v1751 = vld [vmem:[#allocation7 + $0x78] sm:$0xf]
    %v1752 = vld [vmem:[#allocation7 + $0x7c] sm:$0xf]
    %v1753 = vlaneseq
    %v1754 = vshrl.u32 %v1753, 7
    %v1755 = vsub.s32 3, %v1754
    %v1756 = vrot.slane %v118, %v1755
    %v1789 = vunpack.c.l.b16 %v1721
    %v1790 = vunpack.c.l.b16 %v1722
    %v1791 = vunpack.c.l.b16 %v1723
    %v1792 = vunpack.c.l.b16 %v1724
    %v1793 = vunpack.c.l.b16 %v1725
    %v1794 = vunpack.c.l.b16 %v1726
    %v1795 = vunpack.c.l.b16 %v1727
    %v1796 = vunpack.c.l.b16 %v1728
    %v1797 = vunpack.c.l.b16 %v1729
    %v1798 = vunpack.c.l.b16 %v1730
    %v1799 = vunpack.c.l.b16 %v1731
    %v1800 = vunpack.c.l.b16 %v1732
    %v1801 = vunpack.c.l.b16 %v1733
    %v1802 = vunpack.c.l.b16 %v1734
    %v1803 = vunpack.c.l.b16 %v1735
    %v1804 = vunpack.c.l.b16 %v1736
    %v1805 = vunpack.c.l.b16 %v1737
    %v1806 = vunpack.c.l.b16 %v1738
    %v1807 = vunpack.c.l.b16 %v1739
    %v1808 = vunpack.c.l.b16 %v1740
    %v1809 = vunpack.c.l.b16 %v1741
    %v1810 = vunpack.c.l.b16 %v1742
    %v1811 = vunpack.c.l.b16 %v1743
    %v1812 = vunpack.c.l.b16 %v1744
    %v1813 = vunpack.c.l.b16 %v1745
    %v1814 = vunpack.c.l.b16 %v1746
    %v1815 = vunpack.c.l.b16 %v1747
    %v1816 = vunpack.c.l.b16 %v1748
    %v1817 = vunpack.c.l.b16 %v1749
    %v1818 = vunpack.c.l.b16 %v1750
    %v1819 = vunpack.c.l.b16 %v1751
    %v1820 = vunpack.c.l.b16 %v1752
    %v1821 = vpack.c.b16 %v1790, %v1789
    %v1822 = vpack.c.b16 %v1792, %v1791
    %v1823 = vpack.c.b16 %v1794, %v1793
    %v1824 = vpack.c.b16 %v1796, %v1795
    %v1825 = vpack.c.b16 %v1798, %v1797
    %v1826 = vpack.c.b16 %v1800, %v1799
    %v1827 = vpack.c.b16 %v1802, %v1801
    %v1828 = vpack.c.b16 %v1804, %v1803
    %v1829 = vpack.c.b16 %v1806, %v1805
    %v1830 = vpack.c.b16 %v1808, %v1807
    %v1831 = vpack.c.b16 %v1810, %v1809
    %v1832 = vpack.c.b16 %v1812, %v1811
    %v1833 = vpack.c.b16 %v1814, %v1813
    %v1834 = vpack.c.b16 %v1816, %v1815
    %v1835 = vpack.c.b16 %v1818, %v1817
    %v1836 = vpack.c.b16 %v1820, %v1819
    %1853 = vmatprep.subr.bf16.mxu0 0
    %1854 = vmatpush1.bf16.msra.mxu0 %v1821
    %1855 = vmatprep.subr.bf16.mxu0 0
    %1856 = vmatpush1.bf16.msra.mxu0 %v1822
    %1857 = vmatprep.subr.bf16.mxu0 0
    %1858 = vmatpush1.bf16.msra.mxu0 %v1823
    %1859 = vmatprep.subr.bf16.mxu0 0
    %1860 = vmatpush1.bf16.msra.mxu0 %v1824
    %1861 = vmatprep.subr.bf16.mxu0 0
    %1862 = vmatpush1.bf16.msra.mxu0 %v1825
    %1863 = vmatprep.subr.bf16.mxu0 0
    %1864 = vmatpush1.bf16.msra.mxu0 %v1826
    %1865 = vmatprep.subr.bf16.mxu0 0
    %1866 = vmatpush1.bf16.msra.mxu0 %v1827
    %1867 = vmatprep.subr.bf16.mxu0 0
    %1868 = vmatpush1.bf16.msra.mxu0 %v1828
    %1869 = vmatprep.subr.bf16.mxu0 0
    %1870 = vmatpush1.bf16.msra.mxu0 %v1829
    %1871 = vmatprep.subr.bf16.mxu0 0
    %1872 = vmatpush1.bf16.msra.mxu0 %v1830
    %1873 = vmatprep.subr.bf16.mxu0 0
    %1874 = vmatpush1.bf16.msra.mxu0 %v1831
    %1875 = vmatprep.subr.bf16.mxu0 0
    %1876 = vmatpush1.bf16.msra.mxu0 %v1832
    %1877 = vmatprep.subr.bf16.mxu0 0
    %1878 = vmatpush1.bf16.msra.mxu0 %v1833
    %1879 = vmatprep.subr.bf16.mxu0 0
    %1880 = vmatpush1.bf16.msra.mxu0 %v1834
    %1881 = vmatprep.subr.bf16.mxu0 0
    %1882 = vmatpush1.bf16.msra.mxu0 %v1835
    %1883 = vmatprep.subr.bf16.mxu0 0
    %1884 = vmatpush1.bf16.msra.mxu0 %v1836
    %1885 = vmatprep.mubr.bf16.mxu0 %v1720
    %1886 = vmatmul.mubr.bf16.gmra.mrb[0].mxu0 %v1719
    %v1887 = vpop.f32.mrb[0].mxu0
    %v1888 = vadd.f32 %v1756, %v1887
    %v1889 = vpop.f32.mrb[0].mxu0
    %v1890 = vpop.f32.mrb[0].mxu0
    %v1891 = vadd.f32 %v1756, %v1890
    %v1892 = vpop.f32.mrb[0].mxu0
    %1893 = vdwg.mxu0
    %v1894 = vadd.f32 %v1453, %v1888
    %v1895 = vadd.f32 %v1454, %v1891
    %1896 = vadd.xlane.f32.xlu0 %v1894
    %v1897 = vpop.xlane.xlu0 %1896
    %1898 = vadd.xlane.f32.xlu0 %v1895
    %v1899 = vpop.xlane.xlu0 %1898
    %v1900 = vmul.f32 %v1897, %v87
    %v1901 = vmul.f32 %v1899, %v87
    %v1902 = vsub.f32 %v1894, %v1900
    %v1903 = vsub.f32 %v1895, %v1901
    %v1904 = vmul.f32 %v1902, %v1902
    %v1905 = vmul.f32 %v1903, %v1903
    %1906 = vadd.xlane.f32.xlu0 %v1904
    %v1907 = vpop.xlane.xlu0 %1906
    %1908 = vadd.xlane.f32.xlu0 %v1905
    %v1909 = vpop.xlane.xlu0 %1908
    %v1910 = vmul.f32 %v1907, %v87
    %v1911 = vmul.f32 %v1909, %v87
    %v1912 = vadd.f32 %v1910, 1e-12
    %v1913 = vadd.f32 %v1911, 1e-12
    %v1914 = vrsqrt.pop %v1912
    %v1915 = vrsqrt.pop %v1913
    %v1916 = vmul.f32 %v1902, %v1914
    %v1917 = vmul.f32 %v1903, %v1915
    %v1918 = vlaneseq
    %v1919 = vshrl.u32 %v1918, 7
    %v1920 = vsub.s32 4, %v1919
    %v1921 = vrot.slane %v118, %v1920
    %v1922 = vmul.f32 %v1916, %v1921
    %v1923 = vmul.f32 %v1917, %v1921
    %v1924 = vlaneseq
    %v1925 = vshrl.u32 %v1924, 7
    %v1926 = vsub.s32 5, %v1925
    %v1927 = vrot.slane %v118, %v1926
    %v1928 = vadd.f32 %v1922, %v1927
    %v1929 = vadd.f32 %v1923, %v1927
    %1930 = vst [vmem:[%s10] sm:$0xff] %v1928
    %1931 = vst [vmem:[%s10 + $0x8] sm:$0xff] %v1929
    // Predicated region
    $region54: #{distilbert_for_reranking_forward.2} parent=1 // pred_check
      _
    $region55: #{distilbert_for_reranking_forward.2} parent=1 // pred_check_branch
      %1933 = sbr.rel (0) target = $region57
    $region56: #{distilbert_for_reranking_forward.2} parent=1 // pred_region
      _
    $region57: #{distilbert_for_reranking_forward.2} parent=1 // pred_fallthru
      _
    // Predicated region
    $region58: #{distilbert_for_reranking_forward.2} parent=1 // pred_check
      _
    $region59: #{distilbert_for_reranking_forward.2} parent=1 // pred_check_branch
      %1935 = sbr.rel (0) target = $region61
    $region60: #{distilbert_for_reranking_forward.2} parent=1 // pred_region
      _
    $region61: #{distilbert_for_reranking_forward.2} parent=1 // pred_fallthru
      _
    %1936 = vsyncpa [#allocation4], 1
    %1937 = vsyncpa [#allocation6], 1

// kernel: distilbert_for_reranking_forward.3
$region0: #{distilbert_for_reranking_forward.3}
  #allocation0 [shape = 'u32[]', space=smem, size = 0x4, offset = 0x4, fixed_abs, tag = 'smem constant byte address 0x4 - core index']
  #allocation1 [shape = 'u32[144,128]{1,0:T(1,128)}', space=vmem, size = 0x12000, scoped, tag = 'internal scratch']
  #allocation2 [shape = 'f32[16,128]{1,0:T(8,128)}', space=vmem, size = 0x2000, scoped, tag = 'scratch operand']
  #allocation3 [shape = 'f32[1,1]{1,0:T(1,128)S(1)}', space=vmem, size = 0x200, scoped, tag = 'scoped memory for distilbert_for_reranking_forward.3']
  %s0 = inlined_call_operand.vmem [shape: f32[16,128], index: 0, kind: input, shape index: {}]
  %s1 = inlined_call_operand.vmem [shape: bf16[128,384], index: 1, kind: input, shape index: {}]
  %s2 = inlined_call_operand.vmem [shape: f32[1,384], index: 2, kind: input, shape index: {}]
  %s3 = inlined_call_operand.vmem [shape: bf16[128,128], index: 3, kind: input, shape index: {}]
  %s4 = inlined_call_operand.vmem [shape: f32[8,128], index: 4, kind: input, shape index: {}]
  %s5 = inlined_call_operand.vmem [shape: bf16[128,256], index: 5, kind: input, shape index: {}]
  %s6 = inlined_call_operand.vmem [shape: f32[1,256], index: 6, kind: input, shape index: {}]
  %s7 = inlined_call_operand.vmem [shape: bf16[256,128], index: 7, kind: input, shape index: {}]
  %s8 = inlined_call_operand.vmem [shape: f32[128,1], index: 8, kind: input, shape index: {}]
  %s9 = inlined_call_operand.<no memory space> [shape: f32[1,1], index: 9, kind: input, shape index: {}]
  %s10 = inlined_call_operand.vmem [shape: f32[16,128], index: 10, kind: output, shape index: {0}]
  %s11 = inlined_call_operand.vmem [shape: f32[16,1], index: 11, kind: output, shape index: {1}]
  %12 = xla_tuple %s10, %s11
  %s13 = sld [smem:[#allocation0]]
  $region58: #{distilbert_for_reranking_forward.3} parent=0
    _
  %s15 = ssub.s32 1, %s13
  %s16 = scalar_select 0, %s15, %s13
  %v17 = vstv %s9
  %18 = vst [vmem:[#allocation3] sm:$0x1] %v17
  // Predicated region
  $region2: #{distilbert_for_reranking_forward.3} parent=0 // pred_check
    _
  $region3: #{distilbert_for_reranking_forward.3} parent=0 // pred_check_branch
    %20 = sbr.rel (0) target = $region5
  $region4: #{distilbert_for_reranking_forward.3} parent=0 // pred_region
    _
  $region5: #{distilbert_for_reranking_forward.3} parent=0 // pred_fallthru
    _
  // Predicated region
  $region6: #{distilbert_for_reranking_forward.3} parent=0 // pred_check
    _
  $region7: #{distilbert_for_reranking_forward.3} parent=0 // pred_check_branch
    %22 = sbr.rel (0) target = $region9
  $region8: #{distilbert_for_reranking_forward.3} parent=0 // pred_region
    _
  $region9: #{distilbert_for_reranking_forward.3} parent=0 // pred_fallthru
    _
  // Predicated region
  $region10: #{distilbert_for_reranking_forward.3} parent=0 // pred_check
    _
  $region11: #{distilbert_for_reranking_forward.3} parent=0 // pred_check_branch
    %24 = sbr.rel (0) target = $region13
  $region12: #{distilbert_for_reranking_forward.3} parent=0 // pred_region
    _
  $region13: #{distilbert_for_reranking_forward.3} parent=0 // pred_fallthru
    _
  // Predicated region
  $region14: #{distilbert_for_reranking_forward.3} parent=0 // pred_check
    _
  $region15: #{distilbert_for_reranking_forward.3} parent=0 // pred_check_branch
    %26 = sbr.rel (0) target = $region17
  $region16: #{distilbert_for_reranking_forward.3} parent=0 // pred_region
    _
  $region17: #{distilbert_for_reranking_forward.3} parent=0 // pred_fallthru
    _
  // Predicated region
  $region18: #{distilbert_for_reranking_forward.3} parent=0 // pred_check
    _
  $region19: #{distilbert_for_reranking_forward.3} parent=0 // pred_check_branch
    %28 = sbr.rel (0) target = $region21
  $region20: #{distilbert_for_reranking_forward.3} parent=0 // pred_region
    _
  $region21: #{distilbert_for_reranking_forward.3} parent=0 // pred_fallthru
    _
  // Predicated region
  $region22: #{distilbert_for_reranking_forward.3} parent=0 // pred_check
    _
  $region23: #{distilbert_for_reranking_forward.3} parent=0 // pred_check_branch
    %30 = sbr.rel (0) target = $region25
  $region24: #{distilbert_for_reranking_forward.3} parent=0 // pred_region
    _
  $region25: #{distilbert_for_reranking_forward.3} parent=0 // pred_fallthru
    _
  // Predicated region
  $region26: #{distilbert_for_reranking_forward.3} parent=0 // pred_check
    _
  $region27: #{distilbert_for_reranking_forward.3} parent=0 // pred_check_branch
    %32 = sbr.rel (0) target = $region29
  $region28: #{distilbert_for_reranking_forward.3} parent=0 // pred_region
    _
  $region29: #{distilbert_for_reranking_forward.3} parent=0 // pred_fallthru
    _
  // Predicated region
  $region30: #{distilbert_for_reranking_forward.3} parent=0 // pred_check
    _
  $region31: #{distilbert_for_reranking_forward.3} parent=0 // pred_check_branch
    %34 = sbr.rel (0) target = $region33
  $region32: #{distilbert_for_reranking_forward.3} parent=0 // pred_region
    _
  $region33: #{distilbert_for_reranking_forward.3} parent=0 // pred_fallthru
    _
  // Predicated region
  $region34: #{distilbert_for_reranking_forward.3} parent=0 // pred_check
    _
  $region35: #{distilbert_for_reranking_forward.3} parent=0 // pred_check_branch
    %36 = sbr.rel (0) target = $region37
  $region36: #{distilbert_for_reranking_forward.3} parent=0 // pred_region
    _
  $region37: #{distilbert_for_reranking_forward.3} parent=0 // pred_fallthru
    _
  // Predicated region
  $region38: #{distilbert_for_reranking_forward.3} parent=0 // pred_check
    _
  $region39: #{distilbert_for_reranking_forward.3} parent=0 // pred_check_branch
    %38 = sbr.rel (0) target = $region41
  $region40: #{distilbert_for_reranking_forward.3} parent=0 // pred_region
    _
  $region41: #{distilbert_for_reranking_forward.3} parent=0 // pred_fallthru
    _
  %v40 = vld [vmem:[%s0] sm:$0xff]
  %v41 = vld [vmem:[%s0 + $0x8] sm:$0xff]
  %v42 = vld [vmem:[%s4] sm:$0xff]
  %v43 = vpack.c.bf16 %v41, %v40
  %v44 = vld [vmem:[%s1] sm:$0xff]
  %v45 = vld [vmem:[%s1 + $0x8] sm:$0xf]
  %v46 = vld [vmem:[%s1 + $0xc] sm:$0xff]
  %v47 = vld [vmem:[%s1 + $0x14] sm:$0xf]
  %v48 = vld [vmem:[%s1 + $0x18] sm:$0xff]
  %v49 = vld [vmem:[%s1 + $0x20] sm:$0xf]
  %v50 = vld [vmem:[%s1 + $0x24] sm:$0xff]
  %v51 = vld [vmem:[%s1 + $0x2c] sm:$0xf]
  %v52 = vld [vmem:[%s1 + $0x30] sm:$0xff]
  %v53 = vld [vmem:[%s1 + $0x38] sm:$0xf]
  %v54 = vld [vmem:[%s1 + $0x3c] sm:$0xff]
  %v55 = vld [vmem:[%s1 + $0x44] sm:$0xf]
  %v56 = vld [vmem:[%s1 + $0x48] sm:$0xff]
  %v57 = vld [vmem:[%s1 + $0x50] sm:$0xf]
  %v58 = vld [vmem:[%s1 + $0x54] sm:$0xff]
  %v59 = vld [vmem:[%s1 + $0x5c] sm:$0xf]
  %v60 = vld [vmem:[%s1 + $0x60] sm:$0xff]
  %v61 = vld [vmem:[%s1 + $0x68] sm:$0xf]
  %v62 = vld [vmem:[%s1 + $0x6c] sm:$0xff]
  %v63 = vld [vmem:[%s1 + $0x74] sm:$0xf]
  %v64 = vld [vmem:[%s1 + $0x78] sm:$0xff]
  %v65 = vld [vmem:[%s1 + $0x80] sm:$0xf]
  %v66 = vld [vmem:[%s1 + $0x84] sm:$0xff]
  %v67 = vld [vmem:[%s1 + $0x8c] sm:$0xf]
  %v68 = vld [vmem:[%s1 + $0x90] sm:$0xff]
  %v69 = vld [vmem:[%s1 + $0x98] sm:$0xf]
  %v70 = vld [vmem:[%s1 + $0x9c] sm:$0xff]
  %v71 = vld [vmem:[%s1 + $0xa4] sm:$0xf]
  %v72 = vld [vmem:[%s1 + $0xa8] sm:$0xff]
  %v73 = vld [vmem:[%s1 + $0xb0] sm:$0xf]
  %v74 = vld [vmem:[%s1 + $0xb4] sm:$0xff]
  %v75 = vld [vmem:[%s1 + $0xbc] sm:$0xf]
  %v76 = vld [vmem:[%s2] sm:$0x7]
  %v78 = vlaneseq
  %v79 = vshrl.u32 %v78, 7
  %v80 = vsub.s32 0, %v79
  %v81 = vrot.slane %v76, %v80
  %v82 = vlaneseq
  %v83 = vshrl.u32 %v82, 7
  %v84 = vsub.s32 1, %v83
  %v85 = vrot.slane %v76, %v84
  %v86 = vlaneseq
  %v87 = vshrl.u32 %v86, 7
  %v88 = vsub.s32 2, %v87
  %v89 = vrot.slane %v76, %v88
  %v125 = vunpack.c.l.b16 %v44
  %v126 = vunpack.c.h.b16 %v44
  %v127 = vunpack.c.l.b16 %v45
  %v128 = vunpack.c.l.b16 %v46
  %v129 = vunpack.c.h.b16 %v46
  %v130 = vunpack.c.l.b16 %v47
  %v131 = vunpack.c.l.b16 %v48
  %v132 = vunpack.c.h.b16 %v48
  %v133 = vunpack.c.l.b16 %v49
  %v134 = vunpack.c.l.b16 %v50
  %v135 = vunpack.c.h.b16 %v50
  %v136 = vunpack.c.l.b16 %v51
  %v137 = vunpack.c.l.b16 %v52
  %v138 = vunpack.c.h.b16 %v52
  %v139 = vunpack.c.l.b16 %v53
  %v140 = vunpack.c.l.b16 %v54
  %v141 = vunpack.c.h.b16 %v54
  %v142 = vunpack.c.l.b16 %v55
  %v143 = vunpack.c.l.b16 %v56
  %v144 = vunpack.c.h.b16 %v56
  %v145 = vunpack.c.l.b16 %v57
  %v146 = vunpack.c.l.b16 %v58
  %v147 = vunpack.c.h.b16 %v58
  %v148 = vunpack.c.l.b16 %v59
  %v149 = vunpack.c.l.b16 %v60
  %v150 = vunpack.c.h.b16 %v60
  %v151 = vunpack.c.l.b16 %v61
  %v152 = vunpack.c.l.b16 %v62
  %v153 = vunpack.c.h.b16 %v62
  %v154 = vunpack.c.l.b16 %v63
  %v155 = vunpack.c.l.b16 %v64
  %v156 = vunpack.c.h.b16 %v64
  %v157 = vunpack.c.l.b16 %v65
  %v158 = vunpack.c.l.b16 %v66
  %v159 = vunpack.c.h.b16 %v66
  %v160 = vunpack.c.l.b16 %v67
  %v161 = vunpack.c.l.b16 %v68
  %v162 = vunpack.c.h.b16 %v68
  %v163 = vunpack.c.l.b16 %v69
  %v164 = vunpack.c.l.b16 %v70
  %v165 = vunpack.c.h.b16 %v70
  %v166 = vunpack.c.l.b16 %v71
  %v167 = vunpack.c.l.b16 %v72
  %v168 = vunpack.c.h.b16 %v72
  %v169 = vunpack.c.l.b16 %v73
  %v170 = vunpack.c.l.b16 %v74
  %v171 = vunpack.c.h.b16 %v74
  %v172 = vunpack.c.l.b16 %v75
  %v173 = vpack.c.b16 %v128, %v125
  %v174 = vpack.c.b16 %v129, %v126
  %v175 = vpack.c.b16 %v130, %v127
  %v176 = vpack.c.b16 %v134, %v131
  %v177 = vpack.c.b16 %v135, %v132
  %v178 = vpack.c.b16 %v136, %v133
  %v179 = vpack.c.b16 %v140, %v137
  %v180 = vpack.c.b16 %v141, %v138
  %v181 = vpack.c.b16 %v142, %v139
  %v182 = vpack.c.b16 %v146, %v143
  %v183 = vpack.c.b16 %v147, %v144
  %v184 = vpack.c.b16 %v148, %v145
  %v185 = vpack.c.b16 %v152, %v149
  %v186 = vpack.c.b16 %v153, %v150
  %v187 = vpack.c.b16 %v154, %v151
  %v188 = vpack.c.b16 %v158, %v155
  %v189 = vpack.c.b16 %v159, %v156
  %v190 = vpack.c.b16 %v160, %v157
  %v191 = vpack.c.b16 %v164, %v161
  %v192 = vpack.c.b16 %v165, %v162
  %v193 = vpack.c.b16 %v166, %v163
  %v194 = vpack.c.b16 %v170, %v167
  %v195 = vpack.c.b16 %v171, %v168
  %v196 = vpack.c.b16 %v172, %v169
  %221 = vmatprep.subr.bf16.mxu0 %v174
  %222 = vmatpush1.bf16.msra.mxu0 %v173
  %223 = vmatprep.subr.bf16.mxu0 %v177
  %224 = vmatpush1.bf16.msra.mxu0 %v176
  %225 = vmatprep.subr.bf16.mxu0 %v180
  %226 = vmatpush1.bf16.msra.mxu0 %v179
  %227 = vmatprep.subr.bf16.mxu0 %v183
  %228 = vmatpush1.bf16.msra.mxu0 %v182
  %229 = vmatprep.subr.bf16.mxu0 %v186
  %230 = vmatpush1.bf16.msra.mxu0 %v185
  %231 = vmatprep.subr.bf16.mxu0 %v189
  %232 = vmatpush1.bf16.msra.mxu0 %v188
  %233 = vmatprep.subr.bf16.mxu0 %v192
  %234 = vmatpush1.bf16.msra.mxu0 %v191
  %235 = vmatprep.subr.bf16.mxu0 %v195
  %236 = vmatpush1.bf16.msra.mxu0 %v194
  %237 = vmatprep.subr.bf16.mxu0 0
  %238 = vmatpush1.bf16.msra.mxu0 0
  %239 = vmatprep.subr.bf16.mxu0 0
  %240 = vmatpush1.bf16.msra.mxu0 0
  %241 = vmatprep.subr.bf16.mxu0 0
  %242 = vmatpush1.bf16.msra.mxu0 0
  %243 = vmatprep.subr.bf16.mxu0 0
  %244 = vmatpush1.bf16.msra.mxu0 0
  %245 = vmatprep.subr.bf16.mxu0 0
  %246 = vmatpush1.bf16.msra.mxu0 0
  %247 = vmatprep.subr.bf16.mxu0 0
  %248 = vmatpush1.bf16.msra.mxu0 0
  %249 = vmatprep.subr.bf16.mxu0 0
  %250 = vmatpush1.bf16.msra.mxu0 0
  %251 = vmatprep.subr.bf16.mxu0 0
  %252 = vmatpush1.bf16.msra.mxu0 0
  %253 = vmatprep.mubr.bf16.mxu0 0
  %254 = vmatmul.mubr.bf16.gmra.mrb[0].mxu0 %v43
  %v255 = vpop.f32.mrb[0].mxu0
  %v256 = vadd.f32 %v81, %v255
  %v257 = vpop.f32.mrb[0].mxu0
  %v258 = vadd.f32 %v85, %v257
  %v259 = vpop.f32.mrb[0].mxu0
  %v260 = vadd.f32 %v81, %v259
  %v261 = vpop.f32.mrb[0].mxu0
  %v262 = vadd.f32 %v85, %v261
  %263 = vdwg.mxu0
  %264 = vmatprep.subr.bf16.mxu0 0
  %265 = vmatpush1.bf16.msra.mxu0 %v175
  %266 = vmatprep.subr.bf16.mxu0 0
  %267 = vmatpush1.bf16.msra.mxu0 %v178
  %268 = vmatprep.subr.bf16.mxu0 0
  %269 = vmatpush1.bf16.msra.mxu0 %v181
  %270 = vmatprep.subr.bf16.mxu0 0
  %271 = vmatpush1.bf16.msra.mxu0 %v184
  %272 = vmatprep.subr.bf16.mxu0 0
  %273 = vmatpush1.bf16.msra.mxu0 %v187
  %274 = vmatprep.subr.bf16.mxu0 0
  %275 = vmatpush1.bf16.msra.mxu0 %v190
  %276 = vmatprep.subr.bf16.mxu0 0
  %277 = vmatpush1.bf16.msra.mxu0 %v193
  %278 = vmatprep.subr.bf16.mxu0 0
  %279 = vmatpush1.bf16.msra.mxu0 %v196
  %280 = vmatprep.subr.bf16.mxu0 0
  %281 = vmatpush1.bf16.msra.mxu0 0
  %282 = vmatprep.subr.bf16.mxu0 0
  %283 = vmatpush1.bf16.msra.mxu0 0
  %284 = vmatprep.subr.bf16.mxu0 0
  %285 = vmatpush1.bf16.msra.mxu0 0
  %286 = vmatprep.subr.bf16.mxu0 0
  %287 = vmatpush1.bf16.msra.mxu0 0
  %288 = vmatprep.subr.bf16.mxu0 0
  %289 = vmatpush1.bf16.msra.mxu0 0
  %290 = vmatprep.subr.bf16.mxu0 0
  %291 = vmatpush1.bf16.msra.mxu0 0
  %292 = vmatprep.subr.bf16.mxu0 0
  %293 = vmatpush1.bf16.msra.mxu0 0
  %294 = vmatprep.subr.bf16.mxu0 0
  %295 = vmatpush1.bf16.msra.mxu0 0
  %296 = vmatprep.mubr.bf16.mxu0 0
  %297 = vmatmul.mubr.bf16.gmra.mrb[0].mxu0 %v43
  %v298 = vpop.f32.mrb[0].mxu0
  %v299 = vadd.f32 %v89, %v298
  %v300 = vpop.f32.mrb[0].mxu0
  %v301 = vpop.f32.mrb[0].mxu0
  %v302 = vadd.f32 %v89, %v301
  %v303 = vpop.f32.mrb[0].mxu0
  %304 = vdwg.mxu0
  %v305 = vpack.c.bf16 %v256, %v256
  %v306 = vpack.c.bf16 %v260, %v260
  %v307 = vpack.c.bf16 %v258, %v258
  %v308 = vpack.c.bf16 %v262, %v262
  %v309 = vpack.c.bf16 %v299, %v299
  %v310 = vpack.c.bf16 %v302, %v302
  %vm311 = vcmask 261120
  %v313 = vsel %vm311, %v305, 0
  %v316 = vsel %vm311, %v307, 0
  %318 = vmatprep.subr.bf16.mxu0 0
  %319 = vmatpush1.bf16.xpose.msra.mxu0 %v316
  %320 = vmatprep.subr.bf16.mxu0 0
  %321 = vmatpush1.bf16.xpose.msra.mxu0 0
  %322 = vmatprep.subr.bf16.mxu0 0
  %323 = vmatpush1.bf16.xpose.msra.mxu0 0
  %324 = vmatprep.subr.bf16.mxu0 0
  %325 = vmatpush1.bf16.xpose.msra.mxu0 0
  %326 = vmatprep.subr.bf16.mxu0 0
  %327 = vmatpush1.bf16.xpose.msra.mxu0 0
  %328 = vmatprep.subr.bf16.mxu0 0
  %329 = vmatpush1.bf16.xpose.msra.mxu0 0
  %330 = vmatprep.subr.bf16.mxu0 0
  %331 = vmatpush1.bf16.xpose.msra.mxu0 0
  %332 = vmatprep.subr.bf16.mxu0 0
  %333 = vmatpush1.bf16.xpose.msra.mxu0 0
  %334 = vmatprep.subr.bf16.mxu0 0
  %335 = vmatpush1.bf16.xpose.msra.mxu0 0
  %336 = vmatprep.subr.bf16.mxu0 0
  %337 = vmatpush1.bf16.xpose.msra.mxu0 0
  %338 = vmatprep.subr.bf16.mxu0 0
  %339 = vmatpush1.bf16.xpose.msra.mxu0 0
  %340 = vmatprep.subr.bf16.mxu0 0
  %341 = vmatpush1.bf16.xpose.msra.mxu0 0
  %342 = vmatprep.subr.bf16.mxu0 0
  %343 = vmatpush1.bf16.xpose.msra.mxu0 0
  %344 = vmatprep.subr.bf16.mxu0 0
  %345 = vmatpush1.bf16.xpose.msra.mxu0 0
  %346 = vmatprep.subr.bf16.mxu0 0
  %347 = vmatpush1.bf16.xpose.msra.mxu0 0
  %348 = vmatprep.subr.bf16.mxu0 0
  %349 = vmatpush1.bf16.xpose.msra.mxu0 0
  %350 = vmatprep.mubr.bf16.mxu0 0
  %351 = vmatmul.mubr.bf16.gmra.mrb[0].mxu0 %v313
  %v352 = vpop.f32.mrb[0].mxu0
  %v353 = vadd.f32 0.0, %v352
  %v354 = vpop.f32.mrb[0].mxu0
  %v355 = vpop.f32.mrb[0].mxu0
  %v356 = vpop.f32.mrb[0].mxu0
  %357 = vdwg.mxu0
  %v359 = vsel %vm311, %v306, 0
  %v362 = vsel %vm311, %v308, 0
  %364 = vmatprep.subr.bf16.mxu0 0
  %365 = vmatpush1.bf16.xpose.msra.mxu0 %v362
  %366 = vmatprep.subr.bf16.mxu0 0
  %367 = vmatpush1.bf16.xpose.msra.mxu0 0
  %368 = vmatprep.subr.bf16.mxu0 0
  %369 = vmatpush1.bf16.xpose.msra.mxu0 0
  %370 = vmatprep.subr.bf16.mxu0 0
  %371 = vmatpush1.bf16.xpose.msra.mxu0 0
  %372 = vmatprep.subr.bf16.mxu0 0
  %373 = vmatpush1.bf16.xpose.msra.mxu0 0
  %374 = vmatprep.subr.bf16.mxu0 0
  %375 = vmatpush1.bf16.xpose.msra.mxu0 0
  %376 = vmatprep.subr.bf16.mxu0 0
  %377 = vmatpush1.bf16.xpose.msra.mxu0 0
  %378 = vmatprep.subr.bf16.mxu0 0
  %379 = vmatpush1.bf16.xpose.msra.mxu0 0
  %380 = vmatprep.subr.bf16.mxu0 0
  %381 = vmatpush1.bf16.xpose.msra.mxu0 0
  %382 = vmatprep.subr.bf16.mxu0 0
  %383 = vmatpush1.bf16.xpose.msra.mxu0 0
  %384 = vmatprep.subr.bf16.mxu0 0
  %385 = vmatpush1.bf16.xpose.msra.mxu0 0
  %386 = vmatprep.subr.bf16.mxu0 0
  %387 = vmatpush1.bf16.xpose.msra.mxu0 0
  %388 = vmatprep.subr.bf16.mxu0 0
  %389 = vmatpush1.bf16.xpose.msra.mxu0 0
  %390 = vmatprep.subr.bf16.mxu0 0
  %391 = vmatpush1.bf16.xpose.msra.mxu0 0
  %392 = vmatprep.subr.bf16.mxu0 0
  %393 = vmatpush1.bf16.xpose.msra.mxu0 0
  %394 = vmatprep.subr.bf16.mxu0 0
  %395 = vmatpush1.bf16.xpose.msra.mxu0 0
  %396 = vmatprep.mubr.bf16.mxu0 0
  %397 = vmatmul.mubr.bf16.gmra.mrb[0].mxu0 %v359
  %v398 = vpop.f32.mrb[0].mxu0
  %v399 = vadd.f32 0.0, %v398
  %v400 = vpop.f32.mrb[0].mxu0
  %v401 = vpop.f32.mrb[0].mxu0
  %v402 = vpop.f32.mrb[0].mxu0
  %403 = vdwg.mxu0
  %v404 = vmul.f32 %v353, 0.17677669
  %v405 = vmul.f32 %v399, 0.17677669
  %vm406 = vcmask 64512
  %v407 = vsel %vm406, %v404, -inf
  %408 = vmax.xlane.f32.xlu0 %v407
  %v409 = vpop.xlane.xlu0 %408
  %v410 = vsel %vm406, %v405, -inf
  %411 = vmax.xlane.f32.xlu0 %v410
  %v412 = vpop.xlane.xlu0 %411
  %v413 = vsub.f32 %v404, %v409
  %v414 = vsub.f32 %v405, %v412
  %v415 = vmul.f32 %v413, 1.442695
  %v416 = vpow.pop %v415
  %v417 = vmul.f32 %v414, 1.442695
  %v418 = vpow.pop %v417
  %v419 = vsel %vm406, %v416, 0.0
  %420 = vadd.xlane.f32.xlu0 %v419
  %v421 = vpop.xlane.xlu0 %420
  %v422 = vsel %vm406, %v418, 0.0
  %423 = vadd.xlane.f32.xlu0 %v422
  %v424 = vpop.xlane.xlu0 %423
  %v425 = vrcp.pop %v421
  %v426 = vrcp.pop %v424
  %v427 = vmul.f32 %v416, %v425
  %v428 = vmul.f32 %v418, %v426
  %v429 = vpack.c.bf16 %v427, %v427
  %v430 = vpack.c.bf16 %v428, %v428
  %v432 = vsel %vm406, %v429, 0
  %vm434 = vcmask 1043456
  %v436 = vsel %vm434, %v309, 0
  %438 = vmatprep.subr.bf16.mxu0 0
  %439 = vmatpush1.bf16.msra.mxu0 %v436
  %440 = vmatprep.subr.bf16.mxu0 0
  %441 = vmatpush1.bf16.msra.mxu0 0
  %442 = vmatprep.subr.bf16.mxu0 0
  %443 = vmatpush1.bf16.msra.mxu0 0
  %444 = vmatprep.subr.bf16.mxu0 0
  %445 = vmatpush1.bf16.msra.mxu0 0
  %446 = vmatprep.subr.bf16.mxu0 0
  %447 = vmatpush1.bf16.msra.mxu0 0
  %448 = vmatprep.subr.bf16.mxu0 0
  %449 = vmatpush1.bf16.msra.mxu0 0
  %450 = vmatprep.subr.bf16.mxu0 0
  %451 = vmatpush1.bf16.msra.mxu0 0
  %452 = vmatprep.subr.bf16.mxu0 0
  %453 = vmatpush1.bf16.msra.mxu0 0
  %454 = vmatprep.subr.bf16.mxu0 0
  %455 = vmatpush1.bf16.msra.mxu0 0
  %456 = vmatprep.subr.bf16.mxu0 0
  %457 = vmatpush1.bf16.msra.mxu0 0
  %458 = vmatprep.subr.bf16.mxu0 0
  %459 = vmatpush1.bf16.msra.mxu0 0
  %460 = vmatprep.subr.bf16.mxu0 0
  %461 = vmatpush1.bf16.msra.mxu0 0
  %462 = vmatprep.subr.bf16.mxu0 0
  %463 = vmatpush1.bf16.msra.mxu0 0
  %464 = vmatprep.subr.bf16.mxu0 0
  %465 = vmatpush1.bf16.msra.mxu0 0
  %466 = vmatprep.subr.bf16.mxu0 0
  %467 = vmatpush1.bf16.msra.mxu0 0
  %468 = vmatprep.subr.bf16.mxu0 0
  %469 = vmatpush1.bf16.msra.mxu0 0
  %470 = vmatprep.mubr.bf16.mxu0 0
  %471 = vmatmul.mubr.bf16.gmra.mrb[0].mxu0 %v432
  %v472 = vpop.f32.mrb[0].mxu0
  %v473 = vadd.f32 0.0, %v472
  %v474 = vpop.f32.mrb[0].mxu0
  %v475 = vpop.f32.mrb[0].mxu0
  %v476 = vpop.f32.mrb[0].mxu0
  %477 = vdwg.mxu0
  %v479 = vsel %vm406, %v430, 0
  %v482 = vsel %vm434, %v310, 0
  %484 = vmatprep.subr.bf16.mxu0 0
  %485 = vmatpush1.bf16.msra.mxu0 %v482
  %486 = vmatprep.subr.bf16.mxu0 0
  %487 = vmatpush1.bf16.msra.mxu0 0
  %488 = vmatprep.subr.bf16.mxu0 0
  %489 = vmatpush1.bf16.msra.mxu0 0
  %490 = vmatprep.subr.bf16.mxu0 0
  %491 = vmatpush1.bf16.msra.mxu0 0
  %492 = vmatprep.subr.bf16.mxu0 0
  %493 = vmatpush1.bf16.msra.mxu0 0
  %494 = vmatprep.subr.bf16.mxu0 0
  %495 = vmatpush1.bf16.msra.mxu0 0
  %496 = vmatprep.subr.bf16.mxu0 0
  %497 = vmatpush1.bf16.msra.mxu0 0
  %498 = vmatprep.subr.bf16.mxu0 0
  %499 = vmatpush1.bf16.msra.mxu0 0
  %500 = vmatprep.subr.bf16.mxu0 0
  %501 = vmatpush1.bf16.msra.mxu0 0
  %502 = vmatprep.subr.bf16.mxu0 0
  %503 = vmatpush1.bf16.msra.mxu0 0
  %504 = vmatprep.subr.bf16.mxu0 0
  %505 = vmatpush1.bf16.msra.mxu0 0
  %506 = vmatprep.subr.bf16.mxu0 0
  %507 = vmatpush1.bf16.msra.mxu0 0
  %508 = vmatprep.subr.bf16.mxu0 0
  %509 = vmatpush1.bf16.msra.mxu0 0
  %510 = vmatprep.subr.bf16.mxu0 0
  %511 = vmatpush1.bf16.msra.mxu0 0
  %512 = vmatprep.subr.bf16.mxu0 0
  %513 = vmatpush1.bf16.msra.mxu0 0
  %514 = vmatprep.subr.bf16.mxu0 0
  %515 = vmatpush1.bf16.msra.mxu0 0
  %516 = vmatprep.mubr.bf16.mxu0 0
  %517 = vmatmul.mubr.bf16.gmra.mrb[0].mxu0 %v479
  %v518 = vpop.f32.mrb[0].mxu0
  %v519 = vadd.f32 0.0, %v518
  %v520 = vpop.f32.mrb[0].mxu0
  %v521 = vpop.f32.mrb[0].mxu0
  %v522 = vpop.f32.mrb[0].mxu0
  %523 = vdwg.mxu0
  %524 = vst.msk [vmem:[#allocation2] sm:$0xff] %vm311, %v473
  %525 = vst.msk [vmem:[#allocation2 + $0x8] sm:$0xff] %vm311, %v519
  %527 = vrot.lane.b32.xlu0 %v305, 96
  %v528 = vpop.permute.xlu0 %527
  %530 = vrot.lane.b32.xlu0 %v307, 96
  %v531 = vpop.permute.xlu0 %530
  %v533 = vsel %vm311, %v528, 0
  %v536 = vsel %vm311, %v531, 0
  %538 = vmatprep.subr.bf16.mxu0 0
  %539 = vmatpush1.bf16.xpose.msra.mxu0 %v536
  %540 = vmatprep.subr.bf16.mxu0 0
  %541 = vmatpush1.bf16.xpose.msra.mxu0 0
  %542 = vmatprep.subr.bf16.mxu0 0
  %543 = vmatpush1.bf16.xpose.msra.mxu0 0
  %544 = vmatprep.subr.bf16.mxu0 0
  %545 = vmatpush1.bf16.xpose.msra.mxu0 0
  %546 = vmatprep.subr.bf16.mxu0 0
  %547 = vmatpush1.bf16.xpose.msra.mxu0 0
  %548 = vmatprep.subr.bf16.mxu0 0
  %549 = vmatpush1.bf16.xpose.msra.mxu0 0
  %550 = vmatprep.subr.bf16.mxu0 0
  %551 = vmatpush1.bf16.xpose.msra.mxu0 0
  %552 = vmatprep.subr.bf16.mxu0 0
  %553 = vmatpush1.bf16.xpose.msra.mxu0 0
  %554 = vmatprep.subr.bf16.mxu0 0
  %555 = vmatpush1.bf16.xpose.msra.mxu0 0
  %556 = vmatprep.subr.bf16.mxu0 0
  %557 = vmatpush1.bf16.xpose.msra.mxu0 0
  %558 = vmatprep.subr.bf16.mxu0 0
  %559 = vmatpush1.bf16.xpose.msra.mxu0 0
  %560 = vmatprep.subr.bf16.mxu0 0
  %561 = vmatpush1.bf16.xpose.msra.mxu0 0
  %562 = vmatprep.subr.bf16.mxu0 0
  %563 = vmatpush1.bf16.xpose.msra.mxu0 0
  %564 = vmatprep.subr.bf16.mxu0 0
  %565 = vmatpush1.bf16.xpose.msra.mxu0 0
  %566 = vmatprep.subr.bf16.mxu0 0
  %567 = vmatpush1.bf16.xpose.msra.mxu0 0
  %568 = vmatprep.subr.bf16.mxu0 0
  %569 = vmatpush1.bf16.xpose.msra.mxu0 0
  %570 = vmatprep.mubr.bf16.mxu0 0
  %571 = vmatmul.mubr.bf16.gmra.mrb[0].mxu0 %v533
  %v572 = vpop.f32.mrb[0].mxu0
  %v573 = vadd.f32 0.0, %v572
  %v574 = vpop.f32.mrb[0].mxu0
  %v575 = vpop.f32.mrb[0].mxu0
  %v576 = vpop.f32.mrb[0].mxu0
  %577 = vdwg.mxu0
  %579 = vrot.lane.b32.xlu0 %v306, 96
  %v580 = vpop.permute.xlu0 %579
  %582 = vrot.lane.b32.xlu0 %v308, 96
  %v583 = vpop.permute.xlu0 %582
  %v585 = vsel %vm311, %v580, 0
  %v588 = vsel %vm311, %v583, 0
  %590 = vmatprep.subr.bf16.mxu0 0
  %591 = vmatpush1.bf16.xpose.msra.mxu0 %v588
  %592 = vmatprep.subr.bf16.mxu0 0
  %593 = vmatpush1.bf16.xpose.msra.mxu0 0
  %594 = vmatprep.subr.bf16.mxu0 0
  %595 = vmatpush1.bf16.xpose.msra.mxu0 0
  %596 = vmatprep.subr.bf16.mxu0 0
  %597 = vmatpush1.bf16.xpose.msra.mxu0 0
  %598 = vmatprep.subr.bf16.mxu0 0
  %599 = vmatpush1.bf16.xpose.msra.mxu0 0
  %600 = vmatprep.subr.bf16.mxu0 0
  %601 = vmatpush1.bf16.xpose.msra.mxu0 0
  %602 = vmatprep.subr.bf16.mxu0 0
  %603 = vmatpush1.bf16.xpose.msra.mxu0 0
  %604 = vmatprep.subr.bf16.mxu0 0
  %605 = vmatpush1.bf16.xpose.msra.mxu0 0
  %606 = vmatprep.subr.bf16.mxu0 0
  %607 = vmatpush1.bf16.xpose.msra.mxu0 0
  %608 = vmatprep.subr.bf16.mxu0 0
  %609 = vmatpush1.bf16.xpose.msra.mxu0 0
  %610 = vmatprep.subr.bf16.mxu0 0
  %611 = vmatpush1.bf16.xpose.msra.mxu0 0
  %612 = vmatprep.subr.bf16.mxu0 0
  %613 = vmatpush1.bf16.xpose.msra.mxu0 0
  %614 = vmatprep.subr.bf16.mxu0 0
  %615 = vmatpush1.bf16.xpose.msra.mxu0 0
  %616 = vmatprep.subr.bf16.mxu0 0
  %617 = vmatpush1.bf16.xpose.msra.mxu0 0
  %618 = vmatprep.subr.bf16.mxu0 0
  %619 = vmatpush1.bf16.xpose.msra.mxu0 0
  %620 = vmatprep.subr.bf16.mxu0 0
  %621 = vmatpush1.bf16.xpose.msra.mxu0 0
  %622 = vmatprep.mubr.bf16.mxu0 0
  %623 = vmatmul.mubr.bf16.gmra.mrb[0].mxu0 %v585
  %v624 = vpop.f32.mrb[0].mxu0
  %v625 = vadd.f32 0.0, %v624
  %v626 = vpop.f32.mrb[0].mxu0
  %v627 = vpop.f32.mrb[0].mxu0
  %v628 = vpop.f32.mrb[0].mxu0
  %629 = vdwg.mxu0
  %v630 = vmul.f32 %v573, 0.17677669
  %v631 = vmul.f32 %v625, 0.17677669
  %v632 = vsel %vm406, %v630, -inf
  %633 = vmax.xlane.f32.xlu0 %v632
  %v634 = vpop.xlane.xlu0 %633
  %v635 = vsel %vm406, %v631, -inf
  %636 = vmax.xlane.f32.xlu0 %v635
  %v637 = vpop.xlane.xlu0 %636
  %v638 = vsub.f32 %v630, %v634
  %v639 = vsub.f32 %v631, %v637
  %v640 = vmul.f32 %v638, 1.442695
  %v641 = vpow.pop %v640
  %v642 = vmul.f32 %v639, 1.442695
  %v643 = vpow.pop %v642
  %v644 = vsel %vm406, %v641, 0.0
  %645 = vadd.xlane.f32.xlu0 %v644
  %v646 = vpop.xlane.xlu0 %645
  %v647 = vsel %vm406, %v643, 0.0
  %648 = vadd.xlane.f32.xlu0 %v647
  %v649 = vpop.xlane.xlu0 %648
  %v650 = vrcp.pop %v646
  %v651 = vrcp.pop %v649
  %v652 = vmul.f32 %v641, %v650
  %v653 = vmul.f32 %v643, %v651
  %v654 = vpack.c.bf16 %v652, %v652
  %v655 = vpack.c.bf16 %v653, %v653
  %657 = vrot.lane.b32.xlu0 %v309, 96
  %v658 = vpop.permute.xlu0 %657
  %v660 = vsel %vm406, %v654, 0
  %v663 = vsel %vm434, %v658, 0
  %665 = vmatprep.subr.bf16.mxu0 0
  %666 = vmatpush1.bf16.msra.mxu0 %v663
  %667 = vmatprep.subr.bf16.mxu0 0
  %668 = vmatpush1.bf16.msra.mxu0 0
  %669 = vmatprep.subr.bf16.mxu0 0
  %670 = vmatpush1.bf16.msra.mxu0 0
  %671 = vmatprep.subr.bf16.mxu0 0
  %672 = vmatpush1.bf16.msra.mxu0 0
  %673 = vmatprep.subr.bf16.mxu0 0
  %674 = vmatpush1.bf16.msra.mxu0 0
  %675 = vmatprep.subr.bf16.mxu0 0
  %676 = vmatpush1.bf16.msra.mxu0 0
  %677 = vmatprep.subr.bf16.mxu0 0
  %678 = vmatpush1.bf16.msra.mxu0 0
  %679 = vmatprep.subr.bf16.mxu0 0
  %680 = vmatpush1.bf16.msra.mxu0 0
  %681 = vmatprep.subr.bf16.mxu0 0
  %682 = vmatpush1.bf16.msra.mxu0 0
  %683 = vmatprep.subr.bf16.mxu0 0
  %684 = vmatpush1.bf16.msra.mxu0 0
  %685 = vmatprep.subr.bf16.mxu0 0
  %686 = vmatpush1.bf16.msra.mxu0 0
  %687 = vmatprep.subr.bf16.mxu0 0
  %688 = vmatpush1.bf16.msra.mxu0 0
  %689 = vmatprep.subr.bf16.mxu0 0
  %690 = vmatpush1.bf16.msra.mxu0 0
  %691 = vmatprep.subr.bf16.mxu0 0
  %692 = vmatpush1.bf16.msra.mxu0 0
  %693 = vmatprep.subr.bf16.mxu0 0
  %694 = vmatpush1.bf16.msra.mxu0 0
  %695 = vmatprep.subr.bf16.mxu0 0
  %696 = vmatpush1.bf16.msra.mxu0 0
  %697 = vmatprep.mubr.bf16.mxu0 0
  %698 = vmatmul.mubr.bf16.gmra.mrb[0].mxu0 %v660
  %v699 = vpop.f32.mrb[0].mxu0
  %v700 = vadd.f32 0.0, %v699
  %v701 = vpop.f32.mrb[0].mxu0
  %v702 = vpop.f32.mrb[0].mxu0
  %v703 = vpop.f32.mrb[0].mxu0
  %704 = vdwg.mxu0
  %706 = vrot.lane.b32.xlu0 %v310, 96
  %v707 = vpop.permute.xlu0 %706
  %v709 = vsel %vm406, %v655, 0
  %v712 = vsel %vm434, %v707, 0
  %714 = vmatprep.subr.bf16.mxu0 0
  %715 = vmatpush1.bf16.msra.mxu0 %v712
  %716 = vmatprep.subr.bf16.mxu0 0
  %717 = vmatpush1.bf16.msra.mxu0 0
  %718 = vmatprep.subr.bf16.mxu0 0
  %719 = vmatpush1.bf16.msra.mxu0 0
  %720 = vmatprep.subr.bf16.mxu0 0
  %721 = vmatpush1.bf16.msra.mxu0 0
  %722 = vmatprep.subr.bf16.mxu0 0
  %723 = vmatpush1.bf16.msra.mxu0 0
  %724 = vmatprep.subr.bf16.mxu0 0
  %725 = vmatpush1.bf16.msra.mxu0 0
  %726 = vmatprep.subr.bf16.mxu0 0
  %727 = vmatpush1.bf16.msra.mxu0 0
  %728 = vmatprep.subr.bf16.mxu0 0
  %729 = vmatpush1.bf16.msra.mxu0 0
  %730 = vmatprep.subr.bf16.mxu0 0
  %731 = vmatpush1.bf16.msra.mxu0 0
  %732 = vmatprep.subr.bf16.mxu0 0
  %733 = vmatpush1.bf16.msra.mxu0 0
  %734 = vmatprep.subr.bf16.mxu0 0
  %735 = vmatpush1.bf16.msra.mxu0 0
  %736 = vmatprep.subr.bf16.mxu0 0
  %737 = vmatpush1.bf16.msra.mxu0 0
  %738 = vmatprep.subr.bf16.mxu0 0
  %739 = vmatpush1.bf16.msra.mxu0 0
  %740 = vmatprep.subr.bf16.mxu0 0
  %741 = vmatpush1.bf16.msra.mxu0 0
  %742 = vmatprep.subr.bf16.mxu0 0
  %743 = vmatpush1.bf16.msra.mxu0 0
  %744 = vmatprep.subr.bf16.mxu0 0
  %745 = vmatpush1.bf16.msra.mxu0 0
  %746 = vmatprep.mubr.bf16.mxu0 0
  %747 = vmatmul.mubr.bf16.gmra.mrb[0].mxu0 %v709
  %v748 = vpop.f32.mrb[0].mxu0
  %v749 = vadd.f32 0.0, %v748
  %v750 = vpop.f32.mrb[0].mxu0
  %v751 = vpop.f32.mrb[0].mxu0
  %v752 = vpop.f32.mrb[0].mxu0
  %753 = vdwg.mxu0
  %756 = vrot.lane.b32.xlu0 %v700, 32
  %v757 = vpop.permute.xlu0 %756
  %758 = vrot.lane.b32.xlu0 %v749, 32
  %v759 = vpop.permute.xlu0 %758
  %vm762 = vcmask 523520
  %763 = vst.msk [vmem:[#allocation2] sm:$0xff] %vm762, %v757
  %764 = vst.msk [vmem:[#allocation2 + $0x8] sm:$0xff] %vm762, %v759
  %765 = vrot.lane.b32.xlu0 %v305, 64
  %v766 = vpop.permute.xlu0 %765
  %767 = vrot.lane.b32.xlu0 %v307, 64
  %v768 = vpop.permute.xlu0 %767
  %v770 = vsel %vm311, %v766, 0
  %v773 = vsel %vm311, %v768, 0
  %775 = vmatprep.subr.bf16.mxu0 0
  %776 = vmatpush1.bf16.xpose.msra.mxu0 %v773
  %777 = vmatprep.subr.bf16.mxu0 0
  %778 = vmatpush1.bf16.xpose.msra.mxu0 0
  %779 = vmatprep.subr.bf16.mxu0 0
  %780 = vmatpush1.bf16.xpose.msra.mxu0 0
  %781 = vmatprep.subr.bf16.mxu0 0
  %782 = vmatpush1.bf16.xpose.msra.mxu0 0
  %783 = vmatprep.subr.bf16.mxu0 0
  %784 = vmatpush1.bf16.xpose.msra.mxu0 0
  %785 = vmatprep.subr.bf16.mxu0 0
  %786 = vmatpush1.bf16.xpose.msra.mxu0 0
  %787 = vmatprep.subr.bf16.mxu0 0
  %788 = vmatpush1.bf16.xpose.msra.mxu0 0
  %789 = vmatprep.subr.bf16.mxu0 0
  %790 = vmatpush1.bf16.xpose.msra.mxu0 0
  %791 = vmatprep.subr.bf16.mxu0 0
  %792 = vmatpush1.bf16.xpose.msra.mxu0 0
  %793 = vmatprep.subr.bf16.mxu0 0
  %794 = vmatpush1.bf16.xpose.msra.mxu0 0
  %795 = vmatprep.subr.bf16.mxu0 0
  %796 = vmatpush1.bf16.xpose.msra.mxu0 0
  %797 = vmatprep.subr.bf16.mxu0 0
  %798 = vmatpush1.bf16.xpose.msra.mxu0 0
  %799 = vmatprep.subr.bf16.mxu0 0
  %800 = vmatpush1.bf16.xpose.msra.mxu0 0
  %801 = vmatprep.subr.bf16.mxu0 0
  %802 = vmatpush1.bf16.xpose.msra.mxu0 0
  %803 = vmatprep.subr.bf16.mxu0 0
  %804 = vmatpush1.bf16.xpose.msra.mxu0 0
  %805 = vmatprep.subr.bf16.mxu0 0
  %806 = vmatpush1.bf16.xpose.msra.mxu0 0
  %807 = vmatprep.mubr.bf16.mxu0 0
  %808 = vmatmul.mubr.bf16.gmra.mrb[0].mxu0 %v770
  %v809 = vpop.f32.mrb[0].mxu0
  %v810 = vadd.f32 0.0, %v809
  %v811 = vpop.f32.mrb[0].mxu0
  %v812 = vpop.f32.mrb[0].mxu0
  %v813 = vpop.f32.mrb[0].mxu0
  %814 = vdwg.mxu0
  %815 = vrot.lane.b32.xlu0 %v306, 64
  %v816 = vpop.permute.xlu0 %815
  %817 = vrot.lane.b32.xlu0 %v308, 64
  %v818 = vpop.permute.xlu0 %817
  %v820 = vsel %vm311, %v816, 0
  %v823 = vsel %vm311, %v818, 0
  %825 = vmatprep.subr.bf16.mxu0 0
  %826 = vmatpush1.bf16.xpose.msra.mxu0 %v823
  %827 = vmatprep.subr.bf16.mxu0 0
  %828 = vmatpush1.bf16.xpose.msra.mxu0 0
  %829 = vmatprep.subr.bf16.mxu0 0
  %830 = vmatpush1.bf16.xpose.msra.mxu0 0
  %831 = vmatprep.subr.bf16.mxu0 0
  %832 = vmatpush1.bf16.xpose.msra.mxu0 0
  %833 = vmatprep.subr.bf16.mxu0 0
  %834 = vmatpush1.bf16.xpose.msra.mxu0 0
  %835 = vmatprep.subr.bf16.mxu0 0
  %836 = vmatpush1.bf16.xpose.msra.mxu0 0
  %837 = vmatprep.subr.bf16.mxu0 0
  %838 = vmatpush1.bf16.xpose.msra.mxu0 0
  %839 = vmatprep.subr.bf16.mxu0 0
  %840 = vmatpush1.bf16.xpose.msra.mxu0 0
  %841 = vmatprep.subr.bf16.mxu0 0
  %842 = vmatpush1.bf16.xpose.msra.mxu0 0
  %843 = vmatprep.subr.bf16.mxu0 0
  %844 = vmatpush1.bf16.xpose.msra.mxu0 0
  %845 = vmatprep.subr.bf16.mxu0 0
  %846 = vmatpush1.bf16.xpose.msra.mxu0 0
  %847 = vmatprep.subr.bf16.mxu0 0
  %848 = vmatpush1.bf16.xpose.msra.mxu0 0
  %849 = vmatprep.subr.bf16.mxu0 0
  %850 = vmatpush1.bf16.xpose.msra.mxu0 0
  %851 = vmatprep.subr.bf16.mxu0 0
  %852 = vmatpush1.bf16.xpose.msra.mxu0 0
  %853 = vmatprep.subr.bf16.mxu0 0
  %854 = vmatpush1.bf16.xpose.msra.mxu0 0
  %855 = vmatprep.subr.bf16.mxu0 0
  %856 = vmatpush1.bf16.xpose.msra.mxu0 0
  %857 = vmatprep.mubr.bf16.mxu0 0
  %858 = vmatmul.mubr.bf16.gmra.mrb[0].mxu0 %v820
  %v859 = vpop.f32.mrb[0].mxu0
  %v860 = vadd.f32 0.0, %v859
  %v861 = vpop.f32.mrb[0].mxu0
  %v862 = vpop.f32.mrb[0].mxu0
  %v863 = vpop.f32.mrb[0].mxu0
  %864 = vdwg.mxu0
  %v865 = vmul.f32 %v810, 0.17677669
  %v866 = vmul.f32 %v860, 0.17677669
  %v867 = vsel %vm406, %v865, -inf
  %868 = vmax.xlane.f32.xlu0 %v867
  %v869 = vpop.xlane.xlu0 %868
  %v870 = vsel %vm406, %v866, -inf
  %871 = vmax.xlane.f32.xlu0 %v870
  %v872 = vpop.xlane.xlu0 %871
  %v873 = vsub.f32 %v865, %v869
  %v874 = vsub.f32 %v866, %v872
  %v875 = vmul.f32 %v873, 1.442695
  %v876 = vpow.pop %v875
  %v877 = vmul.f32 %v874, 1.442695
  %v878 = vpow.pop %v877
  %v879 = vsel %vm406, %v876, 0.0
  %880 = vadd.xlane.f32.xlu0 %v879
  %v881 = vpop.xlane.xlu0 %880
  %v882 = vsel %vm406, %v878, 0.0
  %883 = vadd.xlane.f32.xlu0 %v882
  %v884 = vpop.xlane.xlu0 %883
  %v885 = vrcp.pop %v881
  %v886 = vrcp.pop %v884
  %v887 = vmul.f32 %v876, %v885
  %v888 = vmul.f32 %v878, %v886
  %v889 = vpack.c.bf16 %v887, %v887
  %v890 = vpack.c.bf16 %v888, %v888
  %891 = vrot.lane.b32.xlu0 %v309, 64
  %v892 = vpop.permute.xlu0 %891
  %v894 = vsel %vm406, %v889, 0
  %v897 = vsel %vm434, %v892, 0
  %899 = vmatprep.subr.bf16.mxu0 0
  %900 = vmatpush1.bf16.msra.mxu0 %v897
  %901 = vmatprep.subr.bf16.mxu0 0
  %902 = vmatpush1.bf16.msra.mxu0 0
  %903 = vmatprep.subr.bf16.mxu0 0
  %904 = vmatpush1.bf16.msra.mxu0 0
  %905 = vmatprep.subr.bf16.mxu0 0
  %906 = vmatpush1.bf16.msra.mxu0 0
  %907 = vmatprep.subr.bf16.mxu0 0
  %908 = vmatpush1.bf16.msra.mxu0 0
  %909 = vmatprep.subr.bf16.mxu0 0
  %910 = vmatpush1.bf16.msra.mxu0 0
  %911 = vmatprep.subr.bf16.mxu0 0
  %912 = vmatpush1.bf16.msra.mxu0 0
  %913 = vmatprep.subr.bf16.mxu0 0
  %914 = vmatpush1.bf16.msra.mxu0 0
  %915 = vmatprep.subr.bf16.mxu0 0
  %916 = vmatpush1.bf16.msra.mxu0 0
  %917 = vmatprep.subr.bf16.mxu0 0
  %918 = vmatpush1.bf16.msra.mxu0 0
  %919 = vmatprep.subr.bf16.mxu0 0
  %920 = vmatpush1.bf16.msra.mxu0 0
  %921 = vmatprep.subr.bf16.mxu0 0
  %922 = vmatpush1.bf16.msra.mxu0 0
  %923 = vmatprep.subr.bf16.mxu0 0
  %924 = vmatpush1.bf16.msra.mxu0 0
  %925 = vmatprep.subr.bf16.mxu0 0
  %926 = vmatpush1.bf16.msra.mxu0 0
  %927 = vmatprep.subr.bf16.mxu0 0
  %928 = vmatpush1.bf16.msra.mxu0 0
  %929 = vmatprep.subr.bf16.mxu0 0
  %930 = vmatpush1.bf16.msra.mxu0 0
  %931 = vmatprep.mubr.bf16.mxu0 0
  %932 = vmatmul.mubr.bf16.gmra.mrb[0].mxu0 %v894
  %v933 = vpop.f32.mrb[0].mxu0
  %v934 = vadd.f32 0.0, %v933
  %v935 = vpop.f32.mrb[0].mxu0
  %v936 = vpop.f32.mrb[0].mxu0
  %v937 = vpop.f32.mrb[0].mxu0
  %938 = vdwg.mxu0
  %939 = vrot.lane.b32.xlu0 %v310, 64
  %v940 = vpop.permute.xlu0 %939
  %v942 = vsel %vm406, %v890, 0
  %v945 = vsel %vm434, %v940, 0
  %947 = vmatprep.subr.bf16.mxu0 0
  %948 = vmatpush1.bf16.msra.mxu0 %v945
  %949 = vmatprep.subr.bf16.mxu0 0
  %950 = vmatpush1.bf16.msra.mxu0 0
  %951 = vmatprep.subr.bf16.mxu0 0
  %952 = vmatpush1.bf16.msra.mxu0 0
  %953 = vmatprep.subr.bf16.mxu0 0
  %954 = vmatpush1.bf16.msra.mxu0 0
  %955 = vmatprep.subr.bf16.mxu0 0
  %956 = vmatpush1.bf16.msra.mxu0 0
  %957 = vmatprep.subr.bf16.mxu0 0
  %958 = vmatpush1.bf16.msra.mxu0 0
  %959 = vmatprep.subr.bf16.mxu0 0
  %960 = vmatpush1.bf16.msra.mxu0 0
  %961 = vmatprep.subr.bf16.mxu0 0
  %962 = vmatpush1.bf16.msra.mxu0 0
  %963 = vmatprep.subr.bf16.mxu0 0
  %964 = vmatpush1.bf16.msra.mxu0 0
  %965 = vmatprep.subr.bf16.mxu0 0
  %966 = vmatpush1.bf16.msra.mxu0 0
  %967 = vmatprep.subr.bf16.mxu0 0
  %968 = vmatpush1.bf16.msra.mxu0 0
  %969 = vmatprep.subr.bf16.mxu0 0
  %970 = vmatpush1.bf16.msra.mxu0 0
  %971 = vmatprep.subr.bf16.mxu0 0
  %972 = vmatpush1.bf16.msra.mxu0 0
  %973 = vmatprep.subr.bf16.mxu0 0
  %974 = vmatpush1.bf16.msra.mxu0 0
  %975 = vmatprep.subr.bf16.mxu0 0
  %976 = vmatpush1.bf16.msra.mxu0 0
  %977 = vmatprep.subr.bf16.mxu0 0
  %978 = vmatpush1.bf16.msra.mxu0 0
  %979 = vmatprep.mubr.bf16.mxu0 0
  %980 = vmatmul.mubr.bf16.gmra.mrb[0].mxu0 %v942
  %v981 = vpop.f32.mrb[0].mxu0
  %v982 = vadd.f32 0.0, %v981
  %v983 = vpop.f32.mrb[0].mxu0
  %v984 = vpop.f32.mrb[0].mxu0
  %v985 = vpop.f32.mrb[0].mxu0
  %986 = vdwg.mxu0
  %989 = vrot.lane.b32.xlu0 %v934, 64
  %v990 = vpop.permute.xlu0 %989
  %991 = vrot.lane.b32.xlu0 %v982, 64
  %v992 = vpop.permute.xlu0 %991
  %vm995 = vcmask 785920
  %996 = vst.msk [vmem:[#allocation2] sm:$0xff] %vm995, %v990
  %997 = vst.msk [vmem:[#allocation2 + $0x8] sm:$0xff] %vm995, %v992
  %998 = vrot.lane.b32.xlu0 %v305, 32
  %v999 = vpop.permute.xlu0 %998
  %1000 = vrot.lane.b32.xlu0 %v307, 32
  %v1001 = vpop.permute.xlu0 %1000
  %v1003 = vsel %vm311, %v999, 0
  %v1006 = vsel %vm311, %v1001, 0
  %1008 = vmatprep.subr.bf16.mxu0 0
  %1009 = vmatpush1.bf16.xpose.msra.mxu0 %v1006
  %1010 = vmatprep.subr.bf16.mxu0 0
  %1011 = vmatpush1.bf16.xpose.msra.mxu0 0
  %1012 = vmatprep.subr.bf16.mxu0 0
  %1013 = vmatpush1.bf16.xpose.msra.mxu0 0
  %1014 = vmatprep.subr.bf16.mxu0 0
  %1015 = vmatpush1.bf16.xpose.msra.mxu0 0
  %1016 = vmatprep.subr.bf16.mxu0 0
  %1017 = vmatpush1.bf16.xpose.msra.mxu0 0
  %1018 = vmatprep.subr.bf16.mxu0 0
  %1019 = vmatpush1.bf16.xpose.msra.mxu0 0
  %1020 = vmatprep.subr.bf16.mxu0 0
  %1021 = vmatpush1.bf16.xpose.msra.mxu0 0
  %1022 = vmatprep.subr.bf16.mxu0 0
  %1023 = vmatpush1.bf16.xpose.msra.mxu0 0
  %1024 = vmatprep.subr.bf16.mxu0 0
  %1025 = vmatpush1.bf16.xpose.msra.mxu0 0
  %1026 = vmatprep.subr.bf16.mxu0 0
  %1027 = vmatpush1.bf16.xpose.msra.mxu0 0
  %1028 = vmatprep.subr.bf16.mxu0 0
  %1029 = vmatpush1.bf16.xpose.msra.mxu0 0
  %1030 = vmatprep.subr.bf16.mxu0 0
  %1031 = vmatpush1.bf16.xpose.msra.mxu0 0
  %1032 = vmatprep.subr.bf16.mxu0 0
  %1033 = vmatpush1.bf16.xpose.msra.mxu0 0
  %1034 = vmatprep.subr.bf16.mxu0 0
  %1035 = vmatpush1.bf16.xpose.msra.mxu0 0
  %1036 = vmatprep.subr.bf16.mxu0 0
  %1037 = vmatpush1.bf16.xpose.msra.mxu0 0
  %1038 = vmatprep.subr.bf16.mxu0 0
  %1039 = vmatpush1.bf16.xpose.msra.mxu0 0
  %1040 = vmatprep.mubr.bf16.mxu0 0
  %1041 = vmatmul.mubr.bf16.gmra.mrb[0].mxu0 %v1003
  %v1042 = vpop.f32.mrb[0].mxu0
  %v1043 = vadd.f32 0.0, %v1042
  %v1044 = vpop.f32.mrb[0].mxu0
  %v1045 = vpop.f32.mrb[0].mxu0
  %v1046 = vpop.f32.mrb[0].mxu0
  %1047 = vdwg.mxu0
  %1048 = vrot.lane.b32.xlu0 %v306, 32
  %v1049 = vpop.permute.xlu0 %1048
  %1050 = vrot.lane.b32.xlu0 %v308, 32
  %v1051 = vpop.permute.xlu0 %1050
  %v1053 = vsel %vm311, %v1049, 0
  %v1056 = vsel %vm311, %v1051, 0
  %1058 = vmatprep.subr.bf16.mxu0 0
  %1059 = vmatpush1.bf16.xpose.msra.mxu0 %v1056
  %1060 = vmatprep.subr.bf16.mxu0 0
  %1061 = vmatpush1.bf16.xpose.msra.mxu0 0
  %1062 = vmatprep.subr.bf16.mxu0 0
  %1063 = vmatpush1.bf16.xpose.msra.mxu0 0
  %1064 = vmatprep.subr.bf16.mxu0 0
  %1065 = vmatpush1.bf16.xpose.msra.mxu0 0
  %1066 = vmatprep.subr.bf16.mxu0 0
  %1067 = vmatpush1.bf16.xpose.msra.mxu0 0
  %1068 = vmatprep.subr.bf16.mxu0 0
  %1069 = vmatpush1.bf16.xpose.msra.mxu0 0
  %1070 = vmatprep.subr.bf16.mxu0 0
  %1071 = vmatpush1.bf16.xpose.msra.mxu0 0
  %1072 = vmatprep.subr.bf16.mxu0 0
  %1073 = vmatpush1.bf16.xpose.msra.mxu0 0
  %1074 = vmatprep.subr.bf16.mxu0 0
  %1075 = vmatpush1.bf16.xpose.msra.mxu0 0
  %1076 = vmatprep.subr.bf16.mxu0 0
  %1077 = vmatpush1.bf16.xpose.msra.mxu0 0
  %1078 = vmatprep.subr.bf16.mxu0 0
  %1079 = vmatpush1.bf16.xpose.msra.mxu0 0
  %1080 = vmatprep.subr.bf16.mxu0 0
  %1081 = vmatpush1.bf16.xpose.msra.mxu0 0
  %1082 = vmatprep.subr.bf16.mxu0 0
  %1083 = vmatpush1.bf16.xpose.msra.mxu0 0
  %1084 = vmatprep.subr.bf16.mxu0 0
  %1085 = vmatpush1.bf16.xpose.msra.mxu0 0
  %1086 = vmatprep.subr.bf16.mxu0 0
  %1087 = vmatpush1.bf16.xpose.msra.mxu0 0
  %1088 = vmatprep.subr.bf16.mxu0 0
  %1089 = vmatpush1.bf16.xpose.msra.mxu0 0
  %1090 = vmatprep.mubr.bf16.mxu0 0
  %1091 = vmatmul.mubr.bf16.gmra.mrb[0].mxu0 %v1053
  %v1092 = vpop.f32.mrb[0].mxu0
  %v1093 = vadd.f32 0.0, %v1092
  %v1094 = vpop.f32.mrb[0].mxu0
  %v1095 = vpop.f32.mrb[0].mxu0
  %v1096 = vpop.f32.mrb[0].mxu0
  %1097 = vdwg.mxu0
  %v1098 = vmul.f32 %v1043, 0.17677669
  %v1099 = vmul.f32 %v1093, 0.17677669
  %v1100 = vsel %vm406, %v1098, -inf
  %1101 = vmax.xlane.f32.xlu0 %v1100
  %v1102 = vpop.xlane.xlu0 %1101
  %v1103 = vsel %vm406, %v1099, -inf
  %1104 = vmax.xlane.f32.xlu0 %v1103
  %v1105 = vpop.xlane.xlu0 %1104
  %v1106 = vsub.f32 %v1098, %v1102
  %v1107 = vsub.f32 %v1099, %v1105
  %v1108 = vmul.f32 %v1106, 1.442695
  %v1109 = vpow.pop %v1108
  %v1110 = vmul.f32 %v1107, 1.442695
  %v1111 = vpow.pop %v1110
  %v1112 = vsel %vm406, %v1109, 0.0
  %1113 = vadd.xlane.f32.xlu0 %v1112
  %v1114 = vpop.xlane.xlu0 %1113
  %v1115 = vsel %vm406, %v1111, 0.0
  %1116 = vadd.xlane.f32.xlu0 %v1115
  %v1117 = vpop.xlane.xlu0 %1116
  %v1118 = vrcp.pop %v1114
  %v1119 = vrcp.pop %v1117
  %v1120 = vmul.f32 %v1109, %v1118
  %v1121 = vmul.f32 %v1111, %v1119
  %v1122 = vpack.c.bf16 %v1120, %v1120
  %v1123 = vpack.c.bf16 %v1121, %v1121
  %1124 = vrot.lane.b32.xlu0 %v309, 32
  %v1125 = vpop.permute.xlu0 %1124
  %v1127 = vsel %vm406, %v1122, 0
  %v1130 = vsel %vm434, %v1125, 0
  %1132 = vmatprep.subr.bf16.mxu0 0
  %1133 = vmatpush1.bf16.msra.mxu0 %v1130
  %1134 = vmatprep.subr.bf16.mxu0 0
  %1135 = vmatpush1.bf16.msra.mxu0 0
  %1136 = vmatprep.subr.bf16.mxu0 0
  %1137 = vmatpush1.bf16.msra.mxu0 0
  %1138 = vmatprep.subr.bf16.mxu0 0
  %1139 = vmatpush1.bf16.msra.mxu0 0
  %1140 = vmatprep.subr.bf16.mxu0 0
  %1141 = vmatpush1.bf16.msra.mxu0 0
  %1142 = vmatprep.subr.bf16.mxu0 0
  %1143 = vmatpush1.bf16.msra.mxu0 0
  %1144 = vmatprep.subr.bf16.mxu0 0
  %1145 = vmatpush1.bf16.msra.mxu0 0
  %1146 = vmatprep.subr.bf16.mxu0 0
  %1147 = vmatpush1.bf16.msra.mxu0 0
  %1148 = vmatprep.subr.bf16.mxu0 0
  %1149 = vmatpush1.bf16.msra.mxu0 0
  %1150 = vmatprep.subr.bf16.mxu0 0
  %1151 = vmatpush1.bf16.msra.mxu0 0
  %1152 = vmatprep.subr.bf16.mxu0 0
  %1153 = vmatpush1.bf16.msra.mxu0 0
  %1154 = vmatprep.subr.bf16.mxu0 0
  %1155 = vmatpush1.bf16.msra.mxu0 0
  %1156 = vmatprep.subr.bf16.mxu0 0
  %1157 = vmatpush1.bf16.msra.mxu0 0
  %1158 = vmatprep.subr.bf16.mxu0 0
  %1159 = vmatpush1.bf16.msra.mxu0 0
  %1160 = vmatprep.subr.bf16.mxu0 0
  %1161 = vmatpush1.bf16.msra.mxu0 0
  %1162 = vmatprep.subr.bf16.mxu0 0
  %1163 = vmatpush1.bf16.msra.mxu0 0
  %1164 = vmatprep.mubr.bf16.mxu0 0
  %1165 = vmatmul.mubr.bf16.gmra.mrb[0].mxu0 %v1127
  %v1166 = vpop.f32.mrb[0].mxu0
  %v1167 = vadd.f32 0.0, %v1166
  %v1168 = vpop.f32.mrb[0].mxu0
  %v1169 = vpop.f32.mrb[0].mxu0
  %v1170 = vpop.f32.mrb[0].mxu0
  %1171 = vdwg.mxu0
  %1172 = vrot.lane.b32.xlu0 %v310, 32
  %v1173 = vpop.permute.xlu0 %1172
  %v1175 = vsel %vm406, %v1123, 0
  %v1178 = vsel %vm434, %v1173, 0
  %1180 = vmatprep.subr.bf16.mxu0 0
  %1181 = vmatpush1.bf16.msra.mxu0 %v1178
  %1182 = vmatprep.subr.bf16.mxu0 0
  %1183 = vmatpush1.bf16.msra.mxu0 0
  %1184 = vmatprep.subr.bf16.mxu0 0
  %1185 = vmatpush1.bf16.msra.mxu0 0
  %1186 = vmatprep.subr.bf16.mxu0 0
  %1187 = vmatpush1.bf16.msra.mxu0 0
  %1188 = vmatprep.subr.bf16.mxu0 0
  %1189 = vmatpush1.bf16.msra.mxu0 0
  %1190 = vmatprep.subr.bf16.mxu0 0
  %1191 = vmatpush1.bf16.msra.mxu0 0
  %1192 = vmatprep.subr.bf16.mxu0 0
  %1193 = vmatpush1.bf16.msra.mxu0 0
  %1194 = vmatprep.subr.bf16.mxu0 0
  %1195 = vmatpush1.bf16.msra.mxu0 0
  %1196 = vmatprep.subr.bf16.mxu0 0
  %1197 = vmatpush1.bf16.msra.mxu0 0
  %1198 = vmatprep.subr.bf16.mxu0 0
  %1199 = vmatpush1.bf16.msra.mxu0 0
  %1200 = vmatprep.subr.bf16.mxu0 0
  %1201 = vmatpush1.bf16.msra.mxu0 0
  %1202 = vmatprep.subr.bf16.mxu0 0
  %1203 = vmatpush1.bf16.msra.mxu0 0
  %1204 = vmatprep.subr.bf16.mxu0 0
  %1205 = vmatpush1.bf16.msra.mxu0 0
  %1206 = vmatprep.subr.bf16.mxu0 0
  %1207 = vmatpush1.bf16.msra.mxu0 0
  %1208 = vmatprep.subr.bf16.mxu0 0
  %1209 = vmatpush1.bf16.msra.mxu0 0
  %1210 = vmatprep.subr.bf16.mxu0 0
  %1211 = vmatpush1.bf16.msra.mxu0 0
  %1212 = vmatprep.mubr.bf16.mxu0 0
  %1213 = vmatmul.mubr.bf16.gmra.mrb[0].mxu0 %v1175
  %v1214 = vpop.f32.mrb[0].mxu0
  %v1215 = vadd.f32 0.0, %v1214
  %v1216 = vpop.f32.mrb[0].mxu0
  %v1217 = vpop.f32.mrb[0].mxu0
  %v1218 = vpop.f32.mrb[0].mxu0
  %1219 = vdwg.mxu0
  %1222 = vrot.lane.b32.xlu0 %v1167, 96
  %v1223 = vpop.permute.xlu0 %1222
  %1224 = vrot.lane.b32.xlu0 %v1215, 96
  %v1225 = vpop.permute.xlu0 %1224
  %vm1228 = vcmask 1048320
  %1229 = vst.msk [vmem:[#allocation2] sm:$0xff] %vm1228, %v1223
  %1230 = vst.msk [vmem:[#allocation2 + $0x8] sm:$0xff] %vm1228, %v1225
  %v1231 = vld [vmem:[#allocation2] sm:$0xff]
  %v1232 = vld [vmem:[#allocation2 + $0x8] sm:$0xff]
  %v1233 = vpack.c.bf16 %v1232, %v1231
  %v1234 = vld [vmem:[%s3] sm:$0xf]
  %v1235 = vld [vmem:[%s3 + $0x4] sm:$0xf]
  %v1236 = vld [vmem:[%s3 + $0x8] sm:$0xf]
  %v1237 = vld [vmem:[%s3 + $0xc] sm:$0xf]
  %v1238 = vld [vmem:[%s3 + $0x10] sm:$0xf]
  %v1239 = vld [vmem:[%s3 + $0x14] sm:$0xf]
  %v1240 = vld [vmem:[%s3 + $0x18] sm:$0xf]
  %v1241 = vld [vmem:[%s3 + $0x1c] sm:$0xf]
  %v1242 = vld [vmem:[%s3 + $0x20] sm:$0xf]
  %v1243 = vld [vmem:[%s3 + $0x24] sm:$0xf]
  %v1244 = vld [vmem:[%s3 + $0x28] sm:$0xf]
  %v1245 = vld [vmem:[%s3 + $0x2c] sm:$0xf]
  %v1246 = vld [vmem:[%s3 + $0x30] sm:$0xf]
  %v1247 = vld [vmem:[%s3 + $0x34] sm:$0xf]
  %v1248 = vld [vmem:[%s3 + $0x38] sm:$0xf]
  %v1249 = vld [vmem:[%s3 + $0x3c] sm:$0xf]
  %v1250 = vlaneseq
  %v1251 = vshrl.u32 %v1250, 7
  %v1252 = vsub.s32 0, %v1251
  %v1253 = vrot.slane %v42, %v1252
  %v1270 = vunpack.c.l.b16 %v1234
  %v1271 = vunpack.c.l.b16 %v1235
  %v1272 = vunpack.c.l.b16 %v1236
  %v1273 = vunpack.c.l.b16 %v1237
  %v1274 = vunpack.c.l.b16 %v1238
  %v1275 = vunpack.c.l.b16 %v1239
  %v1276 = vunpack.c.l.b16 %v1240
  %v1277 = vunpack.c.l.b16 %v1241
  %v1278 = vunpack.c.l.b16 %v1242
  %v1279 = vunpack.c.l.b16 %v1243
  %v1280 = vunpack.c.l.b16 %v1244
  %v1281 = vunpack.c.l.b16 %v1245
  %v1282 = vunpack.c.l.b16 %v1246
  %v1283 = vunpack.c.l.b16 %v1247
  %v1284 = vunpack.c.l.b16 %v1248
  %v1285 = vunpack.c.l.b16 %v1249
  %v1286 = vpack.c.b16 %v1271, %v1270
  %v1287 = vpack.c.b16 %v1273, %v1272
  %v1288 = vpack.c.b16 %v1275, %v1274
  %v1289 = vpack.c.b16 %v1277, %v1276
  %v1290 = vpack.c.b16 %v1279, %v1278
  %v1291 = vpack.c.b16 %v1281, %v1280
  %v1292 = vpack.c.b16 %v1283, %v1282
  %v1293 = vpack.c.b16 %v1285, %v1284
  %1302 = vmatprep.subr.bf16.mxu0 0
  %1303 = vmatpush1.bf16.msra.mxu0 %v1286
  %1304 = vmatprep.subr.bf16.mxu0 0
  %1305 = vmatpush1.bf16.msra.mxu0 %v1287
  %1306 = vmatprep.subr.bf16.mxu0 0
  %1307 = vmatpush1.bf16.msra.mxu0 %v1288
  %1308 = vmatprep.subr.bf16.mxu0 0
  %1309 = vmatpush1.bf16.msra.mxu0 %v1289
  %1310 = vmatprep.subr.bf16.mxu0 0
  %1311 = vmatpush1.bf16.msra.mxu0 %v1290
  %1312 = vmatprep.subr.bf16.mxu0 0
  %1313 = vmatpush1.bf16.msra.mxu0 %v1291
  %1314 = vmatprep.subr.bf16.mxu0 0
  %1315 = vmatpush1.bf16.msra.mxu0 %v1292
  %1316 = vmatprep.subr.bf16.mxu0 0
  %1317 = vmatpush1.bf16.msra.mxu0 %v1293
  %1318 = vmatprep.subr.bf16.mxu0 0
  %1319 = vmatpush1.bf16.msra.mxu0 0
  %1320 = vmatprep.subr.bf16.mxu0 0
  %1321 = vmatpush1.bf16.msra.mxu0 0
  %1322 = vmatprep.subr.bf16.mxu0 0
  %1323 = vmatpush1.bf16.msra.mxu0 0
  %1324 = vmatprep.subr.bf16.mxu0 0
  %1325 = vmatpush1.bf16.msra.mxu0 0
  %1326 = vmatprep.subr.bf16.mxu0 0
  %1327 = vmatpush1.bf16.msra.mxu0 0
  %1328 = vmatprep.subr.bf16.mxu0 0
  %1329 = vmatpush1.bf16.msra.mxu0 0
  %1330 = vmatprep.subr.bf16.mxu0 0
  %1331 = vmatpush1.bf16.msra.mxu0 0
  %1332 = vmatprep.subr.bf16.mxu0 0
  %1333 = vmatpush1.bf16.msra.mxu0 0
  %1334 = vmatprep.mubr.bf16.mxu0 0
  %1335 = vmatmul.mubr.bf16.gmra.mrb[0].mxu0 %v1233
  %v1336 = vpop.f32.mrb[0].mxu0
  %v1337 = vadd.f32 %v1253, %v1336
  %v1338 = vpop.f32.mrb[0].mxu0
  %v1339 = vpop.f32.mrb[0].mxu0
  %v1340 = vadd.f32 %v1253, %v1339
  %v1341 = vpop.f32.mrb[0].mxu0
  %1342 = vdwg.mxu0
  %v1343 = vadd.f32 %v40, %v1337
  %v1344 = vadd.f32 %v41, %v1340
  %1345 = vadd.xlane.f32.xlu0 %v1343
  %v1346 = vpop.xlane.xlu0 %1345
  %1347 = vadd.xlane.f32.xlu0 %v1344
  %v1348 = vpop.xlane.xlu0 %1347
  %v1349 = vrcp.pop 128.0
  %v1350 = vmul.f32 %v1346, %v1349
  %v1351 = vmul.f32 %v1348, %v1349
  %v1352 = vsub.f32 %v1343, %v1350
  %v1353 = vsub.f32 %v1344, %v1351
  %v1354 = vmul.f32 %v1352, %v1352
  %v1355 = vmul.f32 %v1353, %v1353
  %1356 = vadd.xlane.f32.xlu0 %v1354
  %v1357 = vpop.xlane.xlu0 %1356
  %1358 = vadd.xlane.f32.xlu0 %v1355
  %v1359 = vpop.xlane.xlu0 %1358
  %v1360 = vmul.f32 %v1357, %v1349
  %v1361 = vmul.f32 %v1359, %v1349
  %v1362 = vadd.f32 %v1360, 1e-12
  %v1363 = vadd.f32 %v1361, 1e-12
  %v1364 = vrsqrt.pop %v1362
  %v1365 = vrsqrt.pop %v1363
  %v1366 = vmul.f32 %v1352, %v1364
  %v1367 = vmul.f32 %v1353, %v1365
  %v1368 = vlaneseq
  %v1369 = vshrl.u32 %v1368, 7
  %v1370 = vsub.s32 1, %v1369
  %v1371 = vrot.slane %v42, %v1370
  %v1372 = vmul.f32 %v1366, %v1371
  %v1373 = vmul.f32 %v1367, %v1371
  %v1374 = vlaneseq
  %v1375 = vshrl.u32 %v1374, 7
  %v1376 = vsub.s32 2, %v1375
  %v1377 = vrot.slane %v42, %v1376
  %v1378 = vadd.f32 %v1372, %v1377
  %v1379 = vadd.f32 %v1373, %v1377
  %v1380 = vpack.c.bf16 %v1379, %v1378
  %v1381 = vld [vmem:[%s5] sm:$0xff]
  %v1382 = vld [vmem:[%s5 + $0x8] sm:$0xff]
  %v1383 = vld [vmem:[%s5 + $0x10] sm:$0xff]
  %v1384 = vld [vmem:[%s5 + $0x18] sm:$0xff]
  %v1385 = vld [vmem:[%s5 + $0x20] sm:$0xff]
  %v1386 = vld [vmem:[%s5 + $0x28] sm:$0xff]
  %v1387 = vld [vmem:[%s5 + $0x30] sm:$0xff]
  %v1388 = vld [vmem:[%s5 + $0x38] sm:$0xff]
  %v1389 = vld [vmem:[%s5 + $0x40] sm:$0xff]
  %v1390 = vld [vmem:[%s5 + $0x48] sm:$0xff]
  %v1391 = vld [vmem:[%s5 + $0x50] sm:$0xff]
  %v1392 = vld [vmem:[%s5 + $0x58] sm:$0xff]
  %v1393 = vld [vmem:[%s5 + $0x60] sm:$0xff]
  %v1394 = vld [vmem:[%s5 + $0x68] sm:$0xff]
  %v1395 = vld [vmem:[%s5 + $0x70] sm:$0xff]
  %v1396 = vld [vmem:[%s5 + $0x78] sm:$0xff]
  %v1397 = vld [vmem:[%s6] sm:$0x3]
  %v1399 = vlaneseq
  %v1400 = vshrl.u32 %v1399, 7
  %v1401 = vsub.s32 0, %v1400
  %v1402 = vrot.slane %v1397, %v1401
  %v1403 = vlaneseq
  %v1404 = vshrl.u32 %v1403, 7
  %v1405 = vsub.s32 1, %v1404
  %v1406 = vrot.slane %v1397, %v1405
  %v1425 = vunpack.c.l.b16 %v1381
  %v1426 = vunpack.c.h.b16 %v1381
  %v1427 = vunpack.c.l.b16 %v1382
  %v1428 = vunpack.c.h.b16 %v1382
  %v1429 = vunpack.c.l.b16 %v1383
  %v1430 = vunpack.c.h.b16 %v1383
  %v1431 = vunpack.c.l.b16 %v1384
  %v1432 = vunpack.c.h.b16 %v1384
  %v1433 = vunpack.c.l.b16 %v1385
  %v1434 = vunpack.c.h.b16 %v1385
  %v1435 = vunpack.c.l.b16 %v1386
  %v1436 = vunpack.c.h.b16 %v1386
  %v1437 = vunpack.c.l.b16 %v1387
  %v1438 = vunpack.c.h.b16 %v1387
  %v1439 = vunpack.c.l.b16 %v1388
  %v1440 = vunpack.c.h.b16 %v1388
  %v1441 = vunpack.c.l.b16 %v1389
  %v1442 = vunpack.c.h.b16 %v1389
  %v1443 = vunpack.c.l.b16 %v1390
  %v1444 = vunpack.c.h.b16 %v1390
  %v1445 = vunpack.c.l.b16 %v1391
  %v1446 = vunpack.c.h.b16 %v1391
  %v1447 = vunpack.c.l.b16 %v1392
  %v1448 = vunpack.c.h.b16 %v1392
  %v1449 = vunpack.c.l.b16 %v1393
  %v1450 = vunpack.c.h.b16 %v1393
  %v1451 = vunpack.c.l.b16 %v1394
  %v1452 = vunpack.c.h.b16 %v1394
  %v1453 = vunpack.c.l.b16 %v1395
  %v1454 = vunpack.c.h.b16 %v1395
  %v1455 = vunpack.c.l.b16 %v1396
  %v1456 = vunpack.c.h.b16 %v1396
  %v1457 = vpack.c.b16 %v1427, %v1425
  %v1458 = vpack.c.b16 %v1428, %v1426
  %v1459 = vpack.c.b16 %v1431, %v1429
  %v1460 = vpack.c.b16 %v1432, %v1430
  %v1461 = vpack.c.b16 %v1435, %v1433
  %v1462 = vpack.c.b16 %v1436, %v1434
  %v1463 = vpack.c.b16 %v1439, %v1437
  %v1464 = vpack.c.b16 %v1440, %v1438
  %v1465 = vpack.c.b16 %v1443, %v1441
  %v1466 = vpack.c.b16 %v1444, %v1442
  %v1467 = vpack.c.b16 %v1447, %v1445
  %v1468 = vpack.c.b16 %v1448, %v1446
  %v1469 = vpack.c.b16 %v1451, %v1449
  %v1470 = vpack.c.b16 %v1452, %v1450
  %v1471 = vpack.c.b16 %v1455, %v1453
  %v1472 = vpack.c.b16 %v1456, %v1454
  %1489 = vmatprep.subr.bf16.mxu0 %v1458
  %1490 = vmatpush1.bf16.msra.mxu0 %v1457
  %1491 = vmatprep.subr.bf16.mxu0 %v1460
  %1492 = vmatpush1.bf16.msra.mxu0 %v1459
  %1493 = vmatprep.subr.bf16.mxu0 %v1462
  %1494 = vmatpush1.bf16.msra.mxu0 %v1461
  %1495 = vmatprep.subr.bf16.mxu0 %v1464
  %1496 = vmatpush1.bf16.msra.mxu0 %v1463
  %1497 = vmatprep.subr.bf16.mxu0 %v1466
  %1498 = vmatpush1.bf16.msra.mxu0 %v1465
  %1499 = vmatprep.subr.bf16.mxu0 %v1468
  %1500 = vmatpush1.bf16.msra.mxu0 %v1467
  %1501 = vmatprep.subr.bf16.mxu0 %v1470
  %1502 = vmatpush1.bf16.msra.mxu0 %v1469
  %1503 = vmatprep.subr.bf16.mxu0 %v1472
  %1504 = vmatpush1.bf16.msra.mxu0 %v1471
  %1505 = vmatprep.subr.bf16.mxu0 0
  %1506 = vmatpush1.bf16.msra.mxu0 0
  %1507 = vmatprep.subr.bf16.mxu0 0
  %1508 = vmatpush1.bf16.msra.mxu0 0
  %1509 = vmatprep.subr.bf16.mxu0 0
  %1510 = vmatpush1.bf16.msra.mxu0 0
  %1511 = vmatprep.subr.bf16.mxu0 0
  %1512 = vmatpush1.bf16.msra.mxu0 0
  %1513 = vmatprep.subr.bf16.mxu0 0
  %1514 = vmatpush1.bf16.msra.mxu0 0
  %1515 = vmatprep.subr.bf16.mxu0 0
  %1516 = vmatpush1.bf16.msra.mxu0 0
  %1517 = vmatprep.subr.bf16.mxu0 0
  %1518 = vmatpush1.bf16.msra.mxu0 0
  %1519 = vmatprep.subr.bf16.mxu0 0
  %1520 = vmatpush1.bf16.msra.mxu0 0
  %1521 = vmatprep.mubr.bf16.mxu0 0
  %1522 = vmatmul.mubr.bf16.gmra.mrb[0].mxu0 %v1380
  %v1523 = vpop.f32.mrb[0].mxu0
  %v1524 = vadd.f32 %v1402, %v1523
  %v1525 = vpop.f32.mrb[0].mxu0
  %v1526 = vadd.f32 %v1406, %v1525
  %v1527 = vpop.f32.mrb[0].mxu0
  %v1528 = vadd.f32 %v1402, %v1527
  %v1529 = vpop.f32.mrb[0].mxu0
  %v1530 = vadd.f32 %v1406, %v1529
  %1531 = vdwg.mxu0
  %v1532 = vmul.f32 %v1524, 0.5
  %v1533 = vmul.f32 %v1526, 0.5
  %v1534 = vmul.f32 %v1528, 0.5
  %v1535 = vmul.f32 %v1530, 0.5
  %v1536 = vmul.f32 %v1524, 0.70710677
  %v1537 = vmul.f32 %v1526, 0.70710677
  %v1538 = vmul.f32 %v1528, 0.70710677
  %v1539 = vmul.f32 %v1530, 0.70710677
  %vm1540 = vcmp.lt.f32.partialorder %v1536, 0.0
  %vm1541 = vcmp.lt.f32.partialorder %v1537, 0.0
  %vm1542 = vcmp.lt.f32.partialorder %v1538, 0.0
  %vm1543 = vcmp.lt.f32.partialorder %v1539, 0.0
  %v1544 = vsub.f32 0.0, %v1536
  %v1545 = vsub.f32 0.0, %v1537
  %v1546 = vsub.f32 0.0, %v1538
  %v1547 = vsub.f32 0.0, %v1539
  %v1548 = vsel %vm1540, %v1544, %v1536
  %v1549 = vsel %vm1541, %v1545, %v1537
  %v1550 = vsel %vm1542, %v1546, %v1538
  %v1551 = vsel %vm1543, %v1547, %v1539
  %v1552 = vmul.f32 %v1548, 0.3275911
  %v1553 = vmul.f32 %v1549, 0.3275911
  %v1554 = vmul.f32 %v1550, 0.3275911
  %v1555 = vmul.f32 %v1551, 0.3275911
  %v1556 = vadd.f32 %v1552, 1.0
  %v1557 = vadd.f32 %v1553, 1.0
  %v1558 = vadd.f32 %v1554, 1.0
  %v1559 = vadd.f32 %v1555, 1.0
  %v1560 = vrcp.pop %v1556
  %v1561 = vmul.f32 1.0, %v1560
  %v1562 = vrcp.pop %v1557
  %v1563 = vmul.f32 1.0, %v1562
  %v1564 = vrcp.pop %v1558
  %v1565 = vmul.f32 1.0, %v1564
  %v1566 = vrcp.pop %v1559
  %v1567 = vmul.f32 1.0, %v1566
  %v1568 = vmul.f32 %v1561, 1.0614054
  %v1569 = vmul.f32 %v1563, 1.0614054
  %v1570 = vmul.f32 %v1565, 1.0614054
  %v1571 = vmul.f32 %v1567, 1.0614054
  %v1572 = vsub.f32 %v1568, 1.4531521
  %v1573 = vsub.f32 %v1569, 1.4531521
  %v1574 = vsub.f32 %v1570, 1.4531521
  %v1575 = vsub.f32 %v1571, 1.4531521
  %v1576 = vmul.f32 %v1572, %v1561
  %v1577 = vmul.f32 %v1573, %v1563
  %v1578 = vmul.f32 %v1574, %v1565
  %v1579 = vmul.f32 %v1575, %v1567
  %v1580 = vadd.f32 %v1576, 1.4214138
  %v1581 = vadd.f32 %v1577, 1.4214138
  %v1582 = vadd.f32 %v1578, 1.4214138
  %v1583 = vadd.f32 %v1579, 1.4214138
  %v1584 = vmul.f32 %v1580, %v1561
  %v1585 = vmul.f32 %v1581, %v1563
  %v1586 = vmul.f32 %v1582, %v1565
  %v1587 = vmul.f32 %v1583, %v1567
  %v1588 = vsub.f32 %v1584, 0.28449672
  %v1589 = vsub.f32 %v1585, 0.28449672
  %v1590 = vsub.f32 %v1586, 0.28449672
  %v1591 = vsub.f32 %v1587, 0.28449672
  %v1592 = vmul.f32 %v1588, %v1561
  %v1593 = vmul.f32 %v1589, %v1563
  %v1594 = vmul.f32 %v1590, %v1565
  %v1595 = vmul.f32 %v1591, %v1567
  %v1596 = vadd.f32 %v1592, 0.2548296
  %v1597 = vadd.f32 %v1593, 0.2548296
  %v1598 = vadd.f32 %v1594, 0.2548296
  %v1599 = vadd.f32 %v1595, 0.2548296
  %v1600 = vmul.f32 %v1596, %v1561
  %v1601 = vmul.f32 %v1597, %v1563
  %v1602 = vmul.f32 %v1598, %v1565
  %v1603 = vmul.f32 %v1599, %v1567
  %v1604 = vsub.f32 0.0, %v1548
  %v1605 = vsub.f32 0.0, %v1549
  %v1606 = vsub.f32 0.0, %v1550
  %v1607 = vsub.f32 0.0, %v1551
  %v1608 = vmul.f32 %v1604, %v1548
  %v1609 = vmul.f32 %v1605, %v1549
  %v1610 = vmul.f32 %v1606, %v1550
  %v1611 = vmul.f32 %v1607, %v1551
  %v1612 = vmul.f32 %v1608, 1.442695
  %v1613 = vpow.pop %v1612
  %v1614 = vmul.f32 %v1609, 1.442695
  %v1615 = vpow.pop %v1614
  %v1616 = vmul.f32 %v1610, 1.442695
  %v1617 = vpow.pop %v1616
  %v1618 = vmul.f32 %v1611, 1.442695
  %v1619 = vpow.pop %v1618
  %v1620 = vmul.f32 %v1600, %v1613
  %v1621 = vmul.f32 %v1601, %v1615
  %v1622 = vmul.f32 %v1602, %v1617
  %v1623 = vmul.f32 %v1603, %v1619
  %v1624 = vsub.f32 1.0, %v1620
  %v1625 = vsub.f32 1.0, %v1621
  %v1626 = vsub.f32 1.0, %v1622
  %v1627 = vsub.f32 1.0, %v1623
  %v1628 = vsub.f32 0.0, %v1624
  %v1629 = vsub.f32 0.0, %v1625
  %v1630 = vsub.f32 0.0, %v1626
  %v1631 = vsub.f32 0.0, %v1627
  %v1632 = vsel %vm1540, %v1628, %v1624
  %v1633 = vsel %vm1541, %v1629, %v1625
  %v1634 = vsel %vm1542, %v1630, %v1626
  %v1635 = vsel %vm1543, %v1631, %v1627
  %v1636 = vadd.f32 %v1632, 1.0
  %v1637 = vadd.f32 %v1633, 1.0
  %v1638 = vadd.f32 %v1634, 1.0
  %v1639 = vadd.f32 %v1635, 1.0
  %v1640 = vmul.f32 %v1532, %v1636
  %v1641 = vmul.f32 %v1533, %v1637
  %v1642 = vmul.f32 %v1534, %v1638
  %v1643 = vmul.f32 %v1535, %v1639
  %v1644 = vpack.c.bf16 %v1642, %v1640
  %v1645 = vpack.c.bf16 %v1643, %v1641
  %v1646 = vld [vmem:[%s7] sm:$0xf]
  %v1647 = vld [vmem:[%s7 + $0x4] sm:$0xf]
  %v1648 = vld [vmem:[%s7 + $0x8] sm:$0xf]
  %v1649 = vld [vmem:[%s7 + $0xc] sm:$0xf]
  %v1650 = vld [vmem:[%s7 + $0x10] sm:$0xf]
  %v1651 = vld [vmem:[%s7 + $0x14] sm:$0xf]
  %v1652 = vld [vmem:[%s7 + $0x18] sm:$0xf]
  %v1653 = vld [vmem:[%s7 + $0x1c] sm:$0xf]
  %v1654 = vld [vmem:[%s7 + $0x20] sm:$0xf]
  %v1655 = vld [vmem:[%s7 + $0x24] sm:$0xf]
  %v1656 = vld [vmem:[%s7 + $0x28] sm:$0xf]
  %v1657 = vld [vmem:[%s7 + $0x2c] sm:$0xf]
  %v1658 = vld [vmem:[%s7 + $0x30] sm:$0xf]
  %v1659 = vld [vmem:[%s7 + $0x34] sm:$0xf]
  %v1660 = vld [vmem:[%s7 + $0x38] sm:$0xf]
  %v1661 = vld [vmem:[%s7 + $0x3c] sm:$0xf]
  %v1662 = vld [vmem:[%s7 + $0x40] sm:$0xf]
  %v1663 = vld [vmem:[%s7 + $0x44] sm:$0xf]
  %v1664 = vld [vmem:[%s7 + $0x48] sm:$0xf]
  %v1665 = vld [vmem:[%s7 + $0x4c] sm:$0xf]
  %v1666 = vld [vmem:[%s7 + $0x50] sm:$0xf]
  %v1667 = vld [vmem:[%s7 + $0x54] sm:$0xf]
  %v1668 = vld [vmem:[%s7 + $0x58] sm:$0xf]
  %v1669 = vld [vmem:[%s7 + $0x5c] sm:$0xf]
  %v1670 = vld [vmem:[%s7 + $0x60] sm:$0xf]
  %v1671 = vld [vmem:[%s7 + $0x64] sm:$0xf]
  %v1672 = vld [vmem:[%s7 + $0x68] sm:$0xf]
  %v1673 = vld [vmem:[%s7 + $0x6c] sm:$0xf]
  %v1674 = vld [vmem:[%s7 + $0x70] sm:$0xf]
  %v1675 = vld [vmem:[%s7 + $0x74] sm:$0xf]
  %v1676 = vld [vmem:[%s7 + $0x78] sm:$0xf]
  %v1677 = vld [vmem:[%s7 + $0x7c] sm:$0xf]
  %v1678 = vlaneseq
  %v1679 = vshrl.u32 %v1678, 7
  %v1680 = vsub.s32 3, %v1679
  %v1681 = vrot.slane %v42, %v1680
  %v1714 = vunpack.c.l.b16 %v1646
  %v1715 = vunpack.c.l.b16 %v1647
  %v1716 = vunpack.c.l.b16 %v1648
  %v1717 = vunpack.c.l.b16 %v1649
  %v1718 = vunpack.c.l.b16 %v1650
  %v1719 = vunpack.c.l.b16 %v1651
  %v1720 = vunpack.c.l.b16 %v1652
  %v1721 = vunpack.c.l.b16 %v1653
  %v1722 = vunpack.c.l.b16 %v1654
  %v1723 = vunpack.c.l.b16 %v1655
  %v1724 = vunpack.c.l.b16 %v1656
  %v1725 = vunpack.c.l.b16 %v1657
  %v1726 = vunpack.c.l.b16 %v1658
  %v1727 = vunpack.c.l.b16 %v1659
  %v1728 = vunpack.c.l.b16 %v1660
  %v1729 = vunpack.c.l.b16 %v1661
  %v1730 = vunpack.c.l.b16 %v1662
  %v1731 = vunpack.c.l.b16 %v1663
  %v1732 = vunpack.c.l.b16 %v1664
  %v1733 = vunpack.c.l.b16 %v1665
  %v1734 = vunpack.c.l.b16 %v1666
  %v1735 = vunpack.c.l.b16 %v1667
  %v1736 = vunpack.c.l.b16 %v1668
  %v1737 = vunpack.c.l.b16 %v1669
  %v1738 = vunpack.c.l.b16 %v1670
  %v1739 = vunpack.c.l.b16 %v1671
  %v1740 = vunpack.c.l.b16 %v1672
  %v1741 = vunpack.c.l.b16 %v1673
  %v1742 = vunpack.c.l.b16 %v1674
  %v1743 = vunpack.c.l.b16 %v1675
  %v1744 = vunpack.c.l.b16 %v1676
  %v1745 = vunpack.c.l.b16 %v1677
  %v1746 = vpack.c.b16 %v1715, %v1714
  %v1747 = vpack.c.b16 %v1717, %v1716
  %v1748 = vpack.c.b16 %v1719, %v1718
  %v1749 = vpack.c.b16 %v1721, %v1720
  %v1750 = vpack.c.b16 %v1723, %v1722
  %v1751 = vpack.c.b16 %v1725, %v1724
  %v1752 = vpack.c.b16 %v1727, %v1726
  %v1753 = vpack.c.b16 %v1729, %v1728
  %v1754 = vpack.c.b16 %v1731, %v1730
  %v1755 = vpack.c.b16 %v1733, %v1732
  %v1756 = vpack.c.b16 %v1735, %v1734
  %v1757 = vpack.c.b16 %v1737, %v1736
  %v1758 = vpack.c.b16 %v1739, %v1738
  %v1759 = vpack.c.b16 %v1741, %v1740
  %v1760 = vpack.c.b16 %v1743, %v1742
  %v1761 = vpack.c.b16 %v1745, %v1744
  %1778 = vmatprep.subr.bf16.mxu0 0
  %1779 = vmatpush1.bf16.msra.mxu0 %v1746
  %1780 = vmatprep.subr.bf16.mxu0 0
  %1781 = vmatpush1.bf16.msra.mxu0 %v1747
  %1782 = vmatprep.subr.bf16.mxu0 0
  %1783 = vmatpush1.bf16.msra.mxu0 %v1748
  %1784 = vmatprep.subr.bf16.mxu0 0
  %1785 = vmatpush1.bf16.msra.mxu0 %v1749
  %1786 = vmatprep.subr.bf16.mxu0 0
  %1787 = vmatpush1.bf16.msra.mxu0 %v1750
  %1788 = vmatprep.subr.bf16.mxu0 0
  %1789 = vmatpush1.bf16.msra.mxu0 %v1751
  %1790 = vmatprep.subr.bf16.mxu0 0
  %1791 = vmatpush1.bf16.msra.mxu0 %v1752
  %1792 = vmatprep.subr.bf16.mxu0 0
  %1793 = vmatpush1.bf16.msra.mxu0 %v1753
  %1794 = vmatprep.subr.bf16.mxu0 0
  %1795 = vmatpush1.bf16.msra.mxu0 %v1754
  %1796 = vmatprep.subr.bf16.mxu0 0
  %1797 = vmatpush1.bf16.msra.mxu0 %v1755
  %1798 = vmatprep.subr.bf16.mxu0 0
  %1799 = vmatpush1.bf16.msra.mxu0 %v1756
  %1800 = vmatprep.subr.bf16.mxu0 0
  %1801 = vmatpush1.bf16.msra.mxu0 %v1757
  %1802 = vmatprep.subr.bf16.mxu0 0
  %1803 = vmatpush1.bf16.msra.mxu0 %v1758
  %1804 = vmatprep.subr.bf16.mxu0 0
  %1805 = vmatpush1.bf16.msra.mxu0 %v1759
  %1806 = vmatprep.subr.bf16.mxu0 0
  %1807 = vmatpush1.bf16.msra.mxu0 %v1760
  %1808 = vmatprep.subr.bf16.mxu0 0
  %1809 = vmatpush1.bf16.msra.mxu0 %v1761
  %1810 = vmatprep.mubr.bf16.mxu0 %v1645
  %1811 = vmatmul.mubr.bf16.gmra.mrb[0].mxu0 %v1644
  %v1812 = vpop.f32.mrb[0].mxu0
  %v1813 = vadd.f32 %v1681, %v1812
  %v1814 = vpop.f32.mrb[0].mxu0
  %v1815 = vpop.f32.mrb[0].mxu0
  %v1816 = vadd.f32 %v1681, %v1815
  %v1817 = vpop.f32.mrb[0].mxu0
  %1818 = vdwg.mxu0
  %v1819 = vadd.f32 %v1378, %v1813
  %v1820 = vadd.f32 %v1379, %v1816
  %1821 = vadd.xlane.f32.xlu0 %v1819
  %v1822 = vpop.xlane.xlu0 %1821
  %1823 = vadd.xlane.f32.xlu0 %v1820
  %v1824 = vpop.xlane.xlu0 %1823
  %v1825 = vmul.f32 %v1822, %v1349
  %v1826 = vmul.f32 %v1824, %v1349
  %v1827 = vsub.f32 %v1819, %v1825
  %v1828 = vsub.f32 %v1820, %v1826
  %v1829 = vmul.f32 %v1827, %v1827
  %v1830 = vmul.f32 %v1828, %v1828
  %1831 = vadd.xlane.f32.xlu0 %v1829
  %v1832 = vpop.xlane.xlu0 %1831
  %1833 = vadd.xlane.f32.xlu0 %v1830
  %v1834 = vpop.xlane.xlu0 %1833
  %v1835 = vmul.f32 %v1832, %v1349
  %v1836 = vmul.f32 %v1834, %v1349
  %v1837 = vadd.f32 %v1835, 1e-12
  %v1838 = vadd.f32 %v1836, 1e-12
  %v1839 = vrsqrt.pop %v1837
  %v1840 = vrsqrt.pop %v1838
  %v1841 = vmul.f32 %v1827, %v1839
  %v1842 = vmul.f32 %v1828, %v1840
  %v1843 = vlaneseq
  %v1844 = vshrl.u32 %v1843, 7
  %v1845 = vsub.s32 4, %v1844
  %v1846 = vrot.slane %v42, %v1845
  %v1847 = vmul.f32 %v1841, %v1846
  %v1848 = vmul.f32 %v1842, %v1846
  %v1849 = vlaneseq
  %v1850 = vshrl.u32 %v1849, 7
  %v1851 = vsub.s32 5, %v1850
  %v1852 = vrot.slane %v42, %v1851
  %v1853 = vadd.f32 %v1847, %v1852
  %v1854 = vadd.f32 %v1848, %v1852
  %1855 = vst [vmem:[%s10] sm:$0xff] %v1853
  %1856 = vst [vmem:[%s10 + $0x8] sm:$0xff] %v1854
  %v1857 = vld [vmem:[%s8] sm:$0xff]
  %v1858 = vld [vmem:[%s8 + $0x8] sm:$0xff]
  %v1859 = vld [vmem:[%s8 + $0x10] sm:$0xff]
  %v1860 = vld [vmem:[%s8 + $0x18] sm:$0xff]
  %v1861 = vld [vmem:[%s8 + $0x20] sm:$0xff]
  %v1862 = vld [vmem:[%s8 + $0x28] sm:$0xff]
  %v1863 = vld [vmem:[%s8 + $0x30] sm:$0xff]
  %v1864 = vld [vmem:[%s8 + $0x38] sm:$0xff]
  %v1865 = vld [vmem:[%s8 + $0x40] sm:$0xff]
  %v1866 = vld [vmem:[%s8 + $0x48] sm:$0xff]
  %v1867 = vld [vmem:[%s8 + $0x50] sm:$0xff]
  %v1868 = vld [vmem:[%s8 + $0x58] sm:$0xff]
  %v1869 = vld [vmem:[%s8 + $0x60] sm:$0xff]
  %v1870 = vld [vmem:[%s8 + $0x68] sm:$0xff]
  %v1871 = vld [vmem:[%s8 + $0x70] sm:$0xff]
  %v1872 = vld [vmem:[%s8 + $0x78] sm:$0xff]
  %v1873 = vld [vmem:[#allocation3] sm:$0x1]
  %v1875 = vlaneseq
  %v1876 = vshrl.u32 %v1875, 7
  %v1877 = vsub.s32 0, %v1876
  %v1878 = vrot.slane %v1873, %v1877
  %1880 = vmatprep.subr.mxu0 0.0
  %1881 = vmatpush1.msra.mxu0 %v1857
  %1882 = vmatprep.subr.mxu0 0.0
  %1883 = vmatpush1.msra.mxu0 %v1858
  %1884 = vmatprep.subr.mxu0 0.0
  %1885 = vmatpush1.msra.mxu0 %v1859
  %1886 = vmatprep.subr.mxu0 0.0
  %1887 = vmatpush1.msra.mxu0 %v1860
  %1888 = vmatprep.subr.mxu0 0.0
  %1889 = vmatpush1.msra.mxu0 %v1861
  %1890 = vmatprep.subr.mxu0 0.0
  %1891 = vmatpush1.msra.mxu0 %v1862
  %1892 = vmatprep.subr.mxu0 0.0
  %1893 = vmatpush1.msra.mxu0 %v1863
  %1894 = vmatprep.subr.mxu0 0.0
  %1895 = vmatpush1.msra.mxu0 %v1864
  %1896 = vmatprep.subr.mxu0 0.0
  %1897 = vmatpush1.msra.mxu0 %v1865
  %1898 = vmatprep.subr.mxu0 0.0
  %1899 = vmatpush1.msra.mxu0 %v1866
  %1900 = vmatprep.subr.mxu0 0.0
  %1901 = vmatpush1.msra.mxu0 %v1867
  %1902 = vmatprep.subr.mxu0 0.0
  %1903 = vmatpush1.msra.mxu0 %v1868
  %1904 = vmatprep.subr.mxu0 0.0
  %1905 = vmatpush1.msra.mxu0 %v1869
  %1906 = vmatprep.subr.mxu0 0.0
  %1907 = vmatpush1.msra.mxu0 %v1870
  %1908 = vmatprep.subr.mxu0 0.0
  %1909 = vmatpush1.msra.mxu0 %v1871
  %1910 = vmatprep.subr.mxu0 0.0
  %1911 = vmatpush1.msra.mxu0 %v1872
  %1912 = vmatprep.subr.mxu0 0.0
  %1913 = vmatpush1.msra.mxu0 0.0
  %1914 = vmatprep.subr.mxu0 0.0
  %1915 = vmatpush1.msra.mxu0 0.0
  %1916 = vmatprep.subr.mxu0 0.0
  %1917 = vmatpush1.msra.mxu0 0.0
  %1918 = vmatprep.subr.mxu0 0.0
  %1919 = vmatpush1.msra.mxu0 0.0
  %1920 = vmatprep.subr.mxu0 0.0
  %1921 = vmatpush1.msra.mxu0 0.0
  %1922 = vmatprep.subr.mxu0 0.0
  %1923 = vmatpush1.msra.mxu0 0.0
  %1924 = vmatprep.subr.mxu0 0.0
  %1925 = vmatpush1.msra.mxu0 0.0
  %1926 = vmatprep.subr.mxu0 0.0
  %1927 = vmatpush1.msra.mxu0 0.0
  %1928 = vmatprep.subr.mxu0 0.0
  %1929 = vmatpush1.msra.mxu0 0.0
  %1930 = vmatprep.subr.mxu0 0.0
  %1931 = vmatpush1.msra.mxu0 0.0
  %1932 = vmatprep.subr.mxu0 0.0
  %1933 = vmatpush1.msra.mxu0 0.0
  %1934 = vmatprep.subr.mxu0 0.0
  %1935 = vmatpush1.msra.mxu0 0.0
  %1936 = vmatprep.subr.mxu0 0.0
  %1937 = vmatpush1.msra.mxu0 0.0
  %1938 = vmatprep.subr.mxu0 0.0
  %1939 = vmatpush1.msra.mxu0 0.0
  %1940 = vmatprep.subr.mxu0 0.0
  %1941 = vmatpush1.msra.mxu0 0.0
  %1942 = vmatprep.subr.mxu0 0.0
  %1943 = vmatpush1.msra.mxu0 0.0
  %1944 = vmatprep.mubr.f32.mxu0 0.0
  %1945 = vmatmul.mubr.f32.gmra.mrb[0].mxu0 %v1853
  %v1946 = vpop.f32.mrb[0].mxu0
  %v1947 = vadd.f32 %v1878, %v1946
  %v1948 = vpop.f32.mrb[0].mxu0
  %1949 = vmatprep.mubr.f32.mxu0 0.0
  %1950 = vmatmul.mubr.f32.gmra.mrb[0].mxu0 %v1854
  %v1951 = vpop.f32.mrb[0].mxu0
  %v1952 = vadd.f32 %v1878, %v1951
  %v1953 = vpop.f32.mrb[0].mxu0
  %1954 = vdwg.mxu0
  %vm1955 = vcmask 7168
  %1956 = vst.msk [vmem:[%s11] sm:$0xff] %vm1955, %v1947
  %1957 = vst.msk [vmem:[%s11 + $0x8] sm:$0xff] %vm1955, %v1952
  // Predicated region
  $region42: #{distilbert_for_reranking_forward.3} parent=0 // pred_check
    _
  $region43: #{distilbert_for_reranking_forward.3} parent=0 // pred_check_branch
    %1959 = sbr.rel (0) target = $region45
  $region44: #{distilbert_for_reranking_forward.3} parent=0 // pred_region
    _
  $region45: #{distilbert_for_reranking_forward.3} parent=0 // pred_fallthru
    _
  // Predicated region
  $region46: #{distilbert_for_reranking_forward.3} parent=0 // pred_check
    _
  $region47: #{distilbert_for_reranking_forward.3} parent=0 // pred_check_branch
    %1961 = sbr.rel (0) target = $region49
  $region48: #{distilbert_for_reranking_forward.3} parent=0 // pred_region
    _
  $region49: #{distilbert_for_reranking_forward.3} parent=0 // pred_fallthru
    _
  // Predicated region
  $region50: #{distilbert_for_reranking_forward.3} parent=0 // pred_check
    _
  $region51: #{distilbert_for_reranking_forward.3} parent=0 // pred_check_branch
    %1963 = sbr.rel (0) target = $region53
  $region52: #{distilbert_for_reranking_forward.3} parent=0 // pred_region
    _
  $region53: #{distilbert_for_reranking_forward.3} parent=0 // pred_fallthru
    _
  // Predicated region
  $region54: #{distilbert_for_reranking_forward.3} parent=0 // pred_check
    _
  $region55: #{distilbert_for_reranking_forward.3} parent=0 // pred_check_branch
    %1965 = sbr.rel (0) target = $region57
  $region56: #{distilbert_for_reranking_forward.3} parent=0 // pred_region
    _
  $region57: #{distilbert_for_reranking_forward.3} parent=0 // pred_fallthru
    _

</llo_original>
